<compile_context>
chip_gen: v7x
topology: tpu7x:2x2x1
jax: 0.10.0
libtpu: 0.0.40
codegen_flags: <defaults>
</compile_context>

<pallas_src>
import functools

import jax
import jax.numpy as jnp
from jax.experimental import pallas as pl
from jax.experimental.pallas import tpu as pltpu


def _cdiv(a, b):
    return -(-a // b)


def _round_up(a, b):
    return _cdiv(a, b) * b


def _block_diag(w, p):
    """[d_in, d_out] -> [p*d_in, p*d_out] block-diagonal with p copies of w."""
    if p == 1:
        return w
    d_in, d_out = w.shape
    out = jnp.zeros((p * d_in, p * d_out), dtype=w.dtype)
    for j in range(p):
        out = out.at[j * d_in:(j + 1) * d_in, j * d_out:(j + 1) * d_out].set(w)
    return out


# ----------------------------------------------------------------------------
# Kernel: full (row-packed) MLP — matmuls + bias + activations — on one tile.
# ----------------------------------------------------------------------------
def _mlp_kernel(*refs, num_layers, activations):
    """refs = (x_ref, w0, b0, w1, b1, ..., out_ref)."""
    x_ref = refs[0]
    out_ref = refs[-1]
    param_refs = refs[1:-1]

    h = x_ref[...]
    if h.dtype != jnp.float32:
        h = h.astype(jnp.float32)

    for i in range(num_layers):
        w = param_refs[2 * i][...]
        b = param_refs[2 * i + 1][...]
        # MXU matmul with f32 accumulation.  Explicit precision (review item):
        # keeps the kernel numerically tight vs. the f32 reference; MXU cost
        # is negligible for this network, so the extra passes are free.
        h = jnp.dot(h, w, preferred_element_type=jnp.float32,
                    precision=jax.lax.Precision.HIGHEST) + b
        act = activations[i]
        if act == "tanh":
            h = jnp.tanh(h)            # EUP
        elif act == "relu":
            h = jnp.maximum(h, 0.0)    # VPU
        elif act == "identity":
            pass
        else:
            raise ValueError(f"unsupported activation: {act}")

    out_ref[...] = h.astype(out_ref.dtype)


# ----------------------------------------------------------------------------
# Wrapper
# ----------------------------------------------------------------------------
def critic_forward(x, params, activations, *, block_rows=1024, pack=None):
    """Critic MLP forward pass as a batch-tiled, row-packed Pallas kernel.

    Args:
      x:           [B, D_in] float32.
      params:      list of (W, b) with W: [D_in_i, D_out_i], b: [1, D_out_i]
                   (PyTorch Linear weights pre-transposed so y = x @ W + b).
      activations: one name per layer ('tanh' | 'relu' | 'identity').
      block_rows:  max *packed* rows per batch tile (rounded to multiple of 8).
      pack:        rows packed into the lane dim (default auto ~128/D_in).
    Returns:
      [B, D_out_last] float32 (D_out_last == 1 for the Critic).
    """
    num_layers = len(params)
    assert len(activations) == num_layers
    B, d_in = x.shape
    assert params[0][0].shape[0] == d_in
    out_dim = params[-1][0].shape[1]

    # ---- Row packing factor: make K = P*D_in ~ one MXU edge (128 lanes). ----
    if pack is None:
        pack = max(1, min(8, 128 // max(d_in, 1)))
    P = int(pack)

    # Block-diagonal weights / tiled biases, built once outside the kernel.
    flat_params = []
    for w, b in params:
        flat_params.append(_block_diag(w, P))
        flat_params.append(jnp.tile(b, (1, P)) if P > 1 else b)

    # ---- Batch tiling over *packed* rows. ------------------------------------
    rp0 = _cdiv(B, P)                               # packed rows, pre-padding
    n_tiles = max(1, _cdiv(rp0, int(block_rows)))   # small B -> single tile
    if n_tiles > 1 and n_tiles % 2 == 1:
        n_tiles += 1        # even tile count: balances v7x's two TensorCores
    tb = _round_up(_cdiv(rp0, n_tiles), 8)          # sublane multiple of 8
    rp = _round_up(rp0, tb)
    grid = (rp // tb,)

    # Pad rows to rp*P BEFORE the packing reshape; the block-diagonal weights
    # keep padded rows independent of real rows, and the tail is sliced off
    # after un-packing.
    b_pad = rp * P
    if b_pad != B:
        x = jnp.pad(x, ((0, b_pad - B), (0, 0)))
    xp = x.reshape(rp, P * d_in)                    # free (row-major contiguous)

    # x / out tiles ride the grid (double-buffered pipelined DMA); weights and
    # biases use constant index_maps -> DMA'd once, VMEM-resident across tiles.
    in_specs = [pl.BlockSpec((tb, P * d_in), lambda i: (i, 0))]
    for p_arr in flat_params:
        in_specs.append(pl.BlockSpec(p_arr.shape, lambda i: (0, 0)))
    out_specs = pl.BlockSpec((tb, P * out_dim), lambda i: (i, 0))

    kernel = functools.partial(
        _mlp_kernel, num_layers=num_layers, activations=tuple(activations))

    out = pl.pallas_call(
        kernel,
        grid=grid,
        in_specs=in_specs,
        out_specs=out_specs,
        out_shape=jax.ShapeDtypeStruct((rp, P * out_dim), jnp.float32),
        compiler_params=pltpu.CompilerParams(
            dimension_semantics=("parallel",)),     # megacore sharding on v7x
    )(xp, *flat_params)

    out = out.reshape(b_pad, out_dim)               # un-pack rows (free)
    return out[:B] if b_pad != B else out


# ----------------------------------------------------------------------------
# Deterministic parameter init (mimics nn.Linear's U(-1/sqrt(fan_in), ...))
# ----------------------------------------------------------------------------
def init_params(key, layer_sizes):
    params = []
    for i in range(len(layer_sizes) - 1):
        fan_in, fan_out = layer_sizes[i], layer_sizes[i + 1]
        key, kw, kb = jax.random.split(key, 3)
        bound = 1.0 / (fan_in ** 0.5)
        w = jax.random.uniform(kw, (fan_in, fan_out), jnp.float32, -bound, bound)
        b = jax.random.uniform(kb, (1, fan_out), jnp.float32, -bound, bound)
        params.append((w, b))
    return params


def reference_forward(x, params, activations):
    h = x
    for (w, b), act in zip(params, activations):
        h = jnp.dot(h, w, precision=jax.lax.Precision.HIGHEST) + b
        if act == "tanh":
            h = jnp.tanh(h)
        elif act == "relu":
            h = jnp.maximum(h, 0.0)
    return h


# ----------------------------------------------------------------------------
# Main
# ----------------------------------------------------------------------------
if __name__ == "__main__":
    # Critic(layers=[32, 64, 64, 1], activations=['tanh', 'tanh'], alpha=3e-4)
    # -> MLP: Linear(32,64) tanh, Linear(64,64) tanh, Linear(64,1) identity.
    layer_sizes = [32, 64, 64, 1]
    activations = ["tanh", "tanh", "identity"]

    key = jax.random.PRNGKey(0)
    key, kp = jax.random.split(key)
    params = init_params(kp, layer_sizes)

    # (batch, block_rows): exercises the single-tile fast path (B=8 and
    # B=2560 -> 640 packed rows, one tile) and the multi-tile pipelined path
    # with pack/tile padding and an even tile count (B=2561, 64-row packed
    # tiles -> grid=(12,)).
    cases = [(8, 1024), (2560, 1024), (2561, 64)]
    for batch, br in cases:
        key, kx = jax.random.split(key)
        x = jax.random.normal(kx, (batch, layer_sizes[0]), dtype=jnp.float32)

        fwd = jax.jit(
            lambda xx, _br=br: critic_forward(xx, params, activations,
                                              block_rows=_br))
        values = jax.block_until_ready(fwd(x))
        ref = reference_forward(x, params, activations)

        assert values.shape == (batch, 1)
        assert jnp.allclose(values, ref, atol=1e-4, rtol=1e-4), (
            f"mismatch vs reference at batch={batch}")

    # TODO(synk): Critic.step (MSELoss + Adam update) is a training-time
    # optimizer routine, not part of the forward pass; not implemented here.

    print("KERNEL_OK")
</pallas_src>

<mosaic_0001>
module attributes {stable_mosaic.version = 11 : i64} {
  func.func @_mlp_kernel(%arg0: i32, %arg1: memref<8x128xf32, #tpu.memory_space<vmem>>, %arg2: memref<128x256xf32, #tpu.memory_space<vmem>>, %arg3: memref<1x256xf32, #tpu.memory_space<vmem>>, %arg4: memref<256x256xf32, #tpu.memory_space<vmem>>, %arg5: memref<1x256xf32, #tpu.memory_space<vmem>>, %arg6: memref<256x4xf32, #tpu.memory_space<vmem>>, %arg7: memref<1x4xf32, #tpu.memory_space<vmem>>, %arg8: memref<8x4xf32, #tpu.memory_space<vmem>>) attributes {dimension_semantics = [#tpu.dimension_semantics<parallel>], iteration_bounds = array<i64: 1>, scalar_prefetch = 0 : i64, scratch_operands = 0 : i64, tpu.core_type = #tpu.core_type<tc>, window_params = [{transform_indices = @transform_0, window_bounds = array<i64: 8, 128>}, {pipeline_mode = #tpu.pipeline_mode<synchronous>, transform_indices = @transform_1, window_bounds = array<i64: 128, 256>}, {pipeline_mode = #tpu.pipeline_mode<synchronous>, transform_indices = @transform_2, window_bounds = array<i64: 1, 256>}, {pipeline_mode = #tpu.pipeline_mode<synchronous>, transform_indices = @transform_3, window_bounds = array<i64: 256, 256>}, {pipeline_mode = #tpu.pipeline_mode<synchronous>, transform_indices = @transform_4, window_bounds = array<i64: 1, 256>}, {pipeline_mode = #tpu.pipeline_mode<synchronous>, transform_indices = @transform_5, window_bounds = array<i64: 256, 4>}, {pipeline_mode = #tpu.pipeline_mode<synchronous>, transform_indices = @transform_6, window_bounds = array<i64: 1, 4>}, {transform_indices = @transform_7, window_bounds = array<i64: 8, 4>}]} {
    %c0 = arith.constant 0 : index
    %c0_0 = arith.constant 0 : index
    %0 = vector.load %arg1[%c0, %c0_0] : memref<8x128xf32, #tpu.memory_space<vmem>>, vector<8x128xf32>
    %c0_1 = arith.constant 0 : index
    %c0_2 = arith.constant 0 : index
    %1 = vector.load %arg2[%c0_1, %c0_2] : memref<128x256xf32, #tpu.memory_space<vmem>>, vector<128x256xf32>
    %c0_3 = arith.constant 0 : index
    %c0_4 = arith.constant 0 : index
    %2 = vector.load %arg3[%c0_3, %c0_4] : memref<1x256xf32, #tpu.memory_space<vmem>>, vector<1x256xf32>
    %cst = arith.constant dense<0.000000e+00> : vector<8x256xf32>
    %3 = tpu.matmul %0, %1, %cst {dimension_numbers = #tpu.dot_dimension_numbers<[1], [0], [0], [1], [0, 0, 1, 1], [], []>, precision = #tpu.contract_precision<fp32>} : vector<8x128xf32>, vector<128x256xf32>, vector<8x256xf32> -> vector<8x256xf32>
    %4 = vector.broadcast %2 : vector<1x256xf32> to vector<8x256xf32>
    %5 = arith.addf %3, %4 : vector<8x256xf32>
    %6 = math.tanh %5 : vector<8x256xf32>
    %c0_5 = arith.constant 0 : index
    %c0_6 = arith.constant 0 : index
    %7 = vector.load %arg4[%c0_5, %c0_6] : memref<256x256xf32, #tpu.memory_space<vmem>>, vector<256x256xf32>
    %c0_7 = arith.constant 0 : index
    %c0_8 = arith.constant 0 : index
    %8 = vector.load %arg5[%c0_7, %c0_8] : memref<1x256xf32, #tpu.memory_space<vmem>>, vector<1x256xf32>
    %cst_9 = arith.constant dense<0.000000e+00> : vector<8x256xf32>
    %9 = tpu.matmul %6, %7, %cst_9 {dimension_numbers = #tpu.dot_dimension_numbers<[1], [0], [0], [1], [0, 0, 1, 1], [], []>, precision = #tpu.contract_precision<fp32>} : vector<8x256xf32>, vector<256x256xf32>, vector<8x256xf32> -> vector<8x256xf32>
    %10 = vector.broadcast %8 : vector<1x256xf32> to vector<8x256xf32>
    %11 = arith.addf %9, %10 : vector<8x256xf32>
    %12 = math.tanh %11 : vector<8x256xf32>
    %c0_10 = arith.constant 0 : index
    %c0_11 = arith.constant 0 : index
    %13 = vector.load %arg6[%c0_10, %c0_11] : memref<256x4xf32, #tpu.memory_space<vmem>>, vector<256x4xf32>
    %c0_12 = arith.constant 0 : index
    %c0_13 = arith.constant 0 : index
    %14 = vector.load %arg7[%c0_12, %c0_13] : memref<1x4xf32, #tpu.memory_space<vmem>>, vector<1x4xf32>
    %cst_14 = arith.constant dense<0.000000e+00> : vector<8x4xf32>
    %15 = tpu.matmul %12, %13, %cst_14 {dimension_numbers = #tpu.dot_dimension_numbers<[1], [0], [0], [1], [0, 0, 1, 1], [], []>, precision = #tpu.contract_precision<fp32>} : vector<8x256xf32>, vector<256x4xf32>, vector<8x4xf32> -> vector<8x4xf32>
    %16 = vector.broadcast %14 : vector<1x4xf32> to vector<8x4xf32>
    %17 = arith.addf %15, %16 : vector<8x4xf32>
    %c0_15 = arith.constant 0 : index
    %c0_16 = arith.constant 0 : index
    %18 = vector.load %arg8[%c0_15, %c0_16] : memref<8x4xf32, #tpu.memory_space<vmem>>, vector<8x4xf32>
    tpu.vector_store %arg8[%c0_15, %c0_16], %17 {strides = array<i32>} : memref<8x4xf32, #tpu.memory_space<vmem>>, vector<8x4xf32>,
    return
  }
  func.func @transform_0(%arg0: i32) -> (i32, i32) {
    %c0_i32 = arith.constant 0 : i32
    %c0_i32_0 = arith.constant 0 : i32
    return %arg0, %c0_i32 : i32, i32
  }
  func.func @transform_1(%arg0: i32) -> (i32, i32) {
    %c0_i32 = arith.constant 0 : i32
    %c0_i32_0 = arith.constant 0 : i32
    %c0_i32_1 = arith.constant 0 : i32
    return %c0_i32, %c0_i32_0 : i32, i32
  }
  func.func @transform_2(%arg0: i32) -> (i32, i32) {
    %c0_i32 = arith.constant 0 : i32
    %c0_i32_0 = arith.constant 0 : i32
    %c0_i32_1 = arith.constant 0 : i32
    return %c0_i32, %c0_i32_0 : i32, i32
  }
  func.func @transform_3(%arg0: i32) -> (i32, i32) {
    %c0_i32 = arith.constant 0 : i32
    %c0_i32_0 = arith.constant 0 : i32
    %c0_i32_1 = arith.constant 0 : i32
    return %c0_i32, %c0_i32_0 : i32, i32
  }
  func.func @transform_4(%arg0: i32) -> (i32, i32) {
    %c0_i32 = arith.constant 0 : i32
    %c0_i32_0 = arith.constant 0 : i32
    %c0_i32_1 = arith.constant 0 : i32
    return %c0_i32, %c0_i32_0 : i32, i32
  }
  func.func @transform_5(%arg0: i32) -> (i32, i32) {
    %c0_i32 = arith.constant 0 : i32
    %c0_i32_0 = arith.constant 0 : i32
    %c0_i32_1 = arith.constant 0 : i32
    return %c0_i32, %c0_i32_0 : i32, i32
  }
  func.func @transform_6(%arg0: i32) -> (i32, i32) {
    %c0_i32 = arith.constant 0 : i32
    %c0_i32_0 = arith.constant 0 : i32
    %c0_i32_1 = arith.constant 0 : i32
    return %c0_i32, %c0_i32_0 : i32, i32
  }
  func.func @transform_7(%arg0: i32) -> (i32, i32) {
    %c0_i32 = arith.constant 0 : i32
    %c0_i32_0 = arith.constant 0 : i32
    return %arg0, %c0_i32 : i32, i32
  }
}

</mosaic_0001>

<llo_original>
// kernel: _lambda_.1
$region0: #{_lambda_.1}
  #allocation0 [shape = 'u32[]', space=smem, size = 0x4, offset = 0x4, fixed_abs, tag = 'smem constant byte address 0x4 - core index']
  #allocation1 [shape = 'u32[144,128]{1,0:T(1,128)}', space=vmem, size = 0x12000, scoped, tag = 'internal scratch']
  %s0 = inlined_call_operand.vmem [shape: f32[8,128], index: 0, kind: input, shape index: {}]
  %s1 = inlined_call_operand.hbm [shape: f32[128,256], index: 1, kind: input, shape index: {}]
  %s2 = inlined_call_operand.vmem [shape: f32[1,256], index: 2, kind: input, shape index: {}]
  %s3 = inlined_call_operand.hbm [shape: f32[256,256], index: 3, kind: input, shape index: {}]
  %s4 = inlined_call_operand.vmem [shape: f32[1,256], index: 4, kind: input, shape index: {}]
  %s5 = inlined_call_operand.hbm [shape: f32[256,4], index: 5, kind: input, shape index: {}]
  %s6 = inlined_call_operand.vmem [shape: f32[1,4], index: 6, kind: input, shape index: {}]
  %s7 = inlined_call_operand.vmem [shape: f32[8,4], index: 7, kind: output, shape index: {}]
  %s8 = sld [smem:[#allocation0]]
  $region50: #{_lambda_.1} parent=0
    _
  %s10 = ssub.s32 1, %s8
  %s11 = scalar_select 0, %s10, %s8
  $region1: #{_lambda_.1} parent=0
    #allocation2 [shape = 'u8[131072]{0}', space=vmem, size = 0x20000, scoped, tag = 'input window, operand 1, single buffered']
    #allocation3 [shape = 's32[1]{0}', space=sflag, size = 0x4, scoped, tag = 'scoped memory for _lambda_.1']
    #allocation4 [shape = 'u8[262144]{0}', space=vmem, size = 0x40000, scoped, tag = 'input window, operand 3, single buffered']
    #allocation5 [shape = 's32[1]{0}', space=sflag, size = 0x4, scoped, tag = 'scoped memory for _lambda_.1']
    #allocation6 [shape = 'u8[131072]{0}', space=vmem, size = 0x20000, scoped, tag = 'input window, operand 5, single buffered']
    %12 = vsyncpa [#allocation3], 0
    %13 = vsyncpa [#allocation5], 0
    // Predicated region
    $region2: #{_lambda_.1} parent=1 // pred_check
      _
    $region3: #{_lambda_.1} parent=1 // pred_check_branch
      %15 = sbr.rel (0) target = $region5
    $region4: #{_lambda_.1} parent=1 // pred_region
      _
    $region5: #{_lambda_.1} parent=1 // pred_fallthru
      _
    // Predicated region
    $region6: #{_lambda_.1} parent=1 // pred_check
      _
    $region7: #{_lambda_.1} parent=1 // pred_check_branch
      %17 = sbr.rel (0) target = $region9
    $region8: #{_lambda_.1} parent=1 // pred_region
      %s19 = ssub.s32 4096, 4096
      %20 = vsyncadd [#allocation3], %s19
      %s21 = sshll.u32 [#allocation2], 4
      %s22 = int_to_ptr.vmem [resolvable:$true] %s21
      %27 = dma.hbm_to_vmem [thread:$0]  %s1, 4096, %s22, [#allocation3], 256, 256, 16
    $region9: #{_lambda_.1} parent=1 // pred_fallthru
      _
    // Predicated region
    $region10: #{_lambda_.1} parent=1 // pred_check
      _
    $region11: #{_lambda_.1} parent=1 // pred_check_branch
      %29 = sbr.rel (0) target = $region13
    $region12: #{_lambda_.1} parent=1 // pred_region
      _
    $region13: #{_lambda_.1} parent=1 // pred_fallthru
      _
    // Predicated region
    $region14: #{_lambda_.1} parent=1 // pred_check
      _
    $region15: #{_lambda_.1} parent=1 // pred_check_branch
      %31 = sbr.rel (0) target = $region17
    $region16: #{_lambda_.1} parent=1 // pred_region
      %s33 = ssub.s32 8192, 8192
      %34 = vsyncadd [#allocation5], %s33
      %s35 = sshll.u32 [#allocation4], 4
      %s36 = int_to_ptr.vmem [resolvable:$true] %s35
      %41 = dma.hbm_to_vmem [thread:$0]  %s3, 8192, %s36, [#allocation5], 256, 256, 16
    $region17: #{_lambda_.1} parent=1 // pred_fallthru
      _
    // Predicated region
    $region18: #{_lambda_.1} parent=1 // pred_check
      _
    $region19: #{_lambda_.1} parent=1 // pred_check_branch
      %43 = sbr.rel (0) target = $region21
    $region20: #{_lambda_.1} parent=1 // pred_region
      _
    $region21: #{_lambda_.1} parent=1 // pred_fallthru
      _
    // Predicated region
    $region22: #{_lambda_.1} parent=1 // pred_check
      _
    $region23: #{_lambda_.1} parent=1 // pred_check_branch
      %45 = sbr.rel (0) target = $region25
    $region24: #{_lambda_.1} parent=1 // pred_region
      %s47 = ssub.s32 4096, 4096
      %48 = vsyncadd [#allocation5], %s47
      %s49 = sshll.u32 [#allocation6], 4
      %s50 = int_to_ptr.vmem [resolvable:$true] %s49
      %55 = dma.hbm_to_vmem [thread:$0]  %s5, 4096, %s50, [#allocation5], 128, 128, 8
    $region25: #{_lambda_.1} parent=1 // pred_fallthru
      _
    // Predicated region
    $region26: #{_lambda_.1} parent=1 // pred_check
      _
    $region27: #{_lambda_.1} parent=1 // pred_check_branch
      %57 = sbr.rel (0) target = $region29
    $region28: #{_lambda_.1} parent=1 // pred_region
      _
    $region29: #{_lambda_.1} parent=1 // pred_fallthru
      _
    // Predicated region
    $region30: #{_lambda_.1} parent=1 // pred_check
      _
    $region31: #{_lambda_.1} parent=1 // pred_check_branch
      %59 = sbr.rel (0) target = $region33
    $region32: #{_lambda_.1} parent=1 // pred_region
      %60 = dma.done [#allocation3], 4096
    $region33: #{_lambda_.1} parent=1 // pred_fallthru
      _
    // Predicated region
    $region34: #{_lambda_.1} parent=1 // pred_check
      _
    $region35: #{_lambda_.1} parent=1 // pred_check_branch
      %62 = sbr.rel (0) target = $region37
    $region36: #{_lambda_.1} parent=1 // pred_region
      %63 = dma.done [#allocation5], 8192
    $region37: #{_lambda_.1} parent=1 // pred_fallthru
      _
    // Predicated region
    $region38: #{_lambda_.1} parent=1 // pred_check
      _
    $region39: #{_lambda_.1} parent=1 // pred_check_branch
      %65 = sbr.rel (0) target = $region41
    $region40: #{_lambda_.1} parent=1 // pred_region
      %66 = dma.done [#allocation5], 4096
    $region41: #{_lambda_.1} parent=1 // pred_fallthru
      _
    %v67 = vld [vmem:[%s0] sm:$0xff]
    %v68 = vld [vmem:[#allocation2] sm:$0xff]
    %v69 = vld [vmem:[#allocation2 + $0x8] sm:$0xff]
    %v70 = vld [vmem:[#allocation2 + $0x10] sm:$0xff]
    %v71 = vld [vmem:[#allocation2 + $0x18] sm:$0xff]
    %v72 = vld [vmem:[#allocation2 + $0x20] sm:$0xff]
    %v73 = vld [vmem:[#allocation2 + $0x28] sm:$0xff]
    %v74 = vld [vmem:[#allocation2 + $0x30] sm:$0xff]
    %v75 = vld [vmem:[#allocation2 + $0x38] sm:$0xff]
    %v76 = vld [vmem:[#allocation2 + $0x40] sm:$0xff]
    %v77 = vld [vmem:[#allocation2 + $0x48] sm:$0xff]
    %v78 = vld [vmem:[#allocation2 + $0x50] sm:$0xff]
    %v79 = vld [vmem:[#allocation2 + $0x58] sm:$0xff]
    %v80 = vld [vmem:[#allocation2 + $0x60] sm:$0xff]
    %v81 = vld [vmem:[#allocation2 + $0x68] sm:$0xff]
    %v82 = vld [vmem:[#allocation2 + $0x70] sm:$0xff]
    %v83 = vld [vmem:[#allocation2 + $0x78] sm:$0xff]
    %v84 = vld [vmem:[#allocation2 + $0x80] sm:$0xff]
    %v85 = vld [vmem:[#allocation2 + $0x88] sm:$0xff]
    %v86 = vld [vmem:[#allocation2 + $0x90] sm:$0xff]
    %v87 = vld [vmem:[#allocation2 + $0x98] sm:$0xff]
    %v88 = vld [vmem:[#allocation2 + $0xa0] sm:$0xff]
    %v89 = vld [vmem:[#allocation2 + $0xa8] sm:$0xff]
    %v90 = vld [vmem:[#allocation2 + $0xb0] sm:$0xff]
    %v91 = vld [vmem:[#allocation2 + $0xb8] sm:$0xff]
    %v92 = vld [vmem:[#allocation2 + $0xc0] sm:$0xff]
    %v93 = vld [vmem:[#allocation2 + $0xc8] sm:$0xff]
    %v94 = vld [vmem:[#allocation2 + $0xd0] sm:$0xff]
    %v95 = vld [vmem:[#allocation2 + $0xd8] sm:$0xff]
    %v96 = vld [vmem:[#allocation2 + $0xe0] sm:$0xff]
    %v97 = vld [vmem:[#allocation2 + $0xe8] sm:$0xff]
    %v98 = vld [vmem:[#allocation2 + $0xf0] sm:$0xff]
    %v99 = vld [vmem:[#allocation2 + $0xf8] sm:$0xff]
    %v100 = vld [vmem:[%s2] sm:$0x3]
    %v102 = vlaneseq
    %v103 = vshrl.u32 %v102, 7
    %v104 = vsub.s32 0, %v103
    %v105 = vrot.slane %v100, %v104
    %v106 = vlaneseq
    %v107 = vshrl.u32 %v106, 7
    %v108 = vsub.s32 1, %v107
    %v109 = vrot.slane %v100, %v108
    %v112 = vand.u32 %v69, 4294901760
    %113 = vmatprep.subr.mxu0 %v112
    %v114 = vand.u32 %v68, 4294901760
    %115 = vmatpush1.msra.mxu0 %v114
    %v116 = vand.u32 %v71, 4294901760
    %117 = vmatprep.subr.mxu0 %v116
    %v118 = vand.u32 %v70, 4294901760
    %119 = vmatpush1.msra.mxu0 %v118
    %v120 = vand.u32 %v73, 4294901760
    %121 = vmatprep.subr.mxu0 %v120
    %v122 = vand.u32 %v72, 4294901760
    %123 = vmatpush1.msra.mxu0 %v122
    %v124 = vand.u32 %v75, 4294901760
    %125 = vmatprep.subr.mxu0 %v124
    %v126 = vand.u32 %v74, 4294901760
    %127 = vmatpush1.msra.mxu0 %v126
    %v128 = vand.u32 %v77, 4294901760
    %129 = vmatprep.subr.mxu0 %v128
    %v130 = vand.u32 %v76, 4294901760
    %131 = vmatpush1.msra.mxu0 %v130
    %v132 = vand.u32 %v79, 4294901760
    %133 = vmatprep.subr.mxu0 %v132
    %v134 = vand.u32 %v78, 4294901760
    %135 = vmatpush1.msra.mxu0 %v134
    %v136 = vand.u32 %v81, 4294901760
    %137 = vmatprep.subr.mxu0 %v136
    %v138 = vand.u32 %v80, 4294901760
    %139 = vmatpush1.msra.mxu0 %v138
    %v140 = vand.u32 %v83, 4294901760
    %141 = vmatprep.subr.mxu0 %v140
    %v142 = vand.u32 %v82, 4294901760
    %143 = vmatpush1.msra.mxu0 %v142
    %v144 = vand.u32 %v85, 4294901760
    %145 = vmatprep.subr.mxu0 %v144
    %v146 = vand.u32 %v84, 4294901760
    %147 = vmatpush1.msra.mxu0 %v146
    %v148 = vand.u32 %v87, 4294901760
    %149 = vmatprep.subr.mxu0 %v148
    %v150 = vand.u32 %v86, 4294901760
    %151 = vmatpush1.msra.mxu0 %v150
    %v152 = vand.u32 %v89, 4294901760
    %153 = vmatprep.subr.mxu0 %v152
    %v154 = vand.u32 %v88, 4294901760
    %155 = vmatpush1.msra.mxu0 %v154
    %v156 = vand.u32 %v91, 4294901760
    %157 = vmatprep.subr.mxu0 %v156
    %v158 = vand.u32 %v90, 4294901760
    %159 = vmatpush1.msra.mxu0 %v158
    %v160 = vand.u32 %v93, 4294901760
    %161 = vmatprep.subr.mxu0 %v160
    %v162 = vand.u32 %v92, 4294901760
    %163 = vmatpush1.msra.mxu0 %v162
    %v164 = vand.u32 %v95, 4294901760
    %165 = vmatprep.subr.mxu0 %v164
    %v166 = vand.u32 %v94, 4294901760
    %167 = vmatpush1.msra.mxu0 %v166
    %v168 = vand.u32 %v97, 4294901760
    %169 = vmatprep.subr.mxu0 %v168
    %v170 = vand.u32 %v96, 4294901760
    %171 = vmatpush1.msra.mxu0 %v170
    %v172 = vand.u32 %v99, 4294901760
    %173 = vmatprep.subr.mxu0 %v172
    %v174 = vand.u32 %v98, 4294901760
    %175 = vmatpush1.msra.mxu0 %v174
    %176 = vmatprep.subr.mxu0 0.0
    %177 = vmatpush1.msra.mxu0 0.0
    %178 = vmatprep.subr.mxu0 0.0
    %179 = vmatpush1.msra.mxu0 0.0
    %180 = vmatprep.subr.mxu0 0.0
    %181 = vmatpush1.msra.mxu0 0.0
    %182 = vmatprep.subr.mxu0 0.0
    %183 = vmatpush1.msra.mxu0 0.0
    %184 = vmatprep.subr.mxu0 0.0
    %185 = vmatpush1.msra.mxu0 0.0
    %186 = vmatprep.subr.mxu0 0.0
    %187 = vmatpush1.msra.mxu0 0.0
    %188 = vmatprep.subr.mxu0 0.0
    %189 = vmatpush1.msra.mxu0 0.0
    %190 = vmatprep.subr.mxu0 0.0
    %191 = vmatpush1.msra.mxu0 0.0
    %192 = vmatprep.subr.mxu0 0.0
    %193 = vmatpush1.msra.mxu0 0.0
    %194 = vmatprep.subr.mxu0 0.0
    %195 = vmatpush1.msra.mxu0 0.0
    %196 = vmatprep.subr.mxu0 0.0
    %197 = vmatpush1.msra.mxu0 0.0
    %198 = vmatprep.subr.mxu0 0.0
    %199 = vmatpush1.msra.mxu0 0.0
    %200 = vmatprep.subr.mxu0 0.0
    %201 = vmatpush1.msra.mxu0 0.0
    %202 = vmatprep.subr.mxu0 0.0
    %203 = vmatpush1.msra.mxu0 0.0
    %204 = vmatprep.subr.mxu0 0.0
    %205 = vmatpush1.msra.mxu0 0.0
    %206 = vmatprep.subr.mxu0 0.0
    %207 = vmatpush1.msra.mxu0 0.0
    %208 = vmatprep.mubr.f32.mxu0 0.0
    %v209 = vand.u32 %v67, 4294901760
    %v210 = vsub.f32 %v67, %v209
    %v211 = vand.u32 %v210, 4294901760
    %v212 = vsub.f32 %v210, %v211
    %v213 = vand.u32 %v212, 4294901760
    %214 = vmatmul.mubr.f32.gmra.mrb[0].mxu0 %v213
    %v215 = vpop.f32.mrb[0].mxu0
    %v216 = vadd.f32 %v105, %v215
    %v217 = vpop.f32.mrb[0].mxu0
    %v218 = vadd.f32 %v109, %v217
    %219 = vdwg.mxu0
    %v220 = vand.u32 %v69, 4294901760
    %v221 = vsub.f32 %v69, %v220
    %v222 = vand.u32 %v221, 4294901760
    %v223 = vsub.f32 %v221, %v222
    %v224 = vand.u32 %v223, 4294901760
    %225 = vmatprep.subr.mxu0 %v224
    %v226 = vand.u32 %v68, 4294901760
    %v227 = vsub.f32 %v68, %v226
    %v228 = vand.u32 %v227, 4294901760
    %v229 = vsub.f32 %v227, %v228
    %v230 = vand.u32 %v229, 4294901760
    %231 = vmatpush1.msra.mxu0 %v230
    %v232 = vand.u32 %v71, 4294901760
    %v233 = vsub.f32 %v71, %v232
    %v234 = vand.u32 %v233, 4294901760
    %v235 = vsub.f32 %v233, %v234
    %v236 = vand.u32 %v235, 4294901760
    %237 = vmatprep.subr.mxu0 %v236
    %v238 = vand.u32 %v70, 4294901760
    %v239 = vsub.f32 %v70, %v238
    %v240 = vand.u32 %v239, 4294901760
    %v241 = vsub.f32 %v239, %v240
    %v242 = vand.u32 %v241, 4294901760
    %243 = vmatpush1.msra.mxu0 %v242
    %v244 = vand.u32 %v73, 4294901760
    %v245 = vsub.f32 %v73, %v244
    %v246 = vand.u32 %v245, 4294901760
    %v247 = vsub.f32 %v245, %v246
    %v248 = vand.u32 %v247, 4294901760
    %249 = vmatprep.subr.mxu0 %v248
    %v250 = vand.u32 %v72, 4294901760
    %v251 = vsub.f32 %v72, %v250
    %v252 = vand.u32 %v251, 4294901760
    %v253 = vsub.f32 %v251, %v252
    %v254 = vand.u32 %v253, 4294901760
    %255 = vmatpush1.msra.mxu0 %v254
    %v256 = vand.u32 %v75, 4294901760
    %v257 = vsub.f32 %v75, %v256
    %v258 = vand.u32 %v257, 4294901760
    %v259 = vsub.f32 %v257, %v258
    %v260 = vand.u32 %v259, 4294901760
    %261 = vmatprep.subr.mxu0 %v260
    %v262 = vand.u32 %v74, 4294901760
    %v263 = vsub.f32 %v74, %v262
    %v264 = vand.u32 %v263, 4294901760
    %v265 = vsub.f32 %v263, %v264
    %v266 = vand.u32 %v265, 4294901760
    %267 = vmatpush1.msra.mxu0 %v266
    %v268 = vand.u32 %v77, 4294901760
    %v269 = vsub.f32 %v77, %v268
    %v270 = vand.u32 %v269, 4294901760
    %v271 = vsub.f32 %v269, %v270
    %v272 = vand.u32 %v271, 4294901760
    %273 = vmatprep.subr.mxu0 %v272
    %v274 = vand.u32 %v76, 4294901760
    %v275 = vsub.f32 %v76, %v274
    %v276 = vand.u32 %v275, 4294901760
    %v277 = vsub.f32 %v275, %v276
    %v278 = vand.u32 %v277, 4294901760
    %279 = vmatpush1.msra.mxu0 %v278
    %v280 = vand.u32 %v79, 4294901760
    %v281 = vsub.f32 %v79, %v280
    %v282 = vand.u32 %v281, 4294901760
    %v283 = vsub.f32 %v281, %v282
    %v284 = vand.u32 %v283, 4294901760
    %285 = vmatprep.subr.mxu0 %v284
    %v286 = vand.u32 %v78, 4294901760
    %v287 = vsub.f32 %v78, %v286
    %v288 = vand.u32 %v287, 4294901760
    %v289 = vsub.f32 %v287, %v288
    %v290 = vand.u32 %v289, 4294901760
    %291 = vmatpush1.msra.mxu0 %v290
    %v292 = vand.u32 %v81, 4294901760
    %v293 = vsub.f32 %v81, %v292
    %v294 = vand.u32 %v293, 4294901760
    %v295 = vsub.f32 %v293, %v294
    %v296 = vand.u32 %v295, 4294901760
    %297 = vmatprep.subr.mxu0 %v296
    %v298 = vand.u32 %v80, 4294901760
    %v299 = vsub.f32 %v80, %v298
    %v300 = vand.u32 %v299, 4294901760
    %v301 = vsub.f32 %v299, %v300
    %v302 = vand.u32 %v301, 4294901760
    %303 = vmatpush1.msra.mxu0 %v302
    %v304 = vand.u32 %v83, 4294901760
    %v305 = vsub.f32 %v83, %v304
    %v306 = vand.u32 %v305, 4294901760
    %v307 = vsub.f32 %v305, %v306
    %v308 = vand.u32 %v307, 4294901760
    %309 = vmatprep.subr.mxu0 %v308
    %v310 = vand.u32 %v82, 4294901760
    %v311 = vsub.f32 %v82, %v310
    %v312 = vand.u32 %v311, 4294901760
    %v313 = vsub.f32 %v311, %v312
    %v314 = vand.u32 %v313, 4294901760
    %315 = vmatpush1.msra.mxu0 %v314
    %v316 = vand.u32 %v85, 4294901760
    %v317 = vsub.f32 %v85, %v316
    %v318 = vand.u32 %v317, 4294901760
    %v319 = vsub.f32 %v317, %v318
    %v320 = vand.u32 %v319, 4294901760
    %321 = vmatprep.subr.mxu0 %v320
    %v322 = vand.u32 %v84, 4294901760
    %v323 = vsub.f32 %v84, %v322
    %v324 = vand.u32 %v323, 4294901760
    %v325 = vsub.f32 %v323, %v324
    %v326 = vand.u32 %v325, 4294901760
    %327 = vmatpush1.msra.mxu0 %v326
    %v328 = vand.u32 %v87, 4294901760
    %v329 = vsub.f32 %v87, %v328
    %v330 = vand.u32 %v329, 4294901760
    %v331 = vsub.f32 %v329, %v330
    %v332 = vand.u32 %v331, 4294901760
    %333 = vmatprep.subr.mxu0 %v332
    %v334 = vand.u32 %v86, 4294901760
    %v335 = vsub.f32 %v86, %v334
    %v336 = vand.u32 %v335, 4294901760
    %v337 = vsub.f32 %v335, %v336
    %v338 = vand.u32 %v337, 4294901760
    %339 = vmatpush1.msra.mxu0 %v338
    %v340 = vand.u32 %v89, 4294901760
    %v341 = vsub.f32 %v89, %v340
    %v342 = vand.u32 %v341, 4294901760
    %v343 = vsub.f32 %v341, %v342
    %v344 = vand.u32 %v343, 4294901760
    %345 = vmatprep.subr.mxu0 %v344
    %v346 = vand.u32 %v88, 4294901760
    %v347 = vsub.f32 %v88, %v346
    %v348 = vand.u32 %v347, 4294901760
    %v349 = vsub.f32 %v347, %v348
    %v350 = vand.u32 %v349, 4294901760
    %351 = vmatpush1.msra.mxu0 %v350
    %v352 = vand.u32 %v91, 4294901760
    %v353 = vsub.f32 %v91, %v352
    %v354 = vand.u32 %v353, 4294901760
    %v355 = vsub.f32 %v353, %v354
    %v356 = vand.u32 %v355, 4294901760
    %357 = vmatprep.subr.mxu0 %v356
    %v358 = vand.u32 %v90, 4294901760
    %v359 = vsub.f32 %v90, %v358
    %v360 = vand.u32 %v359, 4294901760
    %v361 = vsub.f32 %v359, %v360
    %v362 = vand.u32 %v361, 4294901760
    %363 = vmatpush1.msra.mxu0 %v362
    %v364 = vand.u32 %v93, 4294901760
    %v365 = vsub.f32 %v93, %v364
    %v366 = vand.u32 %v365, 4294901760
    %v367 = vsub.f32 %v365, %v366
    %v368 = vand.u32 %v367, 4294901760
    %369 = vmatprep.subr.mxu0 %v368
    %v370 = vand.u32 %v92, 4294901760
    %v371 = vsub.f32 %v92, %v370
    %v372 = vand.u32 %v371, 4294901760
    %v373 = vsub.f32 %v371, %v372
    %v374 = vand.u32 %v373, 4294901760
    %375 = vmatpush1.msra.mxu0 %v374
    %v376 = vand.u32 %v95, 4294901760
    %v377 = vsub.f32 %v95, %v376
    %v378 = vand.u32 %v377, 4294901760
    %v379 = vsub.f32 %v377, %v378
    %v380 = vand.u32 %v379, 4294901760
    %381 = vmatprep.subr.mxu0 %v380
    %v382 = vand.u32 %v94, 4294901760
    %v383 = vsub.f32 %v94, %v382
    %v384 = vand.u32 %v383, 4294901760
    %v385 = vsub.f32 %v383, %v384
    %v386 = vand.u32 %v385, 4294901760
    %387 = vmatpush1.msra.mxu0 %v386
    %v388 = vand.u32 %v97, 4294901760
    %v389 = vsub.f32 %v97, %v388
    %v390 = vand.u32 %v389, 4294901760
    %v391 = vsub.f32 %v389, %v390
    %v392 = vand.u32 %v391, 4294901760
    %393 = vmatprep.subr.mxu0 %v392
    %v394 = vand.u32 %v96, 4294901760
    %v395 = vsub.f32 %v96, %v394
    %v396 = vand.u32 %v395, 4294901760
    %v397 = vsub.f32 %v395, %v396
    %v398 = vand.u32 %v397, 4294901760
    %399 = vmatpush1.msra.mxu0 %v398
    %v400 = vand.u32 %v99, 4294901760
    %v401 = vsub.f32 %v99, %v400
    %v402 = vand.u32 %v401, 4294901760
    %v403 = vsub.f32 %v401, %v402
    %v404 = vand.u32 %v403, 4294901760
    %405 = vmatprep.subr.mxu0 %v404
    %v406 = vand.u32 %v98, 4294901760
    %v407 = vsub.f32 %v98, %v406
    %v408 = vand.u32 %v407, 4294901760
    %v409 = vsub.f32 %v407, %v408
    %v410 = vand.u32 %v409, 4294901760
    %411 = vmatpush1.msra.mxu0 %v410
    %412 = vmatprep.subr.mxu0 0.0
    %413 = vmatpush1.msra.mxu0 0.0
    %414 = vmatprep.subr.mxu0 0.0
    %415 = vmatpush1.msra.mxu0 0.0
    %416 = vmatprep.subr.mxu0 0.0
    %417 = vmatpush1.msra.mxu0 0.0
    %418 = vmatprep.subr.mxu0 0.0
    %419 = vmatpush1.msra.mxu0 0.0
    %420 = vmatprep.subr.mxu0 0.0
    %421 = vmatpush1.msra.mxu0 0.0
    %422 = vmatprep.subr.mxu0 0.0
    %423 = vmatpush1.msra.mxu0 0.0
    %424 = vmatprep.subr.mxu0 0.0
    %425 = vmatpush1.msra.mxu0 0.0
    %426 = vmatprep.subr.mxu0 0.0
    %427 = vmatpush1.msra.mxu0 0.0
    %428 = vmatprep.subr.mxu0 0.0
    %429 = vmatpush1.msra.mxu0 0.0
    %430 = vmatprep.subr.mxu0 0.0
    %431 = vmatpush1.msra.mxu0 0.0
    %432 = vmatprep.subr.mxu0 0.0
    %433 = vmatpush1.msra.mxu0 0.0
    %434 = vmatprep.subr.mxu0 0.0
    %435 = vmatpush1.msra.mxu0 0.0
    %436 = vmatprep.subr.mxu0 0.0
    %437 = vmatpush1.msra.mxu0 0.0
    %438 = vmatprep.subr.mxu0 0.0
    %439 = vmatpush1.msra.mxu0 0.0
    %440 = vmatprep.subr.mxu0 0.0
    %441 = vmatpush1.msra.mxu0 0.0
    %442 = vmatprep.subr.mxu0 0.0
    %443 = vmatpush1.msra.mxu0 0.0
    %444 = vmatprep.mubr.f32.mxu0 0.0
    %v445 = vand.u32 %v67, 4294901760
    %446 = vmatmul.mubr.f32.gmra.mrb[0].mxu0 %v445
    %v447 = vpop.f32.mrb[0].mxu0
    %v448 = vadd.f32 %v216, %v447
    %v449 = vpop.f32.mrb[0].mxu0
    %v450 = vadd.f32 %v218, %v449
    %451 = vdwg.mxu0
    %v452 = vand.u32 %v69, 4294901760
    %v453 = vsub.f32 %v69, %v452
    %454 = vmatprep.subr.mxu0 %v453
    %v455 = vand.u32 %v68, 4294901760
    %v456 = vsub.f32 %v68, %v455
    %457 = vmatpush1.msra.mxu0 %v456
    %v458 = vand.u32 %v71, 4294901760
    %v459 = vsub.f32 %v71, %v458
    %460 = vmatprep.subr.mxu0 %v459
    %v461 = vand.u32 %v70, 4294901760
    %v462 = vsub.f32 %v70, %v461
    %463 = vmatpush1.msra.mxu0 %v462
    %v464 = vand.u32 %v73, 4294901760
    %v465 = vsub.f32 %v73, %v464
    %466 = vmatprep.subr.mxu0 %v465
    %v467 = vand.u32 %v72, 4294901760
    %v468 = vsub.f32 %v72, %v467
    %469 = vmatpush1.msra.mxu0 %v468
    %v470 = vand.u32 %v75, 4294901760
    %v471 = vsub.f32 %v75, %v470
    %472 = vmatprep.subr.mxu0 %v471
    %v473 = vand.u32 %v74, 4294901760
    %v474 = vsub.f32 %v74, %v473
    %475 = vmatpush1.msra.mxu0 %v474
    %v476 = vand.u32 %v77, 4294901760
    %v477 = vsub.f32 %v77, %v476
    %478 = vmatprep.subr.mxu0 %v477
    %v479 = vand.u32 %v76, 4294901760
    %v480 = vsub.f32 %v76, %v479
    %481 = vmatpush1.msra.mxu0 %v480
    %v482 = vand.u32 %v79, 4294901760
    %v483 = vsub.f32 %v79, %v482
    %484 = vmatprep.subr.mxu0 %v483
    %v485 = vand.u32 %v78, 4294901760
    %v486 = vsub.f32 %v78, %v485
    %487 = vmatpush1.msra.mxu0 %v486
    %v488 = vand.u32 %v81, 4294901760
    %v489 = vsub.f32 %v81, %v488
    %490 = vmatprep.subr.mxu0 %v489
    %v491 = vand.u32 %v80, 4294901760
    %v492 = vsub.f32 %v80, %v491
    %493 = vmatpush1.msra.mxu0 %v492
    %v494 = vand.u32 %v83, 4294901760
    %v495 = vsub.f32 %v83, %v494
    %496 = vmatprep.subr.mxu0 %v495
    %v497 = vand.u32 %v82, 4294901760
    %v498 = vsub.f32 %v82, %v497
    %499 = vmatpush1.msra.mxu0 %v498
    %v500 = vand.u32 %v85, 4294901760
    %v501 = vsub.f32 %v85, %v500
    %502 = vmatprep.subr.mxu0 %v501
    %v503 = vand.u32 %v84, 4294901760
    %v504 = vsub.f32 %v84, %v503
    %505 = vmatpush1.msra.mxu0 %v504
    %v506 = vand.u32 %v87, 4294901760
    %v507 = vsub.f32 %v87, %v506
    %508 = vmatprep.subr.mxu0 %v507
    %v509 = vand.u32 %v86, 4294901760
    %v510 = vsub.f32 %v86, %v509
    %511 = vmatpush1.msra.mxu0 %v510
    %v512 = vand.u32 %v89, 4294901760
    %v513 = vsub.f32 %v89, %v512
    %514 = vmatprep.subr.mxu0 %v513
    %v515 = vand.u32 %v88, 4294901760
    %v516 = vsub.f32 %v88, %v515
    %517 = vmatpush1.msra.mxu0 %v516
    %v518 = vand.u32 %v91, 4294901760
    %v519 = vsub.f32 %v91, %v518
    %520 = vmatprep.subr.mxu0 %v519
    %v521 = vand.u32 %v90, 4294901760
    %v522 = vsub.f32 %v90, %v521
    %523 = vmatpush1.msra.mxu0 %v522
    %v524 = vand.u32 %v93, 4294901760
    %v525 = vsub.f32 %v93, %v524
    %526 = vmatprep.subr.mxu0 %v525
    %v527 = vand.u32 %v92, 4294901760
    %v528 = vsub.f32 %v92, %v527
    %529 = vmatpush1.msra.mxu0 %v528
    %v530 = vand.u32 %v95, 4294901760
    %v531 = vsub.f32 %v95, %v530
    %532 = vmatprep.subr.mxu0 %v531
    %v533 = vand.u32 %v94, 4294901760
    %v534 = vsub.f32 %v94, %v533
    %535 = vmatpush1.msra.mxu0 %v534
    %v536 = vand.u32 %v97, 4294901760
    %v537 = vsub.f32 %v97, %v536
    %538 = vmatprep.subr.mxu0 %v537
    %v539 = vand.u32 %v96, 4294901760
    %v540 = vsub.f32 %v96, %v539
    %541 = vmatpush1.msra.mxu0 %v540
    %v542 = vand.u32 %v99, 4294901760
    %v543 = vsub.f32 %v99, %v542
    %544 = vmatprep.subr.mxu0 %v543
    %v545 = vand.u32 %v98, 4294901760
    %v546 = vsub.f32 %v98, %v545
    %547 = vmatpush1.msra.mxu0 %v546
    %548 = vmatprep.subr.mxu0 0.0
    %549 = vmatpush1.msra.mxu0 0.0
    %550 = vmatprep.subr.mxu0 0.0
    %551 = vmatpush1.msra.mxu0 0.0
    %552 = vmatprep.subr.mxu0 0.0
    %553 = vmatpush1.msra.mxu0 0.0
    %554 = vmatprep.subr.mxu0 0.0
    %555 = vmatpush1.msra.mxu0 0.0
    %556 = vmatprep.subr.mxu0 0.0
    %557 = vmatpush1.msra.mxu0 0.0
    %558 = vmatprep.subr.mxu0 0.0
    %559 = vmatpush1.msra.mxu0 0.0
    %560 = vmatprep.subr.mxu0 0.0
    %561 = vmatpush1.msra.mxu0 0.0
    %562 = vmatprep.subr.mxu0 0.0
    %563 = vmatpush1.msra.mxu0 0.0
    %564 = vmatprep.subr.mxu0 0.0
    %565 = vmatpush1.msra.mxu0 0.0
    %566 = vmatprep.subr.mxu0 0.0
    %567 = vmatpush1.msra.mxu0 0.0
    %568 = vmatprep.subr.mxu0 0.0
    %569 = vmatpush1.msra.mxu0 0.0
    %570 = vmatprep.subr.mxu0 0.0
    %571 = vmatpush1.msra.mxu0 0.0
    %572 = vmatprep.subr.mxu0 0.0
    %573 = vmatpush1.msra.mxu0 0.0
    %574 = vmatprep.subr.mxu0 0.0
    %575 = vmatpush1.msra.mxu0 0.0
    %576 = vmatprep.subr.mxu0 0.0
    %577 = vmatpush1.msra.mxu0 0.0
    %578 = vmatprep.subr.mxu0 0.0
    %579 = vmatpush1.msra.mxu0 0.0
    %580 = vmatprep.mubr.f32.mxu0 0.0
    %v581 = vand.u32 %v67, 4294901760
    %v582 = vsub.f32 %v67, %v581
    %583 = vmatmul.mubr.f32.gmra.mrb[0].mxu0 %v582
    %v584 = vpop.f32.mrb[0].mxu0
    %v585 = vadd.f32 %v448, %v584
    %v586 = vpop.f32.mrb[0].mxu0
    %v587 = vadd.f32 %v450, %v586
    %588 = vdwg.mxu0
    %v589 = vand.u32 %v69, 4294901760
    %590 = vmatprep.subr.mxu0 %v589
    %v591 = vand.u32 %v68, 4294901760
    %592 = vmatpush1.msra.mxu0 %v591
    %v593 = vand.u32 %v71, 4294901760
    %594 = vmatprep.subr.mxu0 %v593
    %v595 = vand.u32 %v70, 4294901760
    %596 = vmatpush1.msra.mxu0 %v595
    %v597 = vand.u32 %v73, 4294901760
    %598 = vmatprep.subr.mxu0 %v597
    %v599 = vand.u32 %v72, 4294901760
    %600 = vmatpush1.msra.mxu0 %v599
    %v601 = vand.u32 %v75, 4294901760
    %602 = vmatprep.subr.mxu0 %v601
    %v603 = vand.u32 %v74, 4294901760
    %604 = vmatpush1.msra.mxu0 %v603
    %v605 = vand.u32 %v77, 4294901760
    %606 = vmatprep.subr.mxu0 %v605
    %v607 = vand.u32 %v76, 4294901760
    %608 = vmatpush1.msra.mxu0 %v607
    %v609 = vand.u32 %v79, 4294901760
    %610 = vmatprep.subr.mxu0 %v609
    %v611 = vand.u32 %v78, 4294901760
    %612 = vmatpush1.msra.mxu0 %v611
    %v613 = vand.u32 %v81, 4294901760
    %614 = vmatprep.subr.mxu0 %v613
    %v615 = vand.u32 %v80, 4294901760
    %616 = vmatpush1.msra.mxu0 %v615
    %v617 = vand.u32 %v83, 4294901760
    %618 = vmatprep.subr.mxu0 %v617
    %v619 = vand.u32 %v82, 4294901760
    %620 = vmatpush1.msra.mxu0 %v619
    %v621 = vand.u32 %v85, 4294901760
    %622 = vmatprep.subr.mxu0 %v621
    %v623 = vand.u32 %v84, 4294901760
    %624 = vmatpush1.msra.mxu0 %v623
    %v625 = vand.u32 %v87, 4294901760
    %626 = vmatprep.subr.mxu0 %v625
    %v627 = vand.u32 %v86, 4294901760
    %628 = vmatpush1.msra.mxu0 %v627
    %v629 = vand.u32 %v89, 4294901760
    %630 = vmatprep.subr.mxu0 %v629
    %v631 = vand.u32 %v88, 4294901760
    %632 = vmatpush1.msra.mxu0 %v631
    %v633 = vand.u32 %v91, 4294901760
    %634 = vmatprep.subr.mxu0 %v633
    %v635 = vand.u32 %v90, 4294901760
    %636 = vmatpush1.msra.mxu0 %v635
    %v637 = vand.u32 %v93, 4294901760
    %638 = vmatprep.subr.mxu0 %v637
    %v639 = vand.u32 %v92, 4294901760
    %640 = vmatpush1.msra.mxu0 %v639
    %v641 = vand.u32 %v95, 4294901760
    %642 = vmatprep.subr.mxu0 %v641
    %v643 = vand.u32 %v94, 4294901760
    %644 = vmatpush1.msra.mxu0 %v643
    %v645 = vand.u32 %v97, 4294901760
    %646 = vmatprep.subr.mxu0 %v645
    %v647 = vand.u32 %v96, 4294901760
    %648 = vmatpush1.msra.mxu0 %v647
    %v649 = vand.u32 %v99, 4294901760
    %650 = vmatprep.subr.mxu0 %v649
    %v651 = vand.u32 %v98, 4294901760
    %652 = vmatpush1.msra.mxu0 %v651
    %653 = vmatprep.subr.mxu0 0.0
    %654 = vmatpush1.msra.mxu0 0.0
    %655 = vmatprep.subr.mxu0 0.0
    %656 = vmatpush1.msra.mxu0 0.0
    %657 = vmatprep.subr.mxu0 0.0
    %658 = vmatpush1.msra.mxu0 0.0
    %659 = vmatprep.subr.mxu0 0.0
    %660 = vmatpush1.msra.mxu0 0.0
    %661 = vmatprep.subr.mxu0 0.0
    %662 = vmatpush1.msra.mxu0 0.0
    %663 = vmatprep.subr.mxu0 0.0
    %664 = vmatpush1.msra.mxu0 0.0
    %665 = vmatprep.subr.mxu0 0.0
    %666 = vmatpush1.msra.mxu0 0.0
    %667 = vmatprep.subr.mxu0 0.0
    %668 = vmatpush1.msra.mxu0 0.0
    %669 = vmatprep.subr.mxu0 0.0
    %670 = vmatpush1.msra.mxu0 0.0
    %671 = vmatprep.subr.mxu0 0.0
    %672 = vmatpush1.msra.mxu0 0.0
    %673 = vmatprep.subr.mxu0 0.0
    %674 = vmatpush1.msra.mxu0 0.0
    %675 = vmatprep.subr.mxu0 0.0
    %676 = vmatpush1.msra.mxu0 0.0
    %677 = vmatprep.subr.mxu0 0.0
    %678 = vmatpush1.msra.mxu0 0.0
    %679 = vmatprep.subr.mxu0 0.0
    %680 = vmatpush1.msra.mxu0 0.0
    %681 = vmatprep.subr.mxu0 0.0
    %682 = vmatpush1.msra.mxu0 0.0
    %683 = vmatprep.subr.mxu0 0.0
    %684 = vmatpush1.msra.mxu0 0.0
    %685 = vmatprep.mubr.f32.mxu0 0.0
    %v686 = vand.u32 %v67, 4294901760
    %v687 = vsub.f32 %v67, %v686
    %v688 = vand.u32 %v687, 4294901760
    %689 = vmatmul.mubr.f32.gmra.mrb[0].mxu0 %v688
    %v690 = vpop.f32.mrb[0].mxu0
    %v691 = vadd.f32 %v585, %v690
    %v692 = vpop.f32.mrb[0].mxu0
    %v693 = vadd.f32 %v587, %v692
    %694 = vdwg.mxu0
    %v695 = vand.u32 %v69, 4294901760
    %v696 = vsub.f32 %v69, %v695
    %v697 = vand.u32 %v696, 4294901760
    %698 = vmatprep.subr.mxu0 %v697
    %v699 = vand.u32 %v68, 4294901760
    %v700 = vsub.f32 %v68, %v699
    %v701 = vand.u32 %v700, 4294901760
    %702 = vmatpush1.msra.mxu0 %v701
    %v703 = vand.u32 %v71, 4294901760
    %v704 = vsub.f32 %v71, %v703
    %v705 = vand.u32 %v704, 4294901760
    %706 = vmatprep.subr.mxu0 %v705
    %v707 = vand.u32 %v70, 4294901760
    %v708 = vsub.f32 %v70, %v707
    %v709 = vand.u32 %v708, 4294901760
    %710 = vmatpush1.msra.mxu0 %v709
    %v711 = vand.u32 %v73, 4294901760
    %v712 = vsub.f32 %v73, %v711
    %v713 = vand.u32 %v712, 4294901760
    %714 = vmatprep.subr.mxu0 %v713
    %v715 = vand.u32 %v72, 4294901760
    %v716 = vsub.f32 %v72, %v715
    %v717 = vand.u32 %v716, 4294901760
    %718 = vmatpush1.msra.mxu0 %v717
    %v719 = vand.u32 %v75, 4294901760
    %v720 = vsub.f32 %v75, %v719
    %v721 = vand.u32 %v720, 4294901760
    %722 = vmatprep.subr.mxu0 %v721
    %v723 = vand.u32 %v74, 4294901760
    %v724 = vsub.f32 %v74, %v723
    %v725 = vand.u32 %v724, 4294901760
    %726 = vmatpush1.msra.mxu0 %v725
    %v727 = vand.u32 %v77, 4294901760
    %v728 = vsub.f32 %v77, %v727
    %v729 = vand.u32 %v728, 4294901760
    %730 = vmatprep.subr.mxu0 %v729
    %v731 = vand.u32 %v76, 4294901760
    %v732 = vsub.f32 %v76, %v731
    %v733 = vand.u32 %v732, 4294901760
    %734 = vmatpush1.msra.mxu0 %v733
    %v735 = vand.u32 %v79, 4294901760
    %v736 = vsub.f32 %v79, %v735
    %v737 = vand.u32 %v736, 4294901760
    %738 = vmatprep.subr.mxu0 %v737
    %v739 = vand.u32 %v78, 4294901760
    %v740 = vsub.f32 %v78, %v739
    %v741 = vand.u32 %v740, 4294901760
    %742 = vmatpush1.msra.mxu0 %v741
    %v743 = vand.u32 %v81, 4294901760
    %v744 = vsub.f32 %v81, %v743
    %v745 = vand.u32 %v744, 4294901760
    %746 = vmatprep.subr.mxu0 %v745
    %v747 = vand.u32 %v80, 4294901760
    %v748 = vsub.f32 %v80, %v747
    %v749 = vand.u32 %v748, 4294901760
    %750 = vmatpush1.msra.mxu0 %v749
    %v751 = vand.u32 %v83, 4294901760
    %v752 = vsub.f32 %v83, %v751
    %v753 = vand.u32 %v752, 4294901760
    %754 = vmatprep.subr.mxu0 %v753
    %v755 = vand.u32 %v82, 4294901760
    %v756 = vsub.f32 %v82, %v755
    %v757 = vand.u32 %v756, 4294901760
    %758 = vmatpush1.msra.mxu0 %v757
    %v759 = vand.u32 %v85, 4294901760
    %v760 = vsub.f32 %v85, %v759
    %v761 = vand.u32 %v760, 4294901760
    %762 = vmatprep.subr.mxu0 %v761
    %v763 = vand.u32 %v84, 4294901760
    %v764 = vsub.f32 %v84, %v763
    %v765 = vand.u32 %v764, 4294901760
    %766 = vmatpush1.msra.mxu0 %v765
    %v767 = vand.u32 %v87, 4294901760
    %v768 = vsub.f32 %v87, %v767
    %v769 = vand.u32 %v768, 4294901760
    %770 = vmatprep.subr.mxu0 %v769
    %v771 = vand.u32 %v86, 4294901760
    %v772 = vsub.f32 %v86, %v771
    %v773 = vand.u32 %v772, 4294901760
    %774 = vmatpush1.msra.mxu0 %v773
    %v775 = vand.u32 %v89, 4294901760
    %v776 = vsub.f32 %v89, %v775
    %v777 = vand.u32 %v776, 4294901760
    %778 = vmatprep.subr.mxu0 %v777
    %v779 = vand.u32 %v88, 4294901760
    %v780 = vsub.f32 %v88, %v779
    %v781 = vand.u32 %v780, 4294901760
    %782 = vmatpush1.msra.mxu0 %v781
    %v783 = vand.u32 %v91, 4294901760
    %v784 = vsub.f32 %v91, %v783
    %v785 = vand.u32 %v784, 4294901760
    %786 = vmatprep.subr.mxu0 %v785
    %v787 = vand.u32 %v90, 4294901760
    %v788 = vsub.f32 %v90, %v787
    %v789 = vand.u32 %v788, 4294901760
    %790 = vmatpush1.msra.mxu0 %v789
    %v791 = vand.u32 %v93, 4294901760
    %v792 = vsub.f32 %v93, %v791
    %v793 = vand.u32 %v792, 4294901760
    %794 = vmatprep.subr.mxu0 %v793
    %v795 = vand.u32 %v92, 4294901760
    %v796 = vsub.f32 %v92, %v795
    %v797 = vand.u32 %v796, 4294901760
    %798 = vmatpush1.msra.mxu0 %v797
    %v799 = vand.u32 %v95, 4294901760
    %v800 = vsub.f32 %v95, %v799
    %v801 = vand.u32 %v800, 4294901760
    %802 = vmatprep.subr.mxu0 %v801
    %v803 = vand.u32 %v94, 4294901760
    %v804 = vsub.f32 %v94, %v803
    %v805 = vand.u32 %v804, 4294901760
    %806 = vmatpush1.msra.mxu0 %v805
    %v807 = vand.u32 %v97, 4294901760
    %v808 = vsub.f32 %v97, %v807
    %v809 = vand.u32 %v808, 4294901760
    %810 = vmatprep.subr.mxu0 %v809
    %v811 = vand.u32 %v96, 4294901760
    %v812 = vsub.f32 %v96, %v811
    %v813 = vand.u32 %v812, 4294901760
    %814 = vmatpush1.msra.mxu0 %v813
    %v815 = vand.u32 %v99, 4294901760
    %v816 = vsub.f32 %v99, %v815
    %v817 = vand.u32 %v816, 4294901760
    %818 = vmatprep.subr.mxu0 %v817
    %v819 = vand.u32 %v98, 4294901760
    %v820 = vsub.f32 %v98, %v819
    %v821 = vand.u32 %v820, 4294901760
    %822 = vmatpush1.msra.mxu0 %v821
    %823 = vmatprep.subr.mxu0 0.0
    %824 = vmatpush1.msra.mxu0 0.0
    %825 = vmatprep.subr.mxu0 0.0
    %826 = vmatpush1.msra.mxu0 0.0
    %827 = vmatprep.subr.mxu0 0.0
    %828 = vmatpush1.msra.mxu0 0.0
    %829 = vmatprep.subr.mxu0 0.0
    %830 = vmatpush1.msra.mxu0 0.0
    %831 = vmatprep.subr.mxu0 0.0
    %832 = vmatpush1.msra.mxu0 0.0
    %833 = vmatprep.subr.mxu0 0.0
    %834 = vmatpush1.msra.mxu0 0.0
    %835 = vmatprep.subr.mxu0 0.0
    %836 = vmatpush1.msra.mxu0 0.0
    %837 = vmatprep.subr.mxu0 0.0
    %838 = vmatpush1.msra.mxu0 0.0
    %839 = vmatprep.subr.mxu0 0.0
    %840 = vmatpush1.msra.mxu0 0.0
    %841 = vmatprep.subr.mxu0 0.0
    %842 = vmatpush1.msra.mxu0 0.0
    %843 = vmatprep.subr.mxu0 0.0
    %844 = vmatpush1.msra.mxu0 0.0
    %845 = vmatprep.subr.mxu0 0.0
    %846 = vmatpush1.msra.mxu0 0.0
    %847 = vmatprep.subr.mxu0 0.0
    %848 = vmatpush1.msra.mxu0 0.0
    %849 = vmatprep.subr.mxu0 0.0
    %850 = vmatpush1.msra.mxu0 0.0
    %851 = vmatprep.subr.mxu0 0.0
    %852 = vmatpush1.msra.mxu0 0.0
    %853 = vmatprep.subr.mxu0 0.0
    %854 = vmatpush1.msra.mxu0 0.0
    %855 = vmatprep.mubr.f32.mxu0 0.0
    %v856 = vand.u32 %v67, 4294901760
    %857 = vmatmul.mubr.f32.gmra.mrb[0].mxu0 %v856
    %v858 = vpop.f32.mrb[0].mxu0
    %v859 = vadd.f32 %v691, %v858
    %v860 = vpop.f32.mrb[0].mxu0
    %v861 = vadd.f32 %v693, %v860
    %862 = vdwg.mxu0
    %v863 = vand.u32 %v69, 4294901760
    %864 = vmatprep.subr.mxu0 %v863
    %v865 = vand.u32 %v68, 4294901760
    %866 = vmatpush1.msra.mxu0 %v865
    %v867 = vand.u32 %v71, 4294901760
    %868 = vmatprep.subr.mxu0 %v867
    %v869 = vand.u32 %v70, 4294901760
    %870 = vmatpush1.msra.mxu0 %v869
    %v871 = vand.u32 %v73, 4294901760
    %872 = vmatprep.subr.mxu0 %v871
    %v873 = vand.u32 %v72, 4294901760
    %874 = vmatpush1.msra.mxu0 %v873
    %v875 = vand.u32 %v75, 4294901760
    %876 = vmatprep.subr.mxu0 %v875
    %v877 = vand.u32 %v74, 4294901760
    %878 = vmatpush1.msra.mxu0 %v877
    %v879 = vand.u32 %v77, 4294901760
    %880 = vmatprep.subr.mxu0 %v879
    %v881 = vand.u32 %v76, 4294901760
    %882 = vmatpush1.msra.mxu0 %v881
    %v883 = vand.u32 %v79, 4294901760
    %884 = vmatprep.subr.mxu0 %v883
    %v885 = vand.u32 %v78, 4294901760
    %886 = vmatpush1.msra.mxu0 %v885
    %v887 = vand.u32 %v81, 4294901760
    %888 = vmatprep.subr.mxu0 %v887
    %v889 = vand.u32 %v80, 4294901760
    %890 = vmatpush1.msra.mxu0 %v889
    %v891 = vand.u32 %v83, 4294901760
    %892 = vmatprep.subr.mxu0 %v891
    %v893 = vand.u32 %v82, 4294901760
    %894 = vmatpush1.msra.mxu0 %v893
    %v895 = vand.u32 %v85, 4294901760
    %896 = vmatprep.subr.mxu0 %v895
    %v897 = vand.u32 %v84, 4294901760
    %898 = vmatpush1.msra.mxu0 %v897
    %v899 = vand.u32 %v87, 4294901760
    %900 = vmatprep.subr.mxu0 %v899
    %v901 = vand.u32 %v86, 4294901760
    %902 = vmatpush1.msra.mxu0 %v901
    %v903 = vand.u32 %v89, 4294901760
    %904 = vmatprep.subr.mxu0 %v903
    %v905 = vand.u32 %v88, 4294901760
    %906 = vmatpush1.msra.mxu0 %v905
    %v907 = vand.u32 %v91, 4294901760
    %908 = vmatprep.subr.mxu0 %v907
    %v909 = vand.u32 %v90, 4294901760
    %910 = vmatpush1.msra.mxu0 %v909
    %v911 = vand.u32 %v93, 4294901760
    %912 = vmatprep.subr.mxu0 %v911
    %v913 = vand.u32 %v92, 4294901760
    %914 = vmatpush1.msra.mxu0 %v913
    %v915 = vand.u32 %v95, 4294901760
    %916 = vmatprep.subr.mxu0 %v915
    %v917 = vand.u32 %v94, 4294901760
    %918 = vmatpush1.msra.mxu0 %v917
    %v919 = vand.u32 %v97, 4294901760
    %920 = vmatprep.subr.mxu0 %v919
    %v921 = vand.u32 %v96, 4294901760
    %922 = vmatpush1.msra.mxu0 %v921
    %v923 = vand.u32 %v99, 4294901760
    %924 = vmatprep.subr.mxu0 %v923
    %v925 = vand.u32 %v98, 4294901760
    %926 = vmatpush1.msra.mxu0 %v925
    %927 = vmatprep.subr.mxu0 0.0
    %928 = vmatpush1.msra.mxu0 0.0
    %929 = vmatprep.subr.mxu0 0.0
    %930 = vmatpush1.msra.mxu0 0.0
    %931 = vmatprep.subr.mxu0 0.0
    %932 = vmatpush1.msra.mxu0 0.0
    %933 = vmatprep.subr.mxu0 0.0
    %934 = vmatpush1.msra.mxu0 0.0
    %935 = vmatprep.subr.mxu0 0.0
    %936 = vmatpush1.msra.mxu0 0.0
    %937 = vmatprep.subr.mxu0 0.0
    %938 = vmatpush1.msra.mxu0 0.0
    %939 = vmatprep.subr.mxu0 0.0
    %940 = vmatpush1.msra.mxu0 0.0
    %941 = vmatprep.subr.mxu0 0.0
    %942 = vmatpush1.msra.mxu0 0.0
    %943 = vmatprep.subr.mxu0 0.0
    %944 = vmatpush1.msra.mxu0 0.0
    %945 = vmatprep.subr.mxu0 0.0
    %946 = vmatpush1.msra.mxu0 0.0
    %947 = vmatprep.subr.mxu0 0.0
    %948 = vmatpush1.msra.mxu0 0.0
    %949 = vmatprep.subr.mxu0 0.0
    %950 = vmatpush1.msra.mxu0 0.0
    %951 = vmatprep.subr.mxu0 0.0
    %952 = vmatpush1.msra.mxu0 0.0
    %953 = vmatprep.subr.mxu0 0.0
    %954 = vmatpush1.msra.mxu0 0.0
    %955 = vmatprep.subr.mxu0 0.0
    %956 = vmatpush1.msra.mxu0 0.0
    %957 = vmatprep.subr.mxu0 0.0
    %958 = vmatpush1.msra.mxu0 0.0
    %959 = vmatprep.mubr.f32.mxu0 0.0
    %v960 = vand.u32 %v67, 4294901760
    %961 = vmatmul.mubr.f32.gmra.mrb[0].mxu0 %v960
    %v962 = vpop.f32.mrb[0].mxu0
    %v963 = vadd.f32 %v859, %v962
    %v964 = vpop.f32.mrb[0].mxu0
    %v965 = vadd.f32 %v861, %v964
    %966 = vdwg.mxu0
    %v967 = vtanh.pop %v963
    %v968 = vtanh.pop %v965
    %v969 = vld [vmem:[#allocation4] sm:$0xff]
    %v970 = vld [vmem:[#allocation4 + $0x8] sm:$0xff]
    %v971 = vld [vmem:[#allocation4 + $0x10] sm:$0xff]
    %v972 = vld [vmem:[#allocation4 + $0x18] sm:$0xff]
    %v973 = vld [vmem:[#allocation4 + $0x20] sm:$0xff]
    %v974 = vld [vmem:[#allocation4 + $0x28] sm:$0xff]
    %v975 = vld [vmem:[#allocation4 + $0x30] sm:$0xff]
    %v976 = vld [vmem:[#allocation4 + $0x38] sm:$0xff]
    %v977 = vld [vmem:[#allocation4 + $0x40] sm:$0xff]
    %v978 = vld [vmem:[#allocation4 + $0x48] sm:$0xff]
    %v979 = vld [vmem:[#allocation4 + $0x50] sm:$0xff]
    %v980 = vld [vmem:[#allocation4 + $0x58] sm:$0xff]
    %v981 = vld [vmem:[#allocation4 + $0x60] sm:$0xff]
    %v982 = vld [vmem:[#allocation4 + $0x68] sm:$0xff]
    %v983 = vld [vmem:[#allocation4 + $0x70] sm:$0xff]
    %v984 = vld [vmem:[#allocation4 + $0x78] sm:$0xff]
    %v985 = vld [vmem:[#allocation4 + $0x80] sm:$0xff]
    %v986 = vld [vmem:[#allocation4 + $0x88] sm:$0xff]
    %v987 = vld [vmem:[#allocation4 + $0x90] sm:$0xff]
    %v988 = vld [vmem:[#allocation4 + $0x98] sm:$0xff]
    %v989 = vld [vmem:[#allocation4 + $0xa0] sm:$0xff]
    %v990 = vld [vmem:[#allocation4 + $0xa8] sm:$0xff]
    %v991 = vld [vmem:[#allocation4 + $0xb0] sm:$0xff]
    %v992 = vld [vmem:[#allocation4 + $0xb8] sm:$0xff]
    %v993 = vld [vmem:[#allocation4 + $0xc0] sm:$0xff]
    %v994 = vld [vmem:[#allocation4 + $0xc8] sm:$0xff]
    %v995 = vld [vmem:[#allocation4 + $0xd0] sm:$0xff]
    %v996 = vld [vmem:[#allocation4 + $0xd8] sm:$0xff]
    %v997 = vld [vmem:[#allocation4 + $0xe0] sm:$0xff]
    %v998 = vld [vmem:[#allocation4 + $0xe8] sm:$0xff]
    %v999 = vld [vmem:[#allocation4 + $0xf0] sm:$0xff]
    %v1000 = vld [vmem:[#allocation4 + $0xf8] sm:$0xff]
    %v1001 = vld [vmem:[#allocation4 + $0x100] sm:$0xff]
    %v1002 = vld [vmem:[#allocation4 + $0x108] sm:$0xff]
    %v1003 = vld [vmem:[#allocation4 + $0x110] sm:$0xff]
    %v1004 = vld [vmem:[#allocation4 + $0x118] sm:$0xff]
    %v1005 = vld [vmem:[#allocation4 + $0x120] sm:$0xff]
    %v1006 = vld [vmem:[#allocation4 + $0x128] sm:$0xff]
    %v1007 = vld [vmem:[#allocation4 + $0x130] sm:$0xff]
    %v1008 = vld [vmem:[#allocation4 + $0x138] sm:$0xff]
    %v1009 = vld [vmem:[#allocation4 + $0x140] sm:$0xff]
    %v1010 = vld [vmem:[#allocation4 + $0x148] sm:$0xff]
    %v1011 = vld [vmem:[#allocation4 + $0x150] sm:$0xff]
    %v1012 = vld [vmem:[#allocation4 + $0x158] sm:$0xff]
    %v1013 = vld [vmem:[#allocation4 + $0x160] sm:$0xff]
    %v1014 = vld [vmem:[#allocation4 + $0x168] sm:$0xff]
    %v1015 = vld [vmem:[#allocation4 + $0x170] sm:$0xff]
    %v1016 = vld [vmem:[#allocation4 + $0x178] sm:$0xff]
    %v1017 = vld [vmem:[#allocation4 + $0x180] sm:$0xff]
    %v1018 = vld [vmem:[#allocation4 + $0x188] sm:$0xff]
    %v1019 = vld [vmem:[#allocation4 + $0x190] sm:$0xff]
    %v1020 = vld [vmem:[#allocation4 + $0x198] sm:$0xff]
    %v1021 = vld [vmem:[#allocation4 + $0x1a0] sm:$0xff]
    %v1022 = vld [vmem:[#allocation4 + $0x1a8] sm:$0xff]
    %v1023 = vld [vmem:[#allocation4 + $0x1b0] sm:$0xff]
    %v1024 = vld [vmem:[#allocation4 + $0x1b8] sm:$0xff]
    %v1025 = vld [vmem:[#allocation4 + $0x1c0] sm:$0xff]
    %v1026 = vld [vmem:[#allocation4 + $0x1c8] sm:$0xff]
    %v1027 = vld [vmem:[#allocation4 + $0x1d0] sm:$0xff]
    %v1028 = vld [vmem:[#allocation4 + $0x1d8] sm:$0xff]
    %v1029 = vld [vmem:[#allocation4 + $0x1e0] sm:$0xff]
    %v1030 = vld [vmem:[#allocation4 + $0x1e8] sm:$0xff]
    %v1031 = vld [vmem:[#allocation4 + $0x1f0] sm:$0xff]
    %v1032 = vld [vmem:[#allocation4 + $0x1f8] sm:$0xff]
    %v1033 = vld [vmem:[%s4] sm:$0x3]
    %v1035 = vlaneseq
    %v1036 = vshrl.u32 %v1035, 7
    %v1037 = vsub.s32 0, %v1036
    %v1038 = vrot.slane %v1033, %v1037
    %v1039 = vlaneseq
    %v1040 = vshrl.u32 %v1039, 7
    %v1041 = vsub.s32 1, %v1040
    %v1042 = vrot.slane %v1033, %v1041
    %v1045 = vand.u32 %v970, 4294901760
    %1046 = vmatprep.subr.mxu0 %v1045
    %v1047 = vand.u32 %v969, 4294901760
    %1048 = vmatpush1.msra.mxu0 %v1047
    %v1049 = vand.u32 %v972, 4294901760
    %1050 = vmatprep.subr.mxu0 %v1049
    %v1051 = vand.u32 %v971, 4294901760
    %1052 = vmatpush1.msra.mxu0 %v1051
    %v1053 = vand.u32 %v974, 4294901760
    %1054 = vmatprep.subr.mxu0 %v1053
    %v1055 = vand.u32 %v973, 4294901760
    %1056 = vmatpush1.msra.mxu0 %v1055
    %v1057 = vand.u32 %v976, 4294901760
    %1058 = vmatprep.subr.mxu0 %v1057
    %v1059 = vand.u32 %v975, 4294901760
    %1060 = vmatpush1.msra.mxu0 %v1059
    %v1061 = vand.u32 %v978, 4294901760
    %1062 = vmatprep.subr.mxu0 %v1061
    %v1063 = vand.u32 %v977, 4294901760
    %1064 = vmatpush1.msra.mxu0 %v1063
    %v1065 = vand.u32 %v980, 4294901760
    %1066 = vmatprep.subr.mxu0 %v1065
    %v1067 = vand.u32 %v979, 4294901760
    %1068 = vmatpush1.msra.mxu0 %v1067
    %v1069 = vand.u32 %v982, 4294901760
    %1070 = vmatprep.subr.mxu0 %v1069
    %v1071 = vand.u32 %v981, 4294901760
    %1072 = vmatpush1.msra.mxu0 %v1071
    %v1073 = vand.u32 %v984, 4294901760
    %1074 = vmatprep.subr.mxu0 %v1073
    %v1075 = vand.u32 %v983, 4294901760
    %1076 = vmatpush1.msra.mxu0 %v1075
    %v1077 = vand.u32 %v986, 4294901760
    %1078 = vmatprep.subr.mxu0 %v1077
    %v1079 = vand.u32 %v985, 4294901760
    %1080 = vmatpush1.msra.mxu0 %v1079
    %v1081 = vand.u32 %v988, 4294901760
    %1082 = vmatprep.subr.mxu0 %v1081
    %v1083 = vand.u32 %v987, 4294901760
    %1084 = vmatpush1.msra.mxu0 %v1083
    %v1085 = vand.u32 %v990, 4294901760
    %1086 = vmatprep.subr.mxu0 %v1085
    %v1087 = vand.u32 %v989, 4294901760
    %1088 = vmatpush1.msra.mxu0 %v1087
    %v1089 = vand.u32 %v992, 4294901760
    %1090 = vmatprep.subr.mxu0 %v1089
    %v1091 = vand.u32 %v991, 4294901760
    %1092 = vmatpush1.msra.mxu0 %v1091
    %v1093 = vand.u32 %v994, 4294901760
    %1094 = vmatprep.subr.mxu0 %v1093
    %v1095 = vand.u32 %v993, 4294901760
    %1096 = vmatpush1.msra.mxu0 %v1095
    %v1097 = vand.u32 %v996, 4294901760
    %1098 = vmatprep.subr.mxu0 %v1097
    %v1099 = vand.u32 %v995, 4294901760
    %1100 = vmatpush1.msra.mxu0 %v1099
    %v1101 = vand.u32 %v998, 4294901760
    %1102 = vmatprep.subr.mxu0 %v1101
    %v1103 = vand.u32 %v997, 4294901760
    %1104 = vmatpush1.msra.mxu0 %v1103
    %v1105 = vand.u32 %v1000, 4294901760
    %1106 = vmatprep.subr.mxu0 %v1105
    %v1107 = vand.u32 %v999, 4294901760
    %1108 = vmatpush1.msra.mxu0 %v1107
    %v1109 = vand.u32 %v1002, 4294901760
    %1110 = vmatprep.subr.mxu0 %v1109
    %v1111 = vand.u32 %v1001, 4294901760
    %1112 = vmatpush1.msra.mxu0 %v1111
    %v1113 = vand.u32 %v1004, 4294901760
    %1114 = vmatprep.subr.mxu0 %v1113
    %v1115 = vand.u32 %v1003, 4294901760
    %1116 = vmatpush1.msra.mxu0 %v1115
    %v1117 = vand.u32 %v1006, 4294901760
    %1118 = vmatprep.subr.mxu0 %v1117
    %v1119 = vand.u32 %v1005, 4294901760
    %1120 = vmatpush1.msra.mxu0 %v1119
    %v1121 = vand.u32 %v1008, 4294901760
    %1122 = vmatprep.subr.mxu0 %v1121
    %v1123 = vand.u32 %v1007, 4294901760
    %1124 = vmatpush1.msra.mxu0 %v1123
    %v1125 = vand.u32 %v1010, 4294901760
    %1126 = vmatprep.subr.mxu0 %v1125
    %v1127 = vand.u32 %v1009, 4294901760
    %1128 = vmatpush1.msra.mxu0 %v1127
    %v1129 = vand.u32 %v1012, 4294901760
    %1130 = vmatprep.subr.mxu0 %v1129
    %v1131 = vand.u32 %v1011, 4294901760
    %1132 = vmatpush1.msra.mxu0 %v1131
    %v1133 = vand.u32 %v1014, 4294901760
    %1134 = vmatprep.subr.mxu0 %v1133
    %v1135 = vand.u32 %v1013, 4294901760
    %1136 = vmatpush1.msra.mxu0 %v1135
    %v1137 = vand.u32 %v1016, 4294901760
    %1138 = vmatprep.subr.mxu0 %v1137
    %v1139 = vand.u32 %v1015, 4294901760
    %1140 = vmatpush1.msra.mxu0 %v1139
    %v1141 = vand.u32 %v1018, 4294901760
    %1142 = vmatprep.subr.mxu0 %v1141
    %v1143 = vand.u32 %v1017, 4294901760
    %1144 = vmatpush1.msra.mxu0 %v1143
    %v1145 = vand.u32 %v1020, 4294901760
    %1146 = vmatprep.subr.mxu0 %v1145
    %v1147 = vand.u32 %v1019, 4294901760
    %1148 = vmatpush1.msra.mxu0 %v1147
    %v1149 = vand.u32 %v1022, 4294901760
    %1150 = vmatprep.subr.mxu0 %v1149
    %v1151 = vand.u32 %v1021, 4294901760
    %1152 = vmatpush1.msra.mxu0 %v1151
    %v1153 = vand.u32 %v1024, 4294901760
    %1154 = vmatprep.subr.mxu0 %v1153
    %v1155 = vand.u32 %v1023, 4294901760
    %1156 = vmatpush1.msra.mxu0 %v1155
    %v1157 = vand.u32 %v1026, 4294901760
    %1158 = vmatprep.subr.mxu0 %v1157
    %v1159 = vand.u32 %v1025, 4294901760
    %1160 = vmatpush1.msra.mxu0 %v1159
    %v1161 = vand.u32 %v1028, 4294901760
    %1162 = vmatprep.subr.mxu0 %v1161
    %v1163 = vand.u32 %v1027, 4294901760
    %1164 = vmatpush1.msra.mxu0 %v1163
    %v1165 = vand.u32 %v1030, 4294901760
    %1166 = vmatprep.subr.mxu0 %v1165
    %v1167 = vand.u32 %v1029, 4294901760
    %1168 = vmatpush1.msra.mxu0 %v1167
    %v1169 = vand.u32 %v1032, 4294901760
    %1170 = vmatprep.subr.mxu0 %v1169
    %v1171 = vand.u32 %v1031, 4294901760
    %1172 = vmatpush1.msra.mxu0 %v1171
    %v1173 = vand.u32 %v968, 4294901760
    %v1174 = vsub.f32 %v968, %v1173
    %v1175 = vand.u32 %v1174, 4294901760
    %v1176 = vsub.f32 %v1174, %v1175
    %v1177 = vand.u32 %v1176, 4294901760
    %1178 = vmatprep.mubr.f32.mxu0 %v1177
    %v1179 = vand.u32 %v967, 4294901760
    %v1180 = vsub.f32 %v967, %v1179
    %v1181 = vand.u32 %v1180, 4294901760
    %v1182 = vsub.f32 %v1180, %v1181
    %v1183 = vand.u32 %v1182, 4294901760
    %1184 = vmatmul.mubr.f32.gmra.mrb[0].mxu0 %v1183
    %v1185 = vpop.f32.mrb[0].mxu0
    %v1186 = vadd.f32 %v1038, %v1185
    %v1187 = vpop.f32.mrb[0].mxu0
    %v1188 = vadd.f32 %v1042, %v1187
    %1189 = vdwg.mxu0
    %v1190 = vand.u32 %v970, 4294901760
    %v1191 = vsub.f32 %v970, %v1190
    %v1192 = vand.u32 %v1191, 4294901760
    %v1193 = vsub.f32 %v1191, %v1192
    %v1194 = vand.u32 %v1193, 4294901760
    %1195 = vmatprep.subr.mxu0 %v1194
    %v1196 = vand.u32 %v969, 4294901760
    %v1197 = vsub.f32 %v969, %v1196
    %v1198 = vand.u32 %v1197, 4294901760
    %v1199 = vsub.f32 %v1197, %v1198
    %v1200 = vand.u32 %v1199, 4294901760
    %1201 = vmatpush1.msra.mxu0 %v1200
    %v1202 = vand.u32 %v972, 4294901760
    %v1203 = vsub.f32 %v972, %v1202
    %v1204 = vand.u32 %v1203, 4294901760
    %v1205 = vsub.f32 %v1203, %v1204
    %v1206 = vand.u32 %v1205, 4294901760
    %1207 = vmatprep.subr.mxu0 %v1206
    %v1208 = vand.u32 %v971, 4294901760
    %v1209 = vsub.f32 %v971, %v1208
    %v1210 = vand.u32 %v1209, 4294901760
    %v1211 = vsub.f32 %v1209, %v1210
    %v1212 = vand.u32 %v1211, 4294901760
    %1213 = vmatpush1.msra.mxu0 %v1212
    %v1214 = vand.u32 %v974, 4294901760
    %v1215 = vsub.f32 %v974, %v1214
    %v1216 = vand.u32 %v1215, 4294901760
    %v1217 = vsub.f32 %v1215, %v1216
    %v1218 = vand.u32 %v1217, 4294901760
    %1219 = vmatprep.subr.mxu0 %v1218
    %v1220 = vand.u32 %v973, 4294901760
    %v1221 = vsub.f32 %v973, %v1220
    %v1222 = vand.u32 %v1221, 4294901760
    %v1223 = vsub.f32 %v1221, %v1222
    %v1224 = vand.u32 %v1223, 4294901760
    %1225 = vmatpush1.msra.mxu0 %v1224
    %v1226 = vand.u32 %v976, 4294901760
    %v1227 = vsub.f32 %v976, %v1226
    %v1228 = vand.u32 %v1227, 4294901760
    %v1229 = vsub.f32 %v1227, %v1228
    %v1230 = vand.u32 %v1229, 4294901760
    %1231 = vmatprep.subr.mxu0 %v1230
    %v1232 = vand.u32 %v975, 4294901760
    %v1233 = vsub.f32 %v975, %v1232
    %v1234 = vand.u32 %v1233, 4294901760
    %v1235 = vsub.f32 %v1233, %v1234
    %v1236 = vand.u32 %v1235, 4294901760
    %1237 = vmatpush1.msra.mxu0 %v1236
    %v1238 = vand.u32 %v978, 4294901760
    %v1239 = vsub.f32 %v978, %v1238
    %v1240 = vand.u32 %v1239, 4294901760
    %v1241 = vsub.f32 %v1239, %v1240
    %v1242 = vand.u32 %v1241, 4294901760
    %1243 = vmatprep.subr.mxu0 %v1242
    %v1244 = vand.u32 %v977, 4294901760
    %v1245 = vsub.f32 %v977, %v1244
    %v1246 = vand.u32 %v1245, 4294901760
    %v1247 = vsub.f32 %v1245, %v1246
    %v1248 = vand.u32 %v1247, 4294901760
    %1249 = vmatpush1.msra.mxu0 %v1248
    %v1250 = vand.u32 %v980, 4294901760
    %v1251 = vsub.f32 %v980, %v1250
    %v1252 = vand.u32 %v1251, 4294901760
    %v1253 = vsub.f32 %v1251, %v1252
    %v1254 = vand.u32 %v1253, 4294901760
    %1255 = vmatprep.subr.mxu0 %v1254
    %v1256 = vand.u32 %v979, 4294901760
    %v1257 = vsub.f32 %v979, %v1256
    %v1258 = vand.u32 %v1257, 4294901760
    %v1259 = vsub.f32 %v1257, %v1258
    %v1260 = vand.u32 %v1259, 4294901760
    %1261 = vmatpush1.msra.mxu0 %v1260
    %v1262 = vand.u32 %v982, 4294901760
    %v1263 = vsub.f32 %v982, %v1262
    %v1264 = vand.u32 %v1263, 4294901760
    %v1265 = vsub.f32 %v1263, %v1264
    %v1266 = vand.u32 %v1265, 4294901760
    %1267 = vmatprep.subr.mxu0 %v1266
    %v1268 = vand.u32 %v981, 4294901760
    %v1269 = vsub.f32 %v981, %v1268
    %v1270 = vand.u32 %v1269, 4294901760
    %v1271 = vsub.f32 %v1269, %v1270
    %v1272 = vand.u32 %v1271, 4294901760
    %1273 = vmatpush1.msra.mxu0 %v1272
    %v1274 = vand.u32 %v984, 4294901760
    %v1275 = vsub.f32 %v984, %v1274
    %v1276 = vand.u32 %v1275, 4294901760
    %v1277 = vsub.f32 %v1275, %v1276
    %v1278 = vand.u32 %v1277, 4294901760
    %1279 = vmatprep.subr.mxu0 %v1278
    %v1280 = vand.u32 %v983, 4294901760
    %v1281 = vsub.f32 %v983, %v1280
    %v1282 = vand.u32 %v1281, 4294901760
    %v1283 = vsub.f32 %v1281, %v1282
    %v1284 = vand.u32 %v1283, 4294901760
    %1285 = vmatpush1.msra.mxu0 %v1284
    %v1286 = vand.u32 %v986, 4294901760
    %v1287 = vsub.f32 %v986, %v1286
    %v1288 = vand.u32 %v1287, 4294901760
    %v1289 = vsub.f32 %v1287, %v1288
    %v1290 = vand.u32 %v1289, 4294901760
    %1291 = vmatprep.subr.mxu0 %v1290
    %v1292 = vand.u32 %v985, 4294901760
    %v1293 = vsub.f32 %v985, %v1292
    %v1294 = vand.u32 %v1293, 4294901760
    %v1295 = vsub.f32 %v1293, %v1294
    %v1296 = vand.u32 %v1295, 4294901760
    %1297 = vmatpush1.msra.mxu0 %v1296
    %v1298 = vand.u32 %v988, 4294901760
    %v1299 = vsub.f32 %v988, %v1298
    %v1300 = vand.u32 %v1299, 4294901760
    %v1301 = vsub.f32 %v1299, %v1300
    %v1302 = vand.u32 %v1301, 4294901760
    %1303 = vmatprep.subr.mxu0 %v1302
    %v1304 = vand.u32 %v987, 4294901760
    %v1305 = vsub.f32 %v987, %v1304
    %v1306 = vand.u32 %v1305, 4294901760
    %v1307 = vsub.f32 %v1305, %v1306
    %v1308 = vand.u32 %v1307, 4294901760
    %1309 = vmatpush1.msra.mxu0 %v1308
    %v1310 = vand.u32 %v990, 4294901760
    %v1311 = vsub.f32 %v990, %v1310
    %v1312 = vand.u32 %v1311, 4294901760
    %v1313 = vsub.f32 %v1311, %v1312
    %v1314 = vand.u32 %v1313, 4294901760
    %1315 = vmatprep.subr.mxu0 %v1314
    %v1316 = vand.u32 %v989, 4294901760
    %v1317 = vsub.f32 %v989, %v1316
    %v1318 = vand.u32 %v1317, 4294901760
    %v1319 = vsub.f32 %v1317, %v1318
    %v1320 = vand.u32 %v1319, 4294901760
    %1321 = vmatpush1.msra.mxu0 %v1320
    %v1322 = vand.u32 %v992, 4294901760
    %v1323 = vsub.f32 %v992, %v1322
    %v1324 = vand.u32 %v1323, 4294901760
    %v1325 = vsub.f32 %v1323, %v1324
    %v1326 = vand.u32 %v1325, 4294901760
    %1327 = vmatprep.subr.mxu0 %v1326
    %v1328 = vand.u32 %v991, 4294901760
    %v1329 = vsub.f32 %v991, %v1328
    %v1330 = vand.u32 %v1329, 4294901760
    %v1331 = vsub.f32 %v1329, %v1330
    %v1332 = vand.u32 %v1331, 4294901760
    %1333 = vmatpush1.msra.mxu0 %v1332
    %v1334 = vand.u32 %v994, 4294901760
    %v1335 = vsub.f32 %v994, %v1334
    %v1336 = vand.u32 %v1335, 4294901760
    %v1337 = vsub.f32 %v1335, %v1336
    %v1338 = vand.u32 %v1337, 4294901760
    %1339 = vmatprep.subr.mxu0 %v1338
    %v1340 = vand.u32 %v993, 4294901760
    %v1341 = vsub.f32 %v993, %v1340
    %v1342 = vand.u32 %v1341, 4294901760
    %v1343 = vsub.f32 %v1341, %v1342
    %v1344 = vand.u32 %v1343, 4294901760
    %1345 = vmatpush1.msra.mxu0 %v1344
    %v1346 = vand.u32 %v996, 4294901760
    %v1347 = vsub.f32 %v996, %v1346
    %v1348 = vand.u32 %v1347, 4294901760
    %v1349 = vsub.f32 %v1347, %v1348
    %v1350 = vand.u32 %v1349, 4294901760
    %1351 = vmatprep.subr.mxu0 %v1350
    %v1352 = vand.u32 %v995, 4294901760
    %v1353 = vsub.f32 %v995, %v1352
    %v1354 = vand.u32 %v1353, 4294901760
    %v1355 = vsub.f32 %v1353, %v1354
    %v1356 = vand.u32 %v1355, 4294901760
    %1357 = vmatpush1.msra.mxu0 %v1356
    %v1358 = vand.u32 %v998, 4294901760
    %v1359 = vsub.f32 %v998, %v1358
    %v1360 = vand.u32 %v1359, 4294901760
    %v1361 = vsub.f32 %v1359, %v1360
    %v1362 = vand.u32 %v1361, 4294901760
    %1363 = vmatprep.subr.mxu0 %v1362
    %v1364 = vand.u32 %v997, 4294901760
    %v1365 = vsub.f32 %v997, %v1364
    %v1366 = vand.u32 %v1365, 4294901760
    %v1367 = vsub.f32 %v1365, %v1366
    %v1368 = vand.u32 %v1367, 4294901760
    %1369 = vmatpush1.msra.mxu0 %v1368
    %v1370 = vand.u32 %v1000, 4294901760
    %v1371 = vsub.f32 %v1000, %v1370
    %v1372 = vand.u32 %v1371, 4294901760
    %v1373 = vsub.f32 %v1371, %v1372
    %v1374 = vand.u32 %v1373, 4294901760
    %1375 = vmatprep.subr.mxu0 %v1374
    %v1376 = vand.u32 %v999, 4294901760
    %v1377 = vsub.f32 %v999, %v1376
    %v1378 = vand.u32 %v1377, 4294901760
    %v1379 = vsub.f32 %v1377, %v1378
    %v1380 = vand.u32 %v1379, 4294901760
    %1381 = vmatpush1.msra.mxu0 %v1380
    %v1382 = vand.u32 %v1002, 4294901760
    %v1383 = vsub.f32 %v1002, %v1382
    %v1384 = vand.u32 %v1383, 4294901760
    %v1385 = vsub.f32 %v1383, %v1384
    %v1386 = vand.u32 %v1385, 4294901760
    %1387 = vmatprep.subr.mxu0 %v1386
    %v1388 = vand.u32 %v1001, 4294901760
    %v1389 = vsub.f32 %v1001, %v1388
    %v1390 = vand.u32 %v1389, 4294901760
    %v1391 = vsub.f32 %v1389, %v1390
    %v1392 = vand.u32 %v1391, 4294901760
    %1393 = vmatpush1.msra.mxu0 %v1392
    %v1394 = vand.u32 %v1004, 4294901760
    %v1395 = vsub.f32 %v1004, %v1394
    %v1396 = vand.u32 %v1395, 4294901760
    %v1397 = vsub.f32 %v1395, %v1396
    %v1398 = vand.u32 %v1397, 4294901760
    %1399 = vmatprep.subr.mxu0 %v1398
    %v1400 = vand.u32 %v1003, 4294901760
    %v1401 = vsub.f32 %v1003, %v1400
    %v1402 = vand.u32 %v1401, 4294901760
    %v1403 = vsub.f32 %v1401, %v1402
    %v1404 = vand.u32 %v1403, 4294901760
    %1405 = vmatpush1.msra.mxu0 %v1404
    %v1406 = vand.u32 %v1006, 4294901760
    %v1407 = vsub.f32 %v1006, %v1406
    %v1408 = vand.u32 %v1407, 4294901760
    %v1409 = vsub.f32 %v1407, %v1408
    %v1410 = vand.u32 %v1409, 4294901760
    %1411 = vmatprep.subr.mxu0 %v1410
    %v1412 = vand.u32 %v1005, 4294901760
    %v1413 = vsub.f32 %v1005, %v1412
    %v1414 = vand.u32 %v1413, 4294901760
    %v1415 = vsub.f32 %v1413, %v1414
    %v1416 = vand.u32 %v1415, 4294901760
    %1417 = vmatpush1.msra.mxu0 %v1416
    %v1418 = vand.u32 %v1008, 4294901760
    %v1419 = vsub.f32 %v1008, %v1418
    %v1420 = vand.u32 %v1419, 4294901760
    %v1421 = vsub.f32 %v1419, %v1420
    %v1422 = vand.u32 %v1421, 4294901760
    %1423 = vmatprep.subr.mxu0 %v1422
    %v1424 = vand.u32 %v1007, 4294901760
    %v1425 = vsub.f32 %v1007, %v1424
    %v1426 = vand.u32 %v1425, 4294901760
    %v1427 = vsub.f32 %v1425, %v1426
    %v1428 = vand.u32 %v1427, 4294901760
    %1429 = vmatpush1.msra.mxu0 %v1428
    %v1430 = vand.u32 %v1010, 4294901760
    %v1431 = vsub.f32 %v1010, %v1430
    %v1432 = vand.u32 %v1431, 4294901760
    %v1433 = vsub.f32 %v1431, %v1432
    %v1434 = vand.u32 %v1433, 4294901760
    %1435 = vmatprep.subr.mxu0 %v1434
    %v1436 = vand.u32 %v1009, 4294901760
    %v1437 = vsub.f32 %v1009, %v1436
    %v1438 = vand.u32 %v1437, 4294901760
    %v1439 = vsub.f32 %v1437, %v1438
    %v1440 = vand.u32 %v1439, 4294901760
    %1441 = vmatpush1.msra.mxu0 %v1440
    %v1442 = vand.u32 %v1012, 4294901760
    %v1443 = vsub.f32 %v1012, %v1442
    %v1444 = vand.u32 %v1443, 4294901760
    %v1445 = vsub.f32 %v1443, %v1444
    %v1446 = vand.u32 %v1445, 4294901760
    %1447 = vmatprep.subr.mxu0 %v1446
    %v1448 = vand.u32 %v1011, 4294901760
    %v1449 = vsub.f32 %v1011, %v1448
    %v1450 = vand.u32 %v1449, 4294901760
    %v1451 = vsub.f32 %v1449, %v1450
    %v1452 = vand.u32 %v1451, 4294901760
    %1453 = vmatpush1.msra.mxu0 %v1452
    %v1454 = vand.u32 %v1014, 4294901760
    %v1455 = vsub.f32 %v1014, %v1454
    %v1456 = vand.u32 %v1455, 4294901760
    %v1457 = vsub.f32 %v1455, %v1456
    %v1458 = vand.u32 %v1457, 4294901760
    %1459 = vmatprep.subr.mxu0 %v1458
    %v1460 = vand.u32 %v1013, 4294901760
    %v1461 = vsub.f32 %v1013, %v1460
    %v1462 = vand.u32 %v1461, 4294901760
    %v1463 = vsub.f32 %v1461, %v1462
    %v1464 = vand.u32 %v1463, 4294901760
    %1465 = vmatpush1.msra.mxu0 %v1464
    %v1466 = vand.u32 %v1016, 4294901760
    %v1467 = vsub.f32 %v1016, %v1466
    %v1468 = vand.u32 %v1467, 4294901760
    %v1469 = vsub.f32 %v1467, %v1468
    %v1470 = vand.u32 %v1469, 4294901760
    %1471 = vmatprep.subr.mxu0 %v1470
    %v1472 = vand.u32 %v1015, 4294901760
    %v1473 = vsub.f32 %v1015, %v1472
    %v1474 = vand.u32 %v1473, 4294901760
    %v1475 = vsub.f32 %v1473, %v1474
    %v1476 = vand.u32 %v1475, 4294901760
    %1477 = vmatpush1.msra.mxu0 %v1476
    %v1478 = vand.u32 %v1018, 4294901760
    %v1479 = vsub.f32 %v1018, %v1478
    %v1480 = vand.u32 %v1479, 4294901760
    %v1481 = vsub.f32 %v1479, %v1480
    %v1482 = vand.u32 %v1481, 4294901760
    %1483 = vmatprep.subr.mxu0 %v1482
    %v1484 = vand.u32 %v1017, 4294901760
    %v1485 = vsub.f32 %v1017, %v1484
    %v1486 = vand.u32 %v1485, 4294901760
    %v1487 = vsub.f32 %v1485, %v1486
    %v1488 = vand.u32 %v1487, 4294901760
    %1489 = vmatpush1.msra.mxu0 %v1488
    %v1490 = vand.u32 %v1020, 4294901760
    %v1491 = vsub.f32 %v1020, %v1490
    %v1492 = vand.u32 %v1491, 4294901760
    %v1493 = vsub.f32 %v1491, %v1492
    %v1494 = vand.u32 %v1493, 4294901760
    %1495 = vmatprep.subr.mxu0 %v1494
    %v1496 = vand.u32 %v1019, 4294901760
    %v1497 = vsub.f32 %v1019, %v1496
    %v1498 = vand.u32 %v1497, 4294901760
    %v1499 = vsub.f32 %v1497, %v1498
    %v1500 = vand.u32 %v1499, 4294901760
    %1501 = vmatpush1.msra.mxu0 %v1500
    %v1502 = vand.u32 %v1022, 4294901760
    %v1503 = vsub.f32 %v1022, %v1502
    %v1504 = vand.u32 %v1503, 4294901760
    %v1505 = vsub.f32 %v1503, %v1504
    %v1506 = vand.u32 %v1505, 4294901760
    %1507 = vmatprep.subr.mxu0 %v1506
    %v1508 = vand.u32 %v1021, 4294901760
    %v1509 = vsub.f32 %v1021, %v1508
    %v1510 = vand.u32 %v1509, 4294901760
    %v1511 = vsub.f32 %v1509, %v1510
    %v1512 = vand.u32 %v1511, 4294901760
    %1513 = vmatpush1.msra.mxu0 %v1512
    %v1514 = vand.u32 %v1024, 4294901760
    %v1515 = vsub.f32 %v1024, %v1514
    %v1516 = vand.u32 %v1515, 4294901760
    %v1517 = vsub.f32 %v1515, %v1516
    %v1518 = vand.u32 %v1517, 4294901760
    %1519 = vmatprep.subr.mxu0 %v1518
    %v1520 = vand.u32 %v1023, 4294901760
    %v1521 = vsub.f32 %v1023, %v1520
    %v1522 = vand.u32 %v1521, 4294901760
    %v1523 = vsub.f32 %v1521, %v1522
    %v1524 = vand.u32 %v1523, 4294901760
    %1525 = vmatpush1.msra.mxu0 %v1524
    %v1526 = vand.u32 %v1026, 4294901760
    %v1527 = vsub.f32 %v1026, %v1526
    %v1528 = vand.u32 %v1527, 4294901760
    %v1529 = vsub.f32 %v1527, %v1528
    %v1530 = vand.u32 %v1529, 4294901760
    %1531 = vmatprep.subr.mxu0 %v1530
    %v1532 = vand.u32 %v1025, 4294901760
    %v1533 = vsub.f32 %v1025, %v1532
    %v1534 = vand.u32 %v1533, 4294901760
    %v1535 = vsub.f32 %v1533, %v1534
    %v1536 = vand.u32 %v1535, 4294901760
    %1537 = vmatpush1.msra.mxu0 %v1536
    %v1538 = vand.u32 %v1028, 4294901760
    %v1539 = vsub.f32 %v1028, %v1538
    %v1540 = vand.u32 %v1539, 4294901760
    %v1541 = vsub.f32 %v1539, %v1540
    %v1542 = vand.u32 %v1541, 4294901760
    %1543 = vmatprep.subr.mxu0 %v1542
    %v1544 = vand.u32 %v1027, 4294901760
    %v1545 = vsub.f32 %v1027, %v1544
    %v1546 = vand.u32 %v1545, 4294901760
    %v1547 = vsub.f32 %v1545, %v1546
    %v1548 = vand.u32 %v1547, 4294901760
    %1549 = vmatpush1.msra.mxu0 %v1548
    %v1550 = vand.u32 %v1030, 4294901760
    %v1551 = vsub.f32 %v1030, %v1550
    %v1552 = vand.u32 %v1551, 4294901760
    %v1553 = vsub.f32 %v1551, %v1552
    %v1554 = vand.u32 %v1553, 4294901760
    %1555 = vmatprep.subr.mxu0 %v1554
    %v1556 = vand.u32 %v1029, 4294901760
    %v1557 = vsub.f32 %v1029, %v1556
    %v1558 = vand.u32 %v1557, 4294901760
    %v1559 = vsub.f32 %v1557, %v1558
    %v1560 = vand.u32 %v1559, 4294901760
    %1561 = vmatpush1.msra.mxu0 %v1560
    %v1562 = vand.u32 %v1032, 4294901760
    %v1563 = vsub.f32 %v1032, %v1562
    %v1564 = vand.u32 %v1563, 4294901760
    %v1565 = vsub.f32 %v1563, %v1564
    %v1566 = vand.u32 %v1565, 4294901760
    %1567 = vmatprep.subr.mxu0 %v1566
    %v1568 = vand.u32 %v1031, 4294901760
    %v1569 = vsub.f32 %v1031, %v1568
    %v1570 = vand.u32 %v1569, 4294901760
    %v1571 = vsub.f32 %v1569, %v1570
    %v1572 = vand.u32 %v1571, 4294901760
    %1573 = vmatpush1.msra.mxu0 %v1572
    %v1574 = vand.u32 %v968, 4294901760
    %1575 = vmatprep.mubr.f32.mxu0 %v1574
    %v1576 = vand.u32 %v967, 4294901760
    %1577 = vmatmul.mubr.f32.gmra.mrb[0].mxu0 %v1576
    %v1578 = vpop.f32.mrb[0].mxu0
    %v1579 = vadd.f32 %v1186, %v1578
    %v1580 = vpop.f32.mrb[0].mxu0
    %v1581 = vadd.f32 %v1188, %v1580
    %1582 = vdwg.mxu0
    %v1583 = vand.u32 %v970, 4294901760
    %v1584 = vsub.f32 %v970, %v1583
    %1585 = vmatprep.subr.mxu0 %v1584
    %v1586 = vand.u32 %v969, 4294901760
    %v1587 = vsub.f32 %v969, %v1586
    %1588 = vmatpush1.msra.mxu0 %v1587
    %v1589 = vand.u32 %v972, 4294901760
    %v1590 = vsub.f32 %v972, %v1589
    %1591 = vmatprep.subr.mxu0 %v1590
    %v1592 = vand.u32 %v971, 4294901760
    %v1593 = vsub.f32 %v971, %v1592
    %1594 = vmatpush1.msra.mxu0 %v1593
    %v1595 = vand.u32 %v974, 4294901760
    %v1596 = vsub.f32 %v974, %v1595
    %1597 = vmatprep.subr.mxu0 %v1596
    %v1598 = vand.u32 %v973, 4294901760
    %v1599 = vsub.f32 %v973, %v1598
    %1600 = vmatpush1.msra.mxu0 %v1599
    %v1601 = vand.u32 %v976, 4294901760
    %v1602 = vsub.f32 %v976, %v1601
    %1603 = vmatprep.subr.mxu0 %v1602
    %v1604 = vand.u32 %v975, 4294901760
    %v1605 = vsub.f32 %v975, %v1604
    %1606 = vmatpush1.msra.mxu0 %v1605
    %v1607 = vand.u32 %v978, 4294901760
    %v1608 = vsub.f32 %v978, %v1607
    %1609 = vmatprep.subr.mxu0 %v1608
    %v1610 = vand.u32 %v977, 4294901760
    %v1611 = vsub.f32 %v977, %v1610
    %1612 = vmatpush1.msra.mxu0 %v1611
    %v1613 = vand.u32 %v980, 4294901760
    %v1614 = vsub.f32 %v980, %v1613
    %1615 = vmatprep.subr.mxu0 %v1614
    %v1616 = vand.u32 %v979, 4294901760
    %v1617 = vsub.f32 %v979, %v1616
    %1618 = vmatpush1.msra.mxu0 %v1617
    %v1619 = vand.u32 %v982, 4294901760
    %v1620 = vsub.f32 %v982, %v1619
    %1621 = vmatprep.subr.mxu0 %v1620
    %v1622 = vand.u32 %v981, 4294901760
    %v1623 = vsub.f32 %v981, %v1622
    %1624 = vmatpush1.msra.mxu0 %v1623
    %v1625 = vand.u32 %v984, 4294901760
    %v1626 = vsub.f32 %v984, %v1625
    %1627 = vmatprep.subr.mxu0 %v1626
    %v1628 = vand.u32 %v983, 4294901760
    %v1629 = vsub.f32 %v983, %v1628
    %1630 = vmatpush1.msra.mxu0 %v1629
    %v1631 = vand.u32 %v986, 4294901760
    %v1632 = vsub.f32 %v986, %v1631
    %1633 = vmatprep.subr.mxu0 %v1632
    %v1634 = vand.u32 %v985, 4294901760
    %v1635 = vsub.f32 %v985, %v1634
    %1636 = vmatpush1.msra.mxu0 %v1635
    %v1637 = vand.u32 %v988, 4294901760
    %v1638 = vsub.f32 %v988, %v1637
    %1639 = vmatprep.subr.mxu0 %v1638
    %v1640 = vand.u32 %v987, 4294901760
    %v1641 = vsub.f32 %v987, %v1640
    %1642 = vmatpush1.msra.mxu0 %v1641
    %v1643 = vand.u32 %v990, 4294901760
    %v1644 = vsub.f32 %v990, %v1643
    %1645 = vmatprep.subr.mxu0 %v1644
    %v1646 = vand.u32 %v989, 4294901760
    %v1647 = vsub.f32 %v989, %v1646
    %1648 = vmatpush1.msra.mxu0 %v1647
    %v1649 = vand.u32 %v992, 4294901760
    %v1650 = vsub.f32 %v992, %v1649
    %1651 = vmatprep.subr.mxu0 %v1650
    %v1652 = vand.u32 %v991, 4294901760
    %v1653 = vsub.f32 %v991, %v1652
    %1654 = vmatpush1.msra.mxu0 %v1653
    %v1655 = vand.u32 %v994, 4294901760
    %v1656 = vsub.f32 %v994, %v1655
    %1657 = vmatprep.subr.mxu0 %v1656
    %v1658 = vand.u32 %v993, 4294901760
    %v1659 = vsub.f32 %v993, %v1658
    %1660 = vmatpush1.msra.mxu0 %v1659
    %v1661 = vand.u32 %v996, 4294901760
    %v1662 = vsub.f32 %v996, %v1661
    %1663 = vmatprep.subr.mxu0 %v1662
    %v1664 = vand.u32 %v995, 4294901760
    %v1665 = vsub.f32 %v995, %v1664
    %1666 = vmatpush1.msra.mxu0 %v1665
    %v1667 = vand.u32 %v998, 4294901760
    %v1668 = vsub.f32 %v998, %v1667
    %1669 = vmatprep.subr.mxu0 %v1668
    %v1670 = vand.u32 %v997, 4294901760
    %v1671 = vsub.f32 %v997, %v1670
    %1672 = vmatpush1.msra.mxu0 %v1671
    %v1673 = vand.u32 %v1000, 4294901760
    %v1674 = vsub.f32 %v1000, %v1673
    %1675 = vmatprep.subr.mxu0 %v1674
    %v1676 = vand.u32 %v999, 4294901760
    %v1677 = vsub.f32 %v999, %v1676
    %1678 = vmatpush1.msra.mxu0 %v1677
    %v1679 = vand.u32 %v1002, 4294901760
    %v1680 = vsub.f32 %v1002, %v1679
    %1681 = vmatprep.subr.mxu0 %v1680
    %v1682 = vand.u32 %v1001, 4294901760
    %v1683 = vsub.f32 %v1001, %v1682
    %1684 = vmatpush1.msra.mxu0 %v1683
    %v1685 = vand.u32 %v1004, 4294901760
    %v1686 = vsub.f32 %v1004, %v1685
    %1687 = vmatprep.subr.mxu0 %v1686
    %v1688 = vand.u32 %v1003, 4294901760
    %v1689 = vsub.f32 %v1003, %v1688
    %1690 = vmatpush1.msra.mxu0 %v1689
    %v1691 = vand.u32 %v1006, 4294901760
    %v1692 = vsub.f32 %v1006, %v1691
    %1693 = vmatprep.subr.mxu0 %v1692
    %v1694 = vand.u32 %v1005, 4294901760
    %v1695 = vsub.f32 %v1005, %v1694
    %1696 = vmatpush1.msra.mxu0 %v1695
    %v1697 = vand.u32 %v1008, 4294901760
    %v1698 = vsub.f32 %v1008, %v1697
    %1699 = vmatprep.subr.mxu0 %v1698
    %v1700 = vand.u32 %v1007, 4294901760
    %v1701 = vsub.f32 %v1007, %v1700
    %1702 = vmatpush1.msra.mxu0 %v1701
    %v1703 = vand.u32 %v1010, 4294901760
    %v1704 = vsub.f32 %v1010, %v1703
    %1705 = vmatprep.subr.mxu0 %v1704
    %v1706 = vand.u32 %v1009, 4294901760
    %v1707 = vsub.f32 %v1009, %v1706
    %1708 = vmatpush1.msra.mxu0 %v1707
    %v1709 = vand.u32 %v1012, 4294901760
    %v1710 = vsub.f32 %v1012, %v1709
    %1711 = vmatprep.subr.mxu0 %v1710
    %v1712 = vand.u32 %v1011, 4294901760
    %v1713 = vsub.f32 %v1011, %v1712
    %1714 = vmatpush1.msra.mxu0 %v1713
    %v1715 = vand.u32 %v1014, 4294901760
    %v1716 = vsub.f32 %v1014, %v1715
    %1717 = vmatprep.subr.mxu0 %v1716
    %v1718 = vand.u32 %v1013, 4294901760
    %v1719 = vsub.f32 %v1013, %v1718
    %1720 = vmatpush1.msra.mxu0 %v1719
    %v1721 = vand.u32 %v1016, 4294901760
    %v1722 = vsub.f32 %v1016, %v1721
    %1723 = vmatprep.subr.mxu0 %v1722
    %v1724 = vand.u32 %v1015, 4294901760
    %v1725 = vsub.f32 %v1015, %v1724
    %1726 = vmatpush1.msra.mxu0 %v1725
    %v1727 = vand.u32 %v1018, 4294901760
    %v1728 = vsub.f32 %v1018, %v1727
    %1729 = vmatprep.subr.mxu0 %v1728
    %v1730 = vand.u32 %v1017, 4294901760
    %v1731 = vsub.f32 %v1017, %v1730
    %1732 = vmatpush1.msra.mxu0 %v1731
    %v1733 = vand.u32 %v1020, 4294901760
    %v1734 = vsub.f32 %v1020, %v1733
    %1735 = vmatprep.subr.mxu0 %v1734
    %v1736 = vand.u32 %v1019, 4294901760
    %v1737 = vsub.f32 %v1019, %v1736
    %1738 = vmatpush1.msra.mxu0 %v1737
    %v1739 = vand.u32 %v1022, 4294901760
    %v1740 = vsub.f32 %v1022, %v1739
    %1741 = vmatprep.subr.mxu0 %v1740
    %v1742 = vand.u32 %v1021, 4294901760
    %v1743 = vsub.f32 %v1021, %v1742
    %1744 = vmatpush1.msra.mxu0 %v1743
    %v1745 = vand.u32 %v1024, 4294901760
    %v1746 = vsub.f32 %v1024, %v1745
    %1747 = vmatprep.subr.mxu0 %v1746
    %v1748 = vand.u32 %v1023, 4294901760
    %v1749 = vsub.f32 %v1023, %v1748
    %1750 = vmatpush1.msra.mxu0 %v1749
    %v1751 = vand.u32 %v1026, 4294901760
    %v1752 = vsub.f32 %v1026, %v1751
    %1753 = vmatprep.subr.mxu0 %v1752
    %v1754 = vand.u32 %v1025, 4294901760
    %v1755 = vsub.f32 %v1025, %v1754
    %1756 = vmatpush1.msra.mxu0 %v1755
    %v1757 = vand.u32 %v1028, 4294901760
    %v1758 = vsub.f32 %v1028, %v1757
    %1759 = vmatprep.subr.mxu0 %v1758
    %v1760 = vand.u32 %v1027, 4294901760
    %v1761 = vsub.f32 %v1027, %v1760
    %1762 = vmatpush1.msra.mxu0 %v1761
    %v1763 = vand.u32 %v1030, 4294901760
    %v1764 = vsub.f32 %v1030, %v1763
    %1765 = vmatprep.subr.mxu0 %v1764
    %v1766 = vand.u32 %v1029, 4294901760
    %v1767 = vsub.f32 %v1029, %v1766
    %1768 = vmatpush1.msra.mxu0 %v1767
    %v1769 = vand.u32 %v1032, 4294901760
    %v1770 = vsub.f32 %v1032, %v1769
    %1771 = vmatprep.subr.mxu0 %v1770
    %v1772 = vand.u32 %v1031, 4294901760
    %v1773 = vsub.f32 %v1031, %v1772
    %1774 = vmatpush1.msra.mxu0 %v1773
    %v1775 = vand.u32 %v968, 4294901760
    %v1776 = vsub.f32 %v968, %v1775
    %1777 = vmatprep.mubr.f32.mxu0 %v1776
    %v1778 = vand.u32 %v967, 4294901760
    %v1779 = vsub.f32 %v967, %v1778
    %1780 = vmatmul.mubr.f32.gmra.mrb[0].mxu0 %v1779
    %v1781 = vpop.f32.mrb[0].mxu0
    %v1782 = vadd.f32 %v1579, %v1781
    %v1783 = vpop.f32.mrb[0].mxu0
    %v1784 = vadd.f32 %v1581, %v1783
    %1785 = vdwg.mxu0
    %v1786 = vand.u32 %v970, 4294901760
    %1787 = vmatprep.subr.mxu0 %v1786
    %v1788 = vand.u32 %v969, 4294901760
    %1789 = vmatpush1.msra.mxu0 %v1788
    %v1790 = vand.u32 %v972, 4294901760
    %1791 = vmatprep.subr.mxu0 %v1790
    %v1792 = vand.u32 %v971, 4294901760
    %1793 = vmatpush1.msra.mxu0 %v1792
    %v1794 = vand.u32 %v974, 4294901760
    %1795 = vmatprep.subr.mxu0 %v1794
    %v1796 = vand.u32 %v973, 4294901760
    %1797 = vmatpush1.msra.mxu0 %v1796
    %v1798 = vand.u32 %v976, 4294901760
    %1799 = vmatprep.subr.mxu0 %v1798
    %v1800 = vand.u32 %v975, 4294901760
    %1801 = vmatpush1.msra.mxu0 %v1800
    %v1802 = vand.u32 %v978, 4294901760
    %1803 = vmatprep.subr.mxu0 %v1802
    %v1804 = vand.u32 %v977, 4294901760
    %1805 = vmatpush1.msra.mxu0 %v1804
    %v1806 = vand.u32 %v980, 4294901760
    %1807 = vmatprep.subr.mxu0 %v1806
    %v1808 = vand.u32 %v979, 4294901760
    %1809 = vmatpush1.msra.mxu0 %v1808
    %v1810 = vand.u32 %v982, 4294901760
    %1811 = vmatprep.subr.mxu0 %v1810
    %v1812 = vand.u32 %v981, 4294901760
    %1813 = vmatpush1.msra.mxu0 %v1812
    %v1814 = vand.u32 %v984, 4294901760
    %1815 = vmatprep.subr.mxu0 %v1814
    %v1816 = vand.u32 %v983, 4294901760
    %1817 = vmatpush1.msra.mxu0 %v1816
    %v1818 = vand.u32 %v986, 4294901760
    %1819 = vmatprep.subr.mxu0 %v1818
    %v1820 = vand.u32 %v985, 4294901760
    %1821 = vmatpush1.msra.mxu0 %v1820
    %v1822 = vand.u32 %v988, 4294901760
    %1823 = vmatprep.subr.mxu0 %v1822
    %v1824 = vand.u32 %v987, 4294901760
    %1825 = vmatpush1.msra.mxu0 %v1824
    %v1826 = vand.u32 %v990, 4294901760
    %1827 = vmatprep.subr.mxu0 %v1826
    %v1828 = vand.u32 %v989, 4294901760
    %1829 = vmatpush1.msra.mxu0 %v1828
    %v1830 = vand.u32 %v992, 4294901760
    %1831 = vmatprep.subr.mxu0 %v1830
    %v1832 = vand.u32 %v991, 4294901760
    %1833 = vmatpush1.msra.mxu0 %v1832
    %v1834 = vand.u32 %v994, 4294901760
    %1835 = vmatprep.subr.mxu0 %v1834
    %v1836 = vand.u32 %v993, 4294901760
    %1837 = vmatpush1.msra.mxu0 %v1836
    %v1838 = vand.u32 %v996, 4294901760
    %1839 = vmatprep.subr.mxu0 %v1838
    %v1840 = vand.u32 %v995, 4294901760
    %1841 = vmatpush1.msra.mxu0 %v1840
    %v1842 = vand.u32 %v998, 4294901760
    %1843 = vmatprep.subr.mxu0 %v1842
    %v1844 = vand.u32 %v997, 4294901760
    %1845 = vmatpush1.msra.mxu0 %v1844
    %v1846 = vand.u32 %v1000, 4294901760
    %1847 = vmatprep.subr.mxu0 %v1846
    %v1848 = vand.u32 %v999, 4294901760
    %1849 = vmatpush1.msra.mxu0 %v1848
    %v1850 = vand.u32 %v1002, 4294901760
    %1851 = vmatprep.subr.mxu0 %v1850
    %v1852 = vand.u32 %v1001, 4294901760
    %1853 = vmatpush1.msra.mxu0 %v1852
    %v1854 = vand.u32 %v1004, 4294901760
    %1855 = vmatprep.subr.mxu0 %v1854
    %v1856 = vand.u32 %v1003, 4294901760
    %1857 = vmatpush1.msra.mxu0 %v1856
    %v1858 = vand.u32 %v1006, 4294901760
    %1859 = vmatprep.subr.mxu0 %v1858
    %v1860 = vand.u32 %v1005, 4294901760
    %1861 = vmatpush1.msra.mxu0 %v1860
    %v1862 = vand.u32 %v1008, 4294901760
    %1863 = vmatprep.subr.mxu0 %v1862
    %v1864 = vand.u32 %v1007, 4294901760
    %1865 = vmatpush1.msra.mxu0 %v1864
    %v1866 = vand.u32 %v1010, 4294901760
    %1867 = vmatprep.subr.mxu0 %v1866
    %v1868 = vand.u32 %v1009, 4294901760
    %1869 = vmatpush1.msra.mxu0 %v1868
    %v1870 = vand.u32 %v1012, 4294901760
    %1871 = vmatprep.subr.mxu0 %v1870
    %v1872 = vand.u32 %v1011, 4294901760
    %1873 = vmatpush1.msra.mxu0 %v1872
    %v1874 = vand.u32 %v1014, 4294901760
    %1875 = vmatprep.subr.mxu0 %v1874
    %v1876 = vand.u32 %v1013, 4294901760
    %1877 = vmatpush1.msra.mxu0 %v1876
    %v1878 = vand.u32 %v1016, 4294901760
    %1879 = vmatprep.subr.mxu0 %v1878
    %v1880 = vand.u32 %v1015, 4294901760
    %1881 = vmatpush1.msra.mxu0 %v1880
    %v1882 = vand.u32 %v1018, 4294901760
    %1883 = vmatprep.subr.mxu0 %v1882
    %v1884 = vand.u32 %v1017, 4294901760
    %1885 = vmatpush1.msra.mxu0 %v1884
    %v1886 = vand.u32 %v1020, 4294901760
    %1887 = vmatprep.subr.mxu0 %v1886
    %v1888 = vand.u32 %v1019, 4294901760
    %1889 = vmatpush1.msra.mxu0 %v1888
    %v1890 = vand.u32 %v1022, 4294901760
    %1891 = vmatprep.subr.mxu0 %v1890
    %v1892 = vand.u32 %v1021, 4294901760
    %1893 = vmatpush1.msra.mxu0 %v1892
    %v1894 = vand.u32 %v1024, 4294901760
    %1895 = vmatprep.subr.mxu0 %v1894
    %v1896 = vand.u32 %v1023, 4294901760
    %1897 = vmatpush1.msra.mxu0 %v1896
    %v1898 = vand.u32 %v1026, 4294901760
    %1899 = vmatprep.subr.mxu0 %v1898
    %v1900 = vand.u32 %v1025, 4294901760
    %1901 = vmatpush1.msra.mxu0 %v1900
    %v1902 = vand.u32 %v1028, 4294901760
    %1903 = vmatprep.subr.mxu0 %v1902
    %v1904 = vand.u32 %v1027, 4294901760
    %1905 = vmatpush1.msra.mxu0 %v1904
    %v1906 = vand.u32 %v1030, 4294901760
    %1907 = vmatprep.subr.mxu0 %v1906
    %v1908 = vand.u32 %v1029, 4294901760
    %1909 = vmatpush1.msra.mxu0 %v1908
    %v1910 = vand.u32 %v1032, 4294901760
    %1911 = vmatprep.subr.mxu0 %v1910
    %v1912 = vand.u32 %v1031, 4294901760
    %1913 = vmatpush1.msra.mxu0 %v1912
    %v1914 = vand.u32 %v968, 4294901760
    %v1915 = vsub.f32 %v968, %v1914
    %v1916 = vand.u32 %v1915, 4294901760
    %1917 = vmatprep.mubr.f32.mxu0 %v1916
    %v1918 = vand.u32 %v967, 4294901760
    %v1919 = vsub.f32 %v967, %v1918
    %v1920 = vand.u32 %v1919, 4294901760
    %1921 = vmatmul.mubr.f32.gmra.mrb[0].mxu0 %v1920
    %v1922 = vpop.f32.mrb[0].mxu0
    %v1923 = vadd.f32 %v1782, %v1922
    %v1924 = vpop.f32.mrb[0].mxu0
    %v1925 = vadd.f32 %v1784, %v1924
    %1926 = vdwg.mxu0
    %v1927 = vand.u32 %v970, 4294901760
    %v1928 = vsub.f32 %v970, %v1927
    %v1929 = vand.u32 %v1928, 4294901760
    %1930 = vmatprep.subr.mxu0 %v1929
    %v1931 = vand.u32 %v969, 4294901760
    %v1932 = vsub.f32 %v969, %v1931
    %v1933 = vand.u32 %v1932, 4294901760
    %1934 = vmatpush1.msra.mxu0 %v1933
    %v1935 = vand.u32 %v972, 4294901760
    %v1936 = vsub.f32 %v972, %v1935
    %v1937 = vand.u32 %v1936, 4294901760
    %1938 = vmatprep.subr.mxu0 %v1937
    %v1939 = vand.u32 %v971, 4294901760
    %v1940 = vsub.f32 %v971, %v1939
    %v1941 = vand.u32 %v1940, 4294901760
    %1942 = vmatpush1.msra.mxu0 %v1941
    %v1943 = vand.u32 %v974, 4294901760
    %v1944 = vsub.f32 %v974, %v1943
    %v1945 = vand.u32 %v1944, 4294901760
    %1946 = vmatprep.subr.mxu0 %v1945
    %v1947 = vand.u32 %v973, 4294901760
    %v1948 = vsub.f32 %v973, %v1947
    %v1949 = vand.u32 %v1948, 4294901760
    %1950 = vmatpush1.msra.mxu0 %v1949
    %v1951 = vand.u32 %v976, 4294901760
    %v1952 = vsub.f32 %v976, %v1951
    %v1953 = vand.u32 %v1952, 4294901760
    %1954 = vmatprep.subr.mxu0 %v1953
    %v1955 = vand.u32 %v975, 4294901760
    %v1956 = vsub.f32 %v975, %v1955
    %v1957 = vand.u32 %v1956, 4294901760
    %1958 = vmatpush1.msra.mxu0 %v1957
    %v1959 = vand.u32 %v978, 4294901760
    %v1960 = vsub.f32 %v978, %v1959
    %v1961 = vand.u32 %v1960, 4294901760
    %1962 = vmatprep.subr.mxu0 %v1961
    %v1963 = vand.u32 %v977, 4294901760
    %v1964 = vsub.f32 %v977, %v1963
    %v1965 = vand.u32 %v1964, 4294901760
    %1966 = vmatpush1.msra.mxu0 %v1965
    %v1967 = vand.u32 %v980, 4294901760
    %v1968 = vsub.f32 %v980, %v1967
    %v1969 = vand.u32 %v1968, 4294901760
    %1970 = vmatprep.subr.mxu0 %v1969
    %v1971 = vand.u32 %v979, 4294901760
    %v1972 = vsub.f32 %v979, %v1971
    %v1973 = vand.u32 %v1972, 4294901760
    %1974 = vmatpush1.msra.mxu0 %v1973
    %v1975 = vand.u32 %v982, 4294901760
    %v1976 = vsub.f32 %v982, %v1975
    %v1977 = vand.u32 %v1976, 4294901760
    %1978 = vmatprep.subr.mxu0 %v1977
    %v1979 = vand.u32 %v981, 4294901760
    %v1980 = vsub.f32 %v981, %v1979
    %v1981 = vand.u32 %v1980, 4294901760
    %1982 = vmatpush1.msra.mxu0 %v1981
    %v1983 = vand.u32 %v984, 4294901760
    %v1984 = vsub.f32 %v984, %v1983
    %v1985 = vand.u32 %v1984, 4294901760
    %1986 = vmatprep.subr.mxu0 %v1985
    %v1987 = vand.u32 %v983, 4294901760
    %v1988 = vsub.f32 %v983, %v1987
    %v1989 = vand.u32 %v1988, 4294901760
    %1990 = vmatpush1.msra.mxu0 %v1989
    %v1991 = vand.u32 %v986, 4294901760
    %v1992 = vsub.f32 %v986, %v1991
    %v1993 = vand.u32 %v1992, 4294901760
    %1994 = vmatprep.subr.mxu0 %v1993
    %v1995 = vand.u32 %v985, 4294901760
    %v1996 = vsub.f32 %v985, %v1995
    %v1997 = vand.u32 %v1996, 4294901760
    %1998 = vmatpush1.msra.mxu0 %v1997
    %v1999 = vand.u32 %v988, 4294901760
    %v2000 = vsub.f32 %v988, %v1999
    %v2001 = vand.u32 %v2000, 4294901760
    %2002 = vmatprep.subr.mxu0 %v2001
    %v2003 = vand.u32 %v987, 4294901760
    %v2004 = vsub.f32 %v987, %v2003
    %v2005 = vand.u32 %v2004, 4294901760
    %2006 = vmatpush1.msra.mxu0 %v2005
    %v2007 = vand.u32 %v990, 4294901760
    %v2008 = vsub.f32 %v990, %v2007
    %v2009 = vand.u32 %v2008, 4294901760
    %2010 = vmatprep.subr.mxu0 %v2009
    %v2011 = vand.u32 %v989, 4294901760
    %v2012 = vsub.f32 %v989, %v2011
    %v2013 = vand.u32 %v2012, 4294901760
    %2014 = vmatpush1.msra.mxu0 %v2013
    %v2015 = vand.u32 %v992, 4294901760
    %v2016 = vsub.f32 %v992, %v2015
    %v2017 = vand.u32 %v2016, 4294901760
    %2018 = vmatprep.subr.mxu0 %v2017
    %v2019 = vand.u32 %v991, 4294901760
    %v2020 = vsub.f32 %v991, %v2019
    %v2021 = vand.u32 %v2020, 4294901760
    %2022 = vmatpush1.msra.mxu0 %v2021
    %v2023 = vand.u32 %v994, 4294901760
    %v2024 = vsub.f32 %v994, %v2023
    %v2025 = vand.u32 %v2024, 4294901760
    %2026 = vmatprep.subr.mxu0 %v2025
    %v2027 = vand.u32 %v993, 4294901760
    %v2028 = vsub.f32 %v993, %v2027
    %v2029 = vand.u32 %v2028, 4294901760
    %2030 = vmatpush1.msra.mxu0 %v2029
    %v2031 = vand.u32 %v996, 4294901760
    %v2032 = vsub.f32 %v996, %v2031
    %v2033 = vand.u32 %v2032, 4294901760
    %2034 = vmatprep.subr.mxu0 %v2033
    %v2035 = vand.u32 %v995, 4294901760
    %v2036 = vsub.f32 %v995, %v2035
    %v2037 = vand.u32 %v2036, 4294901760
    %2038 = vmatpush1.msra.mxu0 %v2037
    %v2039 = vand.u32 %v998, 4294901760
    %v2040 = vsub.f32 %v998, %v2039
    %v2041 = vand.u32 %v2040, 4294901760
    %2042 = vmatprep.subr.mxu0 %v2041
    %v2043 = vand.u32 %v997, 4294901760
    %v2044 = vsub.f32 %v997, %v2043
    %v2045 = vand.u32 %v2044, 4294901760
    %2046 = vmatpush1.msra.mxu0 %v2045
    %v2047 = vand.u32 %v1000, 4294901760
    %v2048 = vsub.f32 %v1000, %v2047
    %v2049 = vand.u32 %v2048, 4294901760
    %2050 = vmatprep.subr.mxu0 %v2049
    %v2051 = vand.u32 %v999, 4294901760
    %v2052 = vsub.f32 %v999, %v2051
    %v2053 = vand.u32 %v2052, 4294901760
    %2054 = vmatpush1.msra.mxu0 %v2053
    %v2055 = vand.u32 %v1002, 4294901760
    %v2056 = vsub.f32 %v1002, %v2055
    %v2057 = vand.u32 %v2056, 4294901760
    %2058 = vmatprep.subr.mxu0 %v2057
    %v2059 = vand.u32 %v1001, 4294901760
    %v2060 = vsub.f32 %v1001, %v2059
    %v2061 = vand.u32 %v2060, 4294901760
    %2062 = vmatpush1.msra.mxu0 %v2061
    %v2063 = vand.u32 %v1004, 4294901760
    %v2064 = vsub.f32 %v1004, %v2063
    %v2065 = vand.u32 %v2064, 4294901760
    %2066 = vmatprep.subr.mxu0 %v2065
    %v2067 = vand.u32 %v1003, 4294901760
    %v2068 = vsub.f32 %v1003, %v2067
    %v2069 = vand.u32 %v2068, 4294901760
    %2070 = vmatpush1.msra.mxu0 %v2069
    %v2071 = vand.u32 %v1006, 4294901760
    %v2072 = vsub.f32 %v1006, %v2071
    %v2073 = vand.u32 %v2072, 4294901760
    %2074 = vmatprep.subr.mxu0 %v2073
    %v2075 = vand.u32 %v1005, 4294901760
    %v2076 = vsub.f32 %v1005, %v2075
    %v2077 = vand.u32 %v2076, 4294901760
    %2078 = vmatpush1.msra.mxu0 %v2077
    %v2079 = vand.u32 %v1008, 4294901760
    %v2080 = vsub.f32 %v1008, %v2079
    %v2081 = vand.u32 %v2080, 4294901760
    %2082 = vmatprep.subr.mxu0 %v2081
    %v2083 = vand.u32 %v1007, 4294901760
    %v2084 = vsub.f32 %v1007, %v2083
    %v2085 = vand.u32 %v2084, 4294901760
    %2086 = vmatpush1.msra.mxu0 %v2085
    %v2087 = vand.u32 %v1010, 4294901760
    %v2088 = vsub.f32 %v1010, %v2087
    %v2089 = vand.u32 %v2088, 4294901760
    %2090 = vmatprep.subr.mxu0 %v2089
    %v2091 = vand.u32 %v1009, 4294901760
    %v2092 = vsub.f32 %v1009, %v2091
    %v2093 = vand.u32 %v2092, 4294901760
    %2094 = vmatpush1.msra.mxu0 %v2093
    %v2095 = vand.u32 %v1012, 4294901760
    %v2096 = vsub.f32 %v1012, %v2095
    %v2097 = vand.u32 %v2096, 4294901760
    %2098 = vmatprep.subr.mxu0 %v2097
    %v2099 = vand.u32 %v1011, 4294901760
    %v2100 = vsub.f32 %v1011, %v2099
    %v2101 = vand.u32 %v2100, 4294901760
    %2102 = vmatpush1.msra.mxu0 %v2101
    %v2103 = vand.u32 %v1014, 4294901760
    %v2104 = vsub.f32 %v1014, %v2103
    %v2105 = vand.u32 %v2104, 4294901760
    %2106 = vmatprep.subr.mxu0 %v2105
    %v2107 = vand.u32 %v1013, 4294901760
    %v2108 = vsub.f32 %v1013, %v2107
    %v2109 = vand.u32 %v2108, 4294901760
    %2110 = vmatpush1.msra.mxu0 %v2109
    %v2111 = vand.u32 %v1016, 4294901760
    %v2112 = vsub.f32 %v1016, %v2111
    %v2113 = vand.u32 %v2112, 4294901760
    %2114 = vmatprep.subr.mxu0 %v2113
    %v2115 = vand.u32 %v1015, 4294901760
    %v2116 = vsub.f32 %v1015, %v2115
    %v2117 = vand.u32 %v2116, 4294901760
    %2118 = vmatpush1.msra.mxu0 %v2117
    %v2119 = vand.u32 %v1018, 4294901760
    %v2120 = vsub.f32 %v1018, %v2119
    %v2121 = vand.u32 %v2120, 4294901760
    %2122 = vmatprep.subr.mxu0 %v2121
    %v2123 = vand.u32 %v1017, 4294901760
    %v2124 = vsub.f32 %v1017, %v2123
    %v2125 = vand.u32 %v2124, 4294901760
    %2126 = vmatpush1.msra.mxu0 %v2125
    %v2127 = vand.u32 %v1020, 4294901760
    %v2128 = vsub.f32 %v1020, %v2127
    %v2129 = vand.u32 %v2128, 4294901760
    %2130 = vmatprep.subr.mxu0 %v2129
    %v2131 = vand.u32 %v1019, 4294901760
    %v2132 = vsub.f32 %v1019, %v2131
    %v2133 = vand.u32 %v2132, 4294901760
    %2134 = vmatpush1.msra.mxu0 %v2133
    %v2135 = vand.u32 %v1022, 4294901760
    %v2136 = vsub.f32 %v1022, %v2135
    %v2137 = vand.u32 %v2136, 4294901760
    %2138 = vmatprep.subr.mxu0 %v2137
    %v2139 = vand.u32 %v1021, 4294901760
    %v2140 = vsub.f32 %v1021, %v2139
    %v2141 = vand.u32 %v2140, 4294901760
    %2142 = vmatpush1.msra.mxu0 %v2141
    %v2143 = vand.u32 %v1024, 4294901760
    %v2144 = vsub.f32 %v1024, %v2143
    %v2145 = vand.u32 %v2144, 4294901760
    %2146 = vmatprep.subr.mxu0 %v2145
    %v2147 = vand.u32 %v1023, 4294901760
    %v2148 = vsub.f32 %v1023, %v2147
    %v2149 = vand.u32 %v2148, 4294901760
    %2150 = vmatpush1.msra.mxu0 %v2149
    %v2151 = vand.u32 %v1026, 4294901760
    %v2152 = vsub.f32 %v1026, %v2151
    %v2153 = vand.u32 %v2152, 4294901760
    %2154 = vmatprep.subr.mxu0 %v2153
    %v2155 = vand.u32 %v1025, 4294901760
    %v2156 = vsub.f32 %v1025, %v2155
    %v2157 = vand.u32 %v2156, 4294901760
    %2158 = vmatpush1.msra.mxu0 %v2157
    %v2159 = vand.u32 %v1028, 4294901760
    %v2160 = vsub.f32 %v1028, %v2159
    %v2161 = vand.u32 %v2160, 4294901760
    %2162 = vmatprep.subr.mxu0 %v2161
    %v2163 = vand.u32 %v1027, 4294901760
    %v2164 = vsub.f32 %v1027, %v2163
    %v2165 = vand.u32 %v2164, 4294901760
    %2166 = vmatpush1.msra.mxu0 %v2165
    %v2167 = vand.u32 %v1030, 4294901760
    %v2168 = vsub.f32 %v1030, %v2167
    %v2169 = vand.u32 %v2168, 4294901760
    %2170 = vmatprep.subr.mxu0 %v2169
    %v2171 = vand.u32 %v1029, 4294901760
    %v2172 = vsub.f32 %v1029, %v2171
    %v2173 = vand.u32 %v2172, 4294901760
    %2174 = vmatpush1.msra.mxu0 %v2173
    %v2175 = vand.u32 %v1032, 4294901760
    %v2176 = vsub.f32 %v1032, %v2175
    %v2177 = vand.u32 %v2176, 4294901760
    %2178 = vmatprep.subr.mxu0 %v2177
    %v2179 = vand.u32 %v1031, 4294901760
    %v2180 = vsub.f32 %v1031, %v2179
    %v2181 = vand.u32 %v2180, 4294901760
    %2182 = vmatpush1.msra.mxu0 %v2181
    %v2183 = vand.u32 %v968, 4294901760
    %2184 = vmatprep.mubr.f32.mxu0 %v2183
    %v2185 = vand.u32 %v967, 4294901760
    %2186 = vmatmul.mubr.f32.gmra.mrb[0].mxu0 %v2185
    %v2187 = vpop.f32.mrb[0].mxu0
    %v2188 = vadd.f32 %v1923, %v2187
    %v2189 = vpop.f32.mrb[0].mxu0
    %v2190 = vadd.f32 %v1925, %v2189
    %2191 = vdwg.mxu0
    %v2192 = vand.u32 %v970, 4294901760
    %2193 = vmatprep.subr.mxu0 %v2192
    %v2194 = vand.u32 %v969, 4294901760
    %2195 = vmatpush1.msra.mxu0 %v2194
    %v2196 = vand.u32 %v972, 4294901760
    %2197 = vmatprep.subr.mxu0 %v2196
    %v2198 = vand.u32 %v971, 4294901760
    %2199 = vmatpush1.msra.mxu0 %v2198
    %v2200 = vand.u32 %v974, 4294901760
    %2201 = vmatprep.subr.mxu0 %v2200
    %v2202 = vand.u32 %v973, 4294901760
    %2203 = vmatpush1.msra.mxu0 %v2202
    %v2204 = vand.u32 %v976, 4294901760
    %2205 = vmatprep.subr.mxu0 %v2204
    %v2206 = vand.u32 %v975, 4294901760
    %2207 = vmatpush1.msra.mxu0 %v2206
    %v2208 = vand.u32 %v978, 4294901760
    %2209 = vmatprep.subr.mxu0 %v2208
    %v2210 = vand.u32 %v977, 4294901760
    %2211 = vmatpush1.msra.mxu0 %v2210
    %v2212 = vand.u32 %v980, 4294901760
    %2213 = vmatprep.subr.mxu0 %v2212
    %v2214 = vand.u32 %v979, 4294901760
    %2215 = vmatpush1.msra.mxu0 %v2214
    %v2216 = vand.u32 %v982, 4294901760
    %2217 = vmatprep.subr.mxu0 %v2216
    %v2218 = vand.u32 %v981, 4294901760
    %2219 = vmatpush1.msra.mxu0 %v2218
    %v2220 = vand.u32 %v984, 4294901760
    %2221 = vmatprep.subr.mxu0 %v2220
    %v2222 = vand.u32 %v983, 4294901760
    %2223 = vmatpush1.msra.mxu0 %v2222
    %v2224 = vand.u32 %v986, 4294901760
    %2225 = vmatprep.subr.mxu0 %v2224
    %v2226 = vand.u32 %v985, 4294901760
    %2227 = vmatpush1.msra.mxu0 %v2226
    %v2228 = vand.u32 %v988, 4294901760
    %2229 = vmatprep.subr.mxu0 %v2228
    %v2230 = vand.u32 %v987, 4294901760
    %2231 = vmatpush1.msra.mxu0 %v2230
    %v2232 = vand.u32 %v990, 4294901760
    %2233 = vmatprep.subr.mxu0 %v2232
    %v2234 = vand.u32 %v989, 4294901760
    %2235 = vmatpush1.msra.mxu0 %v2234
    %v2236 = vand.u32 %v992, 4294901760
    %2237 = vmatprep.subr.mxu0 %v2236
    %v2238 = vand.u32 %v991, 4294901760
    %2239 = vmatpush1.msra.mxu0 %v2238
    %v2240 = vand.u32 %v994, 4294901760
    %2241 = vmatprep.subr.mxu0 %v2240
    %v2242 = vand.u32 %v993, 4294901760
    %2243 = vmatpush1.msra.mxu0 %v2242
    %v2244 = vand.u32 %v996, 4294901760
    %2245 = vmatprep.subr.mxu0 %v2244
    %v2246 = vand.u32 %v995, 4294901760
    %2247 = vmatpush1.msra.mxu0 %v2246
    %v2248 = vand.u32 %v998, 4294901760
    %2249 = vmatprep.subr.mxu0 %v2248
    %v2250 = vand.u32 %v997, 4294901760
    %2251 = vmatpush1.msra.mxu0 %v2250
    %v2252 = vand.u32 %v1000, 4294901760
    %2253 = vmatprep.subr.mxu0 %v2252
    %v2254 = vand.u32 %v999, 4294901760
    %2255 = vmatpush1.msra.mxu0 %v2254
    %v2256 = vand.u32 %v1002, 4294901760
    %2257 = vmatprep.subr.mxu0 %v2256
    %v2258 = vand.u32 %v1001, 4294901760
    %2259 = vmatpush1.msra.mxu0 %v2258
    %v2260 = vand.u32 %v1004, 4294901760
    %2261 = vmatprep.subr.mxu0 %v2260
    %v2262 = vand.u32 %v1003, 4294901760
    %2263 = vmatpush1.msra.mxu0 %v2262
    %v2264 = vand.u32 %v1006, 4294901760
    %2265 = vmatprep.subr.mxu0 %v2264
    %v2266 = vand.u32 %v1005, 4294901760
    %2267 = vmatpush1.msra.mxu0 %v2266
    %v2268 = vand.u32 %v1008, 4294901760
    %2269 = vmatprep.subr.mxu0 %v2268
    %v2270 = vand.u32 %v1007, 4294901760
    %2271 = vmatpush1.msra.mxu0 %v2270
    %v2272 = vand.u32 %v1010, 4294901760
    %2273 = vmatprep.subr.mxu0 %v2272
    %v2274 = vand.u32 %v1009, 4294901760
    %2275 = vmatpush1.msra.mxu0 %v2274
    %v2276 = vand.u32 %v1012, 4294901760
    %2277 = vmatprep.subr.mxu0 %v2276
    %v2278 = vand.u32 %v1011, 4294901760
    %2279 = vmatpush1.msra.mxu0 %v2278
    %v2280 = vand.u32 %v1014, 4294901760
    %2281 = vmatprep.subr.mxu0 %v2280
    %v2282 = vand.u32 %v1013, 4294901760
    %2283 = vmatpush1.msra.mxu0 %v2282
    %v2284 = vand.u32 %v1016, 4294901760
    %2285 = vmatprep.subr.mxu0 %v2284
    %v2286 = vand.u32 %v1015, 4294901760
    %2287 = vmatpush1.msra.mxu0 %v2286
    %v2288 = vand.u32 %v1018, 4294901760
    %2289 = vmatprep.subr.mxu0 %v2288
    %v2290 = vand.u32 %v1017, 4294901760
    %2291 = vmatpush1.msra.mxu0 %v2290
    %v2292 = vand.u32 %v1020, 4294901760
    %2293 = vmatprep.subr.mxu0 %v2292
    %v2294 = vand.u32 %v1019, 4294901760
    %2295 = vmatpush1.msra.mxu0 %v2294
    %v2296 = vand.u32 %v1022, 4294901760
    %2297 = vmatprep.subr.mxu0 %v2296
    %v2298 = vand.u32 %v1021, 4294901760
    %2299 = vmatpush1.msra.mxu0 %v2298
    %v2300 = vand.u32 %v1024, 4294901760
    %2301 = vmatprep.subr.mxu0 %v2300
    %v2302 = vand.u32 %v1023, 4294901760
    %2303 = vmatpush1.msra.mxu0 %v2302
    %v2304 = vand.u32 %v1026, 4294901760
    %2305 = vmatprep.subr.mxu0 %v2304
    %v2306 = vand.u32 %v1025, 4294901760
    %2307 = vmatpush1.msra.mxu0 %v2306
    %v2308 = vand.u32 %v1028, 4294901760
    %2309 = vmatprep.subr.mxu0 %v2308
    %v2310 = vand.u32 %v1027, 4294901760
    %2311 = vmatpush1.msra.mxu0 %v2310
    %v2312 = vand.u32 %v1030, 4294901760
    %2313 = vmatprep.subr.mxu0 %v2312
    %v2314 = vand.u32 %v1029, 4294901760
    %2315 = vmatpush1.msra.mxu0 %v2314
    %v2316 = vand.u32 %v1032, 4294901760
    %2317 = vmatprep.subr.mxu0 %v2316
    %v2318 = vand.u32 %v1031, 4294901760
    %2319 = vmatpush1.msra.mxu0 %v2318
    %v2320 = vand.u32 %v968, 4294901760
    %2321 = vmatprep.mubr.f32.mxu0 %v2320
    %v2322 = vand.u32 %v967, 4294901760
    %2323 = vmatmul.mubr.f32.gmra.mrb[0].mxu0 %v2322
    %v2324 = vpop.f32.mrb[0].mxu0
    %v2325 = vadd.f32 %v2188, %v2324
    %v2326 = vpop.f32.mrb[0].mxu0
    %v2327 = vadd.f32 %v2190, %v2326
    %2328 = vdwg.mxu0
    %v2329 = vtanh.pop %v2325
    %v2330 = vtanh.pop %v2327
    %v2331 = vld [vmem:[#allocation6] sm:$0xff]
    %v2332 = vld [vmem:[#allocation6 + $0x8] sm:$0xff]
    %v2333 = vld [vmem:[#allocation6 + $0x10] sm:$0xff]
    %v2334 = vld [vmem:[#allocation6 + $0x18] sm:$0xff]
    %v2335 = vld [vmem:[#allocation6 + $0x20] sm:$0xff]
    %v2336 = vld [vmem:[#allocation6 + $0x28] sm:$0xff]
    %v2337 = vld [vmem:[#allocation6 + $0x30] sm:$0xff]
    %v2338 = vld [vmem:[#allocation6 + $0x38] sm:$0xff]
    %v2339 = vld [vmem:[#allocation6 + $0x40] sm:$0xff]
    %v2340 = vld [vmem:[#allocation6 + $0x48] sm:$0xff]
    %v2341 = vld [vmem:[#allocation6 + $0x50] sm:$0xff]
    %v2342 = vld [vmem:[#allocation6 + $0x58] sm:$0xff]
    %v2343 = vld [vmem:[#allocation6 + $0x60] sm:$0xff]
    %v2344 = vld [vmem:[#allocation6 + $0x68] sm:$0xff]
    %v2345 = vld [vmem:[#allocation6 + $0x70] sm:$0xff]
    %v2346 = vld [vmem:[#allocation6 + $0x78] sm:$0xff]
    %v2347 = vld [vmem:[#allocation6 + $0x80] sm:$0xff]
    %v2348 = vld [vmem:[#allocation6 + $0x88] sm:$0xff]
    %v2349 = vld [vmem:[#allocation6 + $0x90] sm:$0xff]
    %v2350 = vld [vmem:[#allocation6 + $0x98] sm:$0xff]
    %v2351 = vld [vmem:[#allocation6 + $0xa0] sm:$0xff]
    %v2352 = vld [vmem:[#allocation6 + $0xa8] sm:$0xff]
    %v2353 = vld [vmem:[#allocation6 + $0xb0] sm:$0xff]
    %v2354 = vld [vmem:[#allocation6 + $0xb8] sm:$0xff]
    %v2355 = vld [vmem:[#allocation6 + $0xc0] sm:$0xff]
    %v2356 = vld [vmem:[#allocation6 + $0xc8] sm:$0xff]
    %v2357 = vld [vmem:[#allocation6 + $0xd0] sm:$0xff]
    %v2358 = vld [vmem:[#allocation6 + $0xd8] sm:$0xff]
    %v2359 = vld [vmem:[#allocation6 + $0xe0] sm:$0xff]
    %v2360 = vld [vmem:[#allocation6 + $0xe8] sm:$0xff]
    %v2361 = vld [vmem:[#allocation6 + $0xf0] sm:$0xff]
    %v2362 = vld [vmem:[#allocation6 + $0xf8] sm:$0xff]
    %v2363 = vld [vmem:[%s6] sm:$0x1]
    %v2365 = vlaneseq
    %v2366 = vshrl.u32 %v2365, 7
    %v2367 = vsub.s32 0, %v2366
    %v2368 = vrot.slane %v2363, %v2367
    %2370 = vmatprep.subr.mxu0 0.0
    %v2371 = vand.u32 %v2331, 4294901760
    %2372 = vmatpush1.msra.mxu0 %v2371
    %2373 = vmatprep.subr.mxu0 0.0
    %v2374 = vand.u32 %v2332, 4294901760
    %2375 = vmatpush1.msra.mxu0 %v2374
    %2376 = vmatprep.subr.mxu0 0.0
    %v2377 = vand.u32 %v2333, 4294901760
    %2378 = vmatpush1.msra.mxu0 %v2377
    %2379 = vmatprep.subr.mxu0 0.0
    %v2380 = vand.u32 %v2334, 4294901760
    %2381 = vmatpush1.msra.mxu0 %v2380
    %2382 = vmatprep.subr.mxu0 0.0
    %v2383 = vand.u32 %v2335, 4294901760
    %2384 = vmatpush1.msra.mxu0 %v2383
    %2385 = vmatprep.subr.mxu0 0.0
    %v2386 = vand.u32 %v2336, 4294901760
    %2387 = vmatpush1.msra.mxu0 %v2386
    %2388 = vmatprep.subr.mxu0 0.0
    %v2389 = vand.u32 %v2337, 4294901760
    %2390 = vmatpush1.msra.mxu0 %v2389
    %2391 = vmatprep.subr.mxu0 0.0
    %v2392 = vand.u32 %v2338, 4294901760
    %2393 = vmatpush1.msra.mxu0 %v2392
    %2394 = vmatprep.subr.mxu0 0.0
    %v2395 = vand.u32 %v2339, 4294901760
    %2396 = vmatpush1.msra.mxu0 %v2395
    %2397 = vmatprep.subr.mxu0 0.0
    %v2398 = vand.u32 %v2340, 4294901760
    %2399 = vmatpush1.msra.mxu0 %v2398
    %2400 = vmatprep.subr.mxu0 0.0
    %v2401 = vand.u32 %v2341, 4294901760
    %2402 = vmatpush1.msra.mxu0 %v2401
    %2403 = vmatprep.subr.mxu0 0.0
    %v2404 = vand.u32 %v2342, 4294901760
    %2405 = vmatpush1.msra.mxu0 %v2404
    %2406 = vmatprep.subr.mxu0 0.0
    %v2407 = vand.u32 %v2343, 4294901760
    %2408 = vmatpush1.msra.mxu0 %v2407
    %2409 = vmatprep.subr.mxu0 0.0
    %v2410 = vand.u32 %v2344, 4294901760
    %2411 = vmatpush1.msra.mxu0 %v2410
    %2412 = vmatprep.subr.mxu0 0.0
    %v2413 = vand.u32 %v2345, 4294901760
    %2414 = vmatpush1.msra.mxu0 %v2413
    %2415 = vmatprep.subr.mxu0 0.0
    %v2416 = vand.u32 %v2346, 4294901760
    %2417 = vmatpush1.msra.mxu0 %v2416
    %2418 = vmatprep.subr.mxu0 0.0
    %v2419 = vand.u32 %v2347, 4294901760
    %2420 = vmatpush1.msra.mxu0 %v2419
    %2421 = vmatprep.subr.mxu0 0.0
    %v2422 = vand.u32 %v2348, 4294901760
    %2423 = vmatpush1.msra.mxu0 %v2422
    %2424 = vmatprep.subr.mxu0 0.0
    %v2425 = vand.u32 %v2349, 4294901760
    %2426 = vmatpush1.msra.mxu0 %v2425
    %2427 = vmatprep.subr.mxu0 0.0
    %v2428 = vand.u32 %v2350, 4294901760
    %2429 = vmatpush1.msra.mxu0 %v2428
    %2430 = vmatprep.subr.mxu0 0.0
    %v2431 = vand.u32 %v2351, 4294901760
    %2432 = vmatpush1.msra.mxu0 %v2431
    %2433 = vmatprep.subr.mxu0 0.0
    %v2434 = vand.u32 %v2352, 4294901760
    %2435 = vmatpush1.msra.mxu0 %v2434
    %2436 = vmatprep.subr.mxu0 0.0
    %v2437 = vand.u32 %v2353, 4294901760
    %2438 = vmatpush1.msra.mxu0 %v2437
    %2439 = vmatprep.subr.mxu0 0.0
    %v2440 = vand.u32 %v2354, 4294901760
    %2441 = vmatpush1.msra.mxu0 %v2440
    %2442 = vmatprep.subr.mxu0 0.0
    %v2443 = vand.u32 %v2355, 4294901760
    %2444 = vmatpush1.msra.mxu0 %v2443
    %2445 = vmatprep.subr.mxu0 0.0
    %v2446 = vand.u32 %v2356, 4294901760
    %2447 = vmatpush1.msra.mxu0 %v2446
    %2448 = vmatprep.subr.mxu0 0.0
    %v2449 = vand.u32 %v2357, 4294901760
    %2450 = vmatpush1.msra.mxu0 %v2449
    %2451 = vmatprep.subr.mxu0 0.0
    %v2452 = vand.u32 %v2358, 4294901760
    %2453 = vmatpush1.msra.mxu0 %v2452
    %2454 = vmatprep.subr.mxu0 0.0
    %v2455 = vand.u32 %v2359, 4294901760
    %2456 = vmatpush1.msra.mxu0 %v2455
    %2457 = vmatprep.subr.mxu0 0.0
    %v2458 = vand.u32 %v2360, 4294901760
    %2459 = vmatpush1.msra.mxu0 %v2458
    %2460 = vmatprep.subr.mxu0 0.0
    %v2461 = vand.u32 %v2361, 4294901760
    %2462 = vmatpush1.msra.mxu0 %v2461
    %2463 = vmatprep.subr.mxu0 0.0
    %v2464 = vand.u32 %v2362, 4294901760
    %2465 = vmatpush1.msra.mxu0 %v2464
    %v2466 = vand.u32 %v2330, 4294901760
    %v2467 = vsub.f32 %v2330, %v2466
    %v2468 = vand.u32 %v2467, 4294901760
    %v2469 = vsub.f32 %v2467, %v2468
    %v2470 = vand.u32 %v2469, 4294901760
    %2471 = vmatprep.mubr.f32.mxu0 %v2470
    %v2472 = vand.u32 %v2329, 4294901760
    %v2473 = vsub.f32 %v2329, %v2472
    %v2474 = vand.u32 %v2473, 4294901760
    %v2475 = vsub.f32 %v2473, %v2474
    %v2476 = vand.u32 %v2475, 4294901760
    %2477 = vmatmul.mubr.f32.gmra.mrb[0].mxu0 %v2476
    %v2478 = vpop.f32.mrb[0].mxu0
    %v2479 = vadd.f32 %v2368, %v2478
    %v2480 = vpop.f32.mrb[0].mxu0
    %2481 = vdwg.mxu0
    %2482 = vmatprep.subr.mxu0 0.0
    %v2483 = vand.u32 %v2331, 4294901760
    %v2484 = vsub.f32 %v2331, %v2483
    %v2485 = vand.u32 %v2484, 4294901760
    %v2486 = vsub.f32 %v2484, %v2485
    %v2487 = vand.u32 %v2486, 4294901760
    %2488 = vmatpush1.msra.mxu0 %v2487
    %2489 = vmatprep.subr.mxu0 0.0
    %v2490 = vand.u32 %v2332, 4294901760
    %v2491 = vsub.f32 %v2332, %v2490
    %v2492 = vand.u32 %v2491, 4294901760
    %v2493 = vsub.f32 %v2491, %v2492
    %v2494 = vand.u32 %v2493, 4294901760
    %2495 = vmatpush1.msra.mxu0 %v2494
    %2496 = vmatprep.subr.mxu0 0.0
    %v2497 = vand.u32 %v2333, 4294901760
    %v2498 = vsub.f32 %v2333, %v2497
    %v2499 = vand.u32 %v2498, 4294901760
    %v2500 = vsub.f32 %v2498, %v2499
    %v2501 = vand.u32 %v2500, 4294901760
    %2502 = vmatpush1.msra.mxu0 %v2501
    %2503 = vmatprep.subr.mxu0 0.0
    %v2504 = vand.u32 %v2334, 4294901760
    %v2505 = vsub.f32 %v2334, %v2504
    %v2506 = vand.u32 %v2505, 4294901760
    %v2507 = vsub.f32 %v2505, %v2506
    %v2508 = vand.u32 %v2507, 4294901760
    %2509 = vmatpush1.msra.mxu0 %v2508
    %2510 = vmatprep.subr.mxu0 0.0
    %v2511 = vand.u32 %v2335, 4294901760
    %v2512 = vsub.f32 %v2335, %v2511
    %v2513 = vand.u32 %v2512, 4294901760
    %v2514 = vsub.f32 %v2512, %v2513
    %v2515 = vand.u32 %v2514, 4294901760
    %2516 = vmatpush1.msra.mxu0 %v2515
    %2517 = vmatprep.subr.mxu0 0.0
    %v2518 = vand.u32 %v2336, 4294901760
    %v2519 = vsub.f32 %v2336, %v2518
    %v2520 = vand.u32 %v2519, 4294901760
    %v2521 = vsub.f32 %v2519, %v2520
    %v2522 = vand.u32 %v2521, 4294901760
    %2523 = vmatpush1.msra.mxu0 %v2522
    %2524 = vmatprep.subr.mxu0 0.0
    %v2525 = vand.u32 %v2337, 4294901760
    %v2526 = vsub.f32 %v2337, %v2525
    %v2527 = vand.u32 %v2526, 4294901760
    %v2528 = vsub.f32 %v2526, %v2527
    %v2529 = vand.u32 %v2528, 4294901760
    %2530 = vmatpush1.msra.mxu0 %v2529
    %2531 = vmatprep.subr.mxu0 0.0
    %v2532 = vand.u32 %v2338, 4294901760
    %v2533 = vsub.f32 %v2338, %v2532
    %v2534 = vand.u32 %v2533, 4294901760
    %v2535 = vsub.f32 %v2533, %v2534
    %v2536 = vand.u32 %v2535, 4294901760
    %2537 = vmatpush1.msra.mxu0 %v2536
    %2538 = vmatprep.subr.mxu0 0.0
    %v2539 = vand.u32 %v2339, 4294901760
    %v2540 = vsub.f32 %v2339, %v2539
    %v2541 = vand.u32 %v2540, 4294901760
    %v2542 = vsub.f32 %v2540, %v2541
    %v2543 = vand.u32 %v2542, 4294901760
    %2544 = vmatpush1.msra.mxu0 %v2543
    %2545 = vmatprep.subr.mxu0 0.0
    %v2546 = vand.u32 %v2340, 4294901760
    %v2547 = vsub.f32 %v2340, %v2546
    %v2548 = vand.u32 %v2547, 4294901760
    %v2549 = vsub.f32 %v2547, %v2548
    %v2550 = vand.u32 %v2549, 4294901760
    %2551 = vmatpush1.msra.mxu0 %v2550
    %2552 = vmatprep.subr.mxu0 0.0
    %v2553 = vand.u32 %v2341, 4294901760
    %v2554 = vsub.f32 %v2341, %v2553
    %v2555 = vand.u32 %v2554, 4294901760
    %v2556 = vsub.f32 %v2554, %v2555
    %v2557 = vand.u32 %v2556, 4294901760
    %2558 = vmatpush1.msra.mxu0 %v2557
    %2559 = vmatprep.subr.mxu0 0.0
    %v2560 = vand.u32 %v2342, 4294901760
    %v2561 = vsub.f32 %v2342, %v2560
    %v2562 = vand.u32 %v2561, 4294901760
    %v2563 = vsub.f32 %v2561, %v2562
    %v2564 = vand.u32 %v2563, 4294901760
    %2565 = vmatpush1.msra.mxu0 %v2564
    %2566 = vmatprep.subr.mxu0 0.0
    %v2567 = vand.u32 %v2343, 4294901760
    %v2568 = vsub.f32 %v2343, %v2567
    %v2569 = vand.u32 %v2568, 4294901760
    %v2570 = vsub.f32 %v2568, %v2569
    %v2571 = vand.u32 %v2570, 4294901760
    %2572 = vmatpush1.msra.mxu0 %v2571
    %2573 = vmatprep.subr.mxu0 0.0
    %v2574 = vand.u32 %v2344, 4294901760
    %v2575 = vsub.f32 %v2344, %v2574
    %v2576 = vand.u32 %v2575, 4294901760
    %v2577 = vsub.f32 %v2575, %v2576
    %v2578 = vand.u32 %v2577, 4294901760
    %2579 = vmatpush1.msra.mxu0 %v2578
    %2580 = vmatprep.subr.mxu0 0.0
    %v2581 = vand.u32 %v2345, 4294901760
    %v2582 = vsub.f32 %v2345, %v2581
    %v2583 = vand.u32 %v2582, 4294901760
    %v2584 = vsub.f32 %v2582, %v2583
    %v2585 = vand.u32 %v2584, 4294901760
    %2586 = vmatpush1.msra.mxu0 %v2585
    %2587 = vmatprep.subr.mxu0 0.0
    %v2588 = vand.u32 %v2346, 4294901760
    %v2589 = vsub.f32 %v2346, %v2588
    %v2590 = vand.u32 %v2589, 4294901760
    %v2591 = vsub.f32 %v2589, %v2590
    %v2592 = vand.u32 %v2591, 4294901760
    %2593 = vmatpush1.msra.mxu0 %v2592
    %2594 = vmatprep.subr.mxu0 0.0
    %v2595 = vand.u32 %v2347, 4294901760
    %v2596 = vsub.f32 %v2347, %v2595
    %v2597 = vand.u32 %v2596, 4294901760
    %v2598 = vsub.f32 %v2596, %v2597
    %v2599 = vand.u32 %v2598, 4294901760
    %2600 = vmatpush1.msra.mxu0 %v2599
    %2601 = vmatprep.subr.mxu0 0.0
    %v2602 = vand.u32 %v2348, 4294901760
    %v2603 = vsub.f32 %v2348, %v2602
    %v2604 = vand.u32 %v2603, 4294901760
    %v2605 = vsub.f32 %v2603, %v2604
    %v2606 = vand.u32 %v2605, 4294901760
    %2607 = vmatpush1.msra.mxu0 %v2606
    %2608 = vmatprep.subr.mxu0 0.0
    %v2609 = vand.u32 %v2349, 4294901760
    %v2610 = vsub.f32 %v2349, %v2609
    %v2611 = vand.u32 %v2610, 4294901760
    %v2612 = vsub.f32 %v2610, %v2611
    %v2613 = vand.u32 %v2612, 4294901760
    %2614 = vmatpush1.msra.mxu0 %v2613
    %2615 = vmatprep.subr.mxu0 0.0
    %v2616 = vand.u32 %v2350, 4294901760
    %v2617 = vsub.f32 %v2350, %v2616
    %v2618 = vand.u32 %v2617, 4294901760
    %v2619 = vsub.f32 %v2617, %v2618
    %v2620 = vand.u32 %v2619, 4294901760
    %2621 = vmatpush1.msra.mxu0 %v2620
    %2622 = vmatprep.subr.mxu0 0.0
    %v2623 = vand.u32 %v2351, 4294901760
    %v2624 = vsub.f32 %v2351, %v2623
    %v2625 = vand.u32 %v2624, 4294901760
    %v2626 = vsub.f32 %v2624, %v2625
    %v2627 = vand.u32 %v2626, 4294901760
    %2628 = vmatpush1.msra.mxu0 %v2627
    %2629 = vmatprep.subr.mxu0 0.0
    %v2630 = vand.u32 %v2352, 4294901760
    %v2631 = vsub.f32 %v2352, %v2630
    %v2632 = vand.u32 %v2631, 4294901760
    %v2633 = vsub.f32 %v2631, %v2632
    %v2634 = vand.u32 %v2633, 4294901760
    %2635 = vmatpush1.msra.mxu0 %v2634
    %2636 = vmatprep.subr.mxu0 0.0
    %v2637 = vand.u32 %v2353, 4294901760
    %v2638 = vsub.f32 %v2353, %v2637
    %v2639 = vand.u32 %v2638, 4294901760
    %v2640 = vsub.f32 %v2638, %v2639
    %v2641 = vand.u32 %v2640, 4294901760
    %2642 = vmatpush1.msra.mxu0 %v2641
    %2643 = vmatprep.subr.mxu0 0.0
    %v2644 = vand.u32 %v2354, 4294901760
    %v2645 = vsub.f32 %v2354, %v2644
    %v2646 = vand.u32 %v2645, 4294901760
    %v2647 = vsub.f32 %v2645, %v2646
    %v2648 = vand.u32 %v2647, 4294901760
    %2649 = vmatpush1.msra.mxu0 %v2648
    %2650 = vmatprep.subr.mxu0 0.0
    %v2651 = vand.u32 %v2355, 4294901760
    %v2652 = vsub.f32 %v2355, %v2651
    %v2653 = vand.u32 %v2652, 4294901760
    %v2654 = vsub.f32 %v2652, %v2653
    %v2655 = vand.u32 %v2654, 4294901760
    %2656 = vmatpush1.msra.mxu0 %v2655
    %2657 = vmatprep.subr.mxu0 0.0
    %v2658 = vand.u32 %v2356, 4294901760
    %v2659 = vsub.f32 %v2356, %v2658
    %v2660 = vand.u32 %v2659, 4294901760
    %v2661 = vsub.f32 %v2659, %v2660
    %v2662 = vand.u32 %v2661, 4294901760
    %2663 = vmatpush1.msra.mxu0 %v2662
    %2664 = vmatprep.subr.mxu0 0.0
    %v2665 = vand.u32 %v2357, 4294901760
    %v2666 = vsub.f32 %v2357, %v2665
    %v2667 = vand.u32 %v2666, 4294901760
    %v2668 = vsub.f32 %v2666, %v2667
    %v2669 = vand.u32 %v2668, 4294901760
    %2670 = vmatpush1.msra.mxu0 %v2669
    %2671 = vmatprep.subr.mxu0 0.0
    %v2672 = vand.u32 %v2358, 4294901760
    %v2673 = vsub.f32 %v2358, %v2672
    %v2674 = vand.u32 %v2673, 4294901760
    %v2675 = vsub.f32 %v2673, %v2674
    %v2676 = vand.u32 %v2675, 4294901760
    %2677 = vmatpush1.msra.mxu0 %v2676
    %2678 = vmatprep.subr.mxu0 0.0
    %v2679 = vand.u32 %v2359, 4294901760
    %v2680 = vsub.f32 %v2359, %v2679
    %v2681 = vand.u32 %v2680, 4294901760
    %v2682 = vsub.f32 %v2680, %v2681
    %v2683 = vand.u32 %v2682, 4294901760
    %2684 = vmatpush1.msra.mxu0 %v2683
    %2685 = vmatprep.subr.mxu0 0.0
    %v2686 = vand.u32 %v2360, 4294901760
    %v2687 = vsub.f32 %v2360, %v2686
    %v2688 = vand.u32 %v2687, 4294901760
    %v2689 = vsub.f32 %v2687, %v2688
    %v2690 = vand.u32 %v2689, 4294901760
    %2691 = vmatpush1.msra.mxu0 %v2690
    %2692 = vmatprep.subr.mxu0 0.0
    %v2693 = vand.u32 %v2361, 4294901760
    %v2694 = vsub.f32 %v2361, %v2693
    %v2695 = vand.u32 %v2694, 4294901760
    %v2696 = vsub.f32 %v2694, %v2695
    %v2697 = vand.u32 %v2696, 4294901760
    %2698 = vmatpush1.msra.mxu0 %v2697
    %2699 = vmatprep.subr.mxu0 0.0
    %v2700 = vand.u32 %v2362, 4294901760
    %v2701 = vsub.f32 %v2362, %v2700
    %v2702 = vand.u32 %v2701, 4294901760
    %v2703 = vsub.f32 %v2701, %v2702
    %v2704 = vand.u32 %v2703, 4294901760
    %2705 = vmatpush1.msra.mxu0 %v2704
    %v2706 = vand.u32 %v2330, 4294901760
    %2707 = vmatprep.mubr.f32.mxu0 %v2706
    %v2708 = vand.u32 %v2329, 4294901760
    %2709 = vmatmul.mubr.f32.gmra.mrb[0].mxu0 %v2708
    %v2710 = vpop.f32.mrb[0].mxu0
    %v2711 = vadd.f32 %v2479, %v2710
    %v2712 = vpop.f32.mrb[0].mxu0
    %2713 = vdwg.mxu0
    %2714 = vmatprep.subr.mxu0 0.0
    %v2715 = vand.u32 %v2331, 4294901760
    %v2716 = vsub.f32 %v2331, %v2715
    %2717 = vmatpush1.msra.mxu0 %v2716
    %2718 = vmatprep.subr.mxu0 0.0
    %v2719 = vand.u32 %v2332, 4294901760
    %v2720 = vsub.f32 %v2332, %v2719
    %2721 = vmatpush1.msra.mxu0 %v2720
    %2722 = vmatprep.subr.mxu0 0.0
    %v2723 = vand.u32 %v2333, 4294901760
    %v2724 = vsub.f32 %v2333, %v2723
    %2725 = vmatpush1.msra.mxu0 %v2724
    %2726 = vmatprep.subr.mxu0 0.0
    %v2727 = vand.u32 %v2334, 4294901760
    %v2728 = vsub.f32 %v2334, %v2727
    %2729 = vmatpush1.msra.mxu0 %v2728
    %2730 = vmatprep.subr.mxu0 0.0
    %v2731 = vand.u32 %v2335, 4294901760
    %v2732 = vsub.f32 %v2335, %v2731
    %2733 = vmatpush1.msra.mxu0 %v2732
    %2734 = vmatprep.subr.mxu0 0.0
    %v2735 = vand.u32 %v2336, 4294901760
    %v2736 = vsub.f32 %v2336, %v2735
    %2737 = vmatpush1.msra.mxu0 %v2736
    %2738 = vmatprep.subr.mxu0 0.0
    %v2739 = vand.u32 %v2337, 4294901760
    %v2740 = vsub.f32 %v2337, %v2739
    %2741 = vmatpush1.msra.mxu0 %v2740
    %2742 = vmatprep.subr.mxu0 0.0
    %v2743 = vand.u32 %v2338, 4294901760
    %v2744 = vsub.f32 %v2338, %v2743
    %2745 = vmatpush1.msra.mxu0 %v2744
    %2746 = vmatprep.subr.mxu0 0.0
    %v2747 = vand.u32 %v2339, 4294901760
    %v2748 = vsub.f32 %v2339, %v2747
    %2749 = vmatpush1.msra.mxu0 %v2748
    %2750 = vmatprep.subr.mxu0 0.0
    %v2751 = vand.u32 %v2340, 4294901760
    %v2752 = vsub.f32 %v2340, %v2751
    %2753 = vmatpush1.msra.mxu0 %v2752
    %2754 = vmatprep.subr.mxu0 0.0
    %v2755 = vand.u32 %v2341, 4294901760
    %v2756 = vsub.f32 %v2341, %v2755
    %2757 = vmatpush1.msra.mxu0 %v2756
    %2758 = vmatprep.subr.mxu0 0.0
    %v2759 = vand.u32 %v2342, 4294901760
    %v2760 = vsub.f32 %v2342, %v2759
    %2761 = vmatpush1.msra.mxu0 %v2760
    %2762 = vmatprep.subr.mxu0 0.0
    %v2763 = vand.u32 %v2343, 4294901760
    %v2764 = vsub.f32 %v2343, %v2763
    %2765 = vmatpush1.msra.mxu0 %v2764
    %2766 = vmatprep.subr.mxu0 0.0
    %v2767 = vand.u32 %v2344, 4294901760
    %v2768 = vsub.f32 %v2344, %v2767
    %2769 = vmatpush1.msra.mxu0 %v2768
    %2770 = vmatprep.subr.mxu0 0.0
    %v2771 = vand.u32 %v2345, 4294901760
    %v2772 = vsub.f32 %v2345, %v2771
    %2773 = vmatpush1.msra.mxu0 %v2772
    %2774 = vmatprep.subr.mxu0 0.0
    %v2775 = vand.u32 %v2346, 4294901760
    %v2776 = vsub.f32 %v2346, %v2775
    %2777 = vmatpush1.msra.mxu0 %v2776
    %2778 = vmatprep.subr.mxu0 0.0
    %v2779 = vand.u32 %v2347, 4294901760
    %v2780 = vsub.f32 %v2347, %v2779
    %2781 = vmatpush1.msra.mxu0 %v2780
    %2782 = vmatprep.subr.mxu0 0.0
    %v2783 = vand.u32 %v2348, 4294901760
    %v2784 = vsub.f32 %v2348, %v2783
    %2785 = vmatpush1.msra.mxu0 %v2784
    %2786 = vmatprep.subr.mxu0 0.0
    %v2787 = vand.u32 %v2349, 4294901760
    %v2788 = vsub.f32 %v2349, %v2787
    %2789 = vmatpush1.msra.mxu0 %v2788
    %2790 = vmatprep.subr.mxu0 0.0
    %v2791 = vand.u32 %v2350, 4294901760
    %v2792 = vsub.f32 %v2350, %v2791
    %2793 = vmatpush1.msra.mxu0 %v2792
    %2794 = vmatprep.subr.mxu0 0.0
    %v2795 = vand.u32 %v2351, 4294901760
    %v2796 = vsub.f32 %v2351, %v2795
    %2797 = vmatpush1.msra.mxu0 %v2796
    %2798 = vmatprep.subr.mxu0 0.0
    %v2799 = vand.u32 %v2352, 4294901760
    %v2800 = vsub.f32 %v2352, %v2799
    %2801 = vmatpush1.msra.mxu0 %v2800
    %2802 = vmatprep.subr.mxu0 0.0
    %v2803 = vand.u32 %v2353, 4294901760
    %v2804 = vsub.f32 %v2353, %v2803
    %2805 = vmatpush1.msra.mxu0 %v2804
    %2806 = vmatprep.subr.mxu0 0.0
    %v2807 = vand.u32 %v2354, 4294901760
    %v2808 = vsub.f32 %v2354, %v2807
    %2809 = vmatpush1.msra.mxu0 %v2808
    %2810 = vmatprep.subr.mxu0 0.0
    %v2811 = vand.u32 %v2355, 4294901760
    %v2812 = vsub.f32 %v2355, %v2811
    %2813 = vmatpush1.msra.mxu0 %v2812
    %2814 = vmatprep.subr.mxu0 0.0
    %v2815 = vand.u32 %v2356, 4294901760
    %v2816 = vsub.f32 %v2356, %v2815
    %2817 = vmatpush1.msra.mxu0 %v2816
    %2818 = vmatprep.subr.mxu0 0.0
    %v2819 = vand.u32 %v2357, 4294901760
    %v2820 = vsub.f32 %v2357, %v2819
    %2821 = vmatpush1.msra.mxu0 %v2820
    %2822 = vmatprep.subr.mxu0 0.0
    %v2823 = vand.u32 %v2358, 4294901760
    %v2824 = vsub.f32 %v2358, %v2823
    %2825 = vmatpush1.msra.mxu0 %v2824
    %2826 = vmatprep.subr.mxu0 0.0
    %v2827 = vand.u32 %v2359, 4294901760
    %v2828 = vsub.f32 %v2359, %v2827
    %2829 = vmatpush1.msra.mxu0 %v2828
    %2830 = vmatprep.subr.mxu0 0.0
    %v2831 = vand.u32 %v2360, 4294901760
    %v2832 = vsub.f32 %v2360, %v2831
    %2833 = vmatpush1.msra.mxu0 %v2832
    %2834 = vmatprep.subr.mxu0 0.0
    %v2835 = vand.u32 %v2361, 4294901760
    %v2836 = vsub.f32 %v2361, %v2835
    %2837 = vmatpush1.msra.mxu0 %v2836
    %2838 = vmatprep.subr.mxu0 0.0
    %v2839 = vand.u32 %v2362, 4294901760
    %v2840 = vsub.f32 %v2362, %v2839
    %2841 = vmatpush1.msra.mxu0 %v2840
    %v2842 = vand.u32 %v2330, 4294901760
    %v2843 = vsub.f32 %v2330, %v2842
    %2844 = vmatprep.mubr.f32.mxu0 %v2843
    %v2845 = vand.u32 %v2329, 4294901760
    %v2846 = vsub.f32 %v2329, %v2845
    %2847 = vmatmul.mubr.f32.gmra.mrb[0].mxu0 %v2846
    %v2848 = vpop.f32.mrb[0].mxu0
    %v2849 = vadd.f32 %v2711, %v2848
    %v2850 = vpop.f32.mrb[0].mxu0
    %2851 = vdwg.mxu0
    %2852 = vmatprep.subr.mxu0 0.0
    %v2853 = vand.u32 %v2331, 4294901760
    %2854 = vmatpush1.msra.mxu0 %v2853
    %2855 = vmatprep.subr.mxu0 0.0
    %v2856 = vand.u32 %v2332, 4294901760
    %2857 = vmatpush1.msra.mxu0 %v2856
    %2858 = vmatprep.subr.mxu0 0.0
    %v2859 = vand.u32 %v2333, 4294901760
    %2860 = vmatpush1.msra.mxu0 %v2859
    %2861 = vmatprep.subr.mxu0 0.0
    %v2862 = vand.u32 %v2334, 4294901760
    %2863 = vmatpush1.msra.mxu0 %v2862
    %2864 = vmatprep.subr.mxu0 0.0
    %v2865 = vand.u32 %v2335, 4294901760
    %2866 = vmatpush1.msra.mxu0 %v2865
    %2867 = vmatprep.subr.mxu0 0.0
    %v2868 = vand.u32 %v2336, 4294901760
    %2869 = vmatpush1.msra.mxu0 %v2868
    %2870 = vmatprep.subr.mxu0 0.0
    %v2871 = vand.u32 %v2337, 4294901760
    %2872 = vmatpush1.msra.mxu0 %v2871
    %2873 = vmatprep.subr.mxu0 0.0
    %v2874 = vand.u32 %v2338, 4294901760
    %2875 = vmatpush1.msra.mxu0 %v2874
    %2876 = vmatprep.subr.mxu0 0.0
    %v2877 = vand.u32 %v2339, 4294901760
    %2878 = vmatpush1.msra.mxu0 %v2877
    %2879 = vmatprep.subr.mxu0 0.0
    %v2880 = vand.u32 %v2340, 4294901760
    %2881 = vmatpush1.msra.mxu0 %v2880
    %2882 = vmatprep.subr.mxu0 0.0
    %v2883 = vand.u32 %v2341, 4294901760
    %2884 = vmatpush1.msra.mxu0 %v2883
    %2885 = vmatprep.subr.mxu0 0.0
    %v2886 = vand.u32 %v2342, 4294901760
    %2887 = vmatpush1.msra.mxu0 %v2886
    %2888 = vmatprep.subr.mxu0 0.0
    %v2889 = vand.u32 %v2343, 4294901760
    %2890 = vmatpush1.msra.mxu0 %v2889
    %2891 = vmatprep.subr.mxu0 0.0
    %v2892 = vand.u32 %v2344, 4294901760
    %2893 = vmatpush1.msra.mxu0 %v2892
    %2894 = vmatprep.subr.mxu0 0.0
    %v2895 = vand.u32 %v2345, 4294901760
    %2896 = vmatpush1.msra.mxu0 %v2895
    %2897 = vmatprep.subr.mxu0 0.0
    %v2898 = vand.u32 %v2346, 4294901760
    %2899 = vmatpush1.msra.mxu0 %v2898
    %2900 = vmatprep.subr.mxu0 0.0
    %v2901 = vand.u32 %v2347, 4294901760
    %2902 = vmatpush1.msra.mxu0 %v2901
    %2903 = vmatprep.subr.mxu0 0.0
    %v2904 = vand.u32 %v2348, 4294901760
    %2905 = vmatpush1.msra.mxu0 %v2904
    %2906 = vmatprep.subr.mxu0 0.0
    %v2907 = vand.u32 %v2349, 4294901760
    %2908 = vmatpush1.msra.mxu0 %v2907
    %2909 = vmatprep.subr.mxu0 0.0
    %v2910 = vand.u32 %v2350, 4294901760
    %2911 = vmatpush1.msra.mxu0 %v2910
    %2912 = vmatprep.subr.mxu0 0.0
    %v2913 = vand.u32 %v2351, 4294901760
    %2914 = vmatpush1.msra.mxu0 %v2913
    %2915 = vmatprep.subr.mxu0 0.0
    %v2916 = vand.u32 %v2352, 4294901760
    %2917 = vmatpush1.msra.mxu0 %v2916
    %2918 = vmatprep.subr.mxu0 0.0
    %v2919 = vand.u32 %v2353, 4294901760
    %2920 = vmatpush1.msra.mxu0 %v2919
    %2921 = vmatprep.subr.mxu0 0.0
    %v2922 = vand.u32 %v2354, 4294901760
    %2923 = vmatpush1.msra.mxu0 %v2922
    %2924 = vmatprep.subr.mxu0 0.0
    %v2925 = vand.u32 %v2355, 4294901760
    %2926 = vmatpush1.msra.mxu0 %v2925
    %2927 = vmatprep.subr.mxu0 0.0
    %v2928 = vand.u32 %v2356, 4294901760
    %2929 = vmatpush1.msra.mxu0 %v2928
    %2930 = vmatprep.subr.mxu0 0.0
    %v2931 = vand.u32 %v2357, 4294901760
    %2932 = vmatpush1.msra.mxu0 %v2931
    %2933 = vmatprep.subr.mxu0 0.0
    %v2934 = vand.u32 %v2358, 4294901760
    %2935 = vmatpush1.msra.mxu0 %v2934
    %2936 = vmatprep.subr.mxu0 0.0
    %v2937 = vand.u32 %v2359, 4294901760
    %2938 = vmatpush1.msra.mxu0 %v2937
    %2939 = vmatprep.subr.mxu0 0.0
    %v2940 = vand.u32 %v2360, 4294901760
    %2941 = vmatpush1.msra.mxu0 %v2940
    %2942 = vmatprep.subr.mxu0 0.0
    %v2943 = vand.u32 %v2361, 4294901760
    %2944 = vmatpush1.msra.mxu0 %v2943
    %2945 = vmatprep.subr.mxu0 0.0
    %v2946 = vand.u32 %v2362, 4294901760
    %2947 = vmatpush1.msra.mxu0 %v2946
    %v2948 = vand.u32 %v2330, 4294901760
    %v2949 = vsub.f32 %v2330, %v2948
    %v2950 = vand.u32 %v2949, 4294901760
    %2951 = vmatprep.mubr.f32.mxu0 %v2950
    %v2952 = vand.u32 %v2329, 4294901760
    %v2953 = vsub.f32 %v2329, %v2952
    %v2954 = vand.u32 %v2953, 4294901760
    %2955 = vmatmul.mubr.f32.gmra.mrb[0].mxu0 %v2954
    %v2956 = vpop.f32.mrb[0].mxu0
    %v2957 = vadd.f32 %v2849, %v2956
    %v2958 = vpop.f32.mrb[0].mxu0
    %2959 = vdwg.mxu0
    %2960 = vmatprep.subr.mxu0 0.0
    %v2961 = vand.u32 %v2331, 4294901760
    %v2962 = vsub.f32 %v2331, %v2961
    %v2963 = vand.u32 %v2962, 4294901760
    %2964 = vmatpush1.msra.mxu0 %v2963
    %2965 = vmatprep.subr.mxu0 0.0
    %v2966 = vand.u32 %v2332, 4294901760
    %v2967 = vsub.f32 %v2332, %v2966
    %v2968 = vand.u32 %v2967, 4294901760
    %2969 = vmatpush1.msra.mxu0 %v2968
    %2970 = vmatprep.subr.mxu0 0.0
    %v2971 = vand.u32 %v2333, 4294901760
    %v2972 = vsub.f32 %v2333, %v2971
    %v2973 = vand.u32 %v2972, 4294901760
    %2974 = vmatpush1.msra.mxu0 %v2973
    %2975 = vmatprep.subr.mxu0 0.0
    %v2976 = vand.u32 %v2334, 4294901760
    %v2977 = vsub.f32 %v2334, %v2976
    %v2978 = vand.u32 %v2977, 4294901760
    %2979 = vmatpush1.msra.mxu0 %v2978
    %2980 = vmatprep.subr.mxu0 0.0
    %v2981 = vand.u32 %v2335, 4294901760
    %v2982 = vsub.f32 %v2335, %v2981
    %v2983 = vand.u32 %v2982, 4294901760
    %2984 = vmatpush1.msra.mxu0 %v2983
    %2985 = vmatprep.subr.mxu0 0.0
    %v2986 = vand.u32 %v2336, 4294901760
    %v2987 = vsub.f32 %v2336, %v2986
    %v2988 = vand.u32 %v2987, 4294901760
    %2989 = vmatpush1.msra.mxu0 %v2988
    %2990 = vmatprep.subr.mxu0 0.0
    %v2991 = vand.u32 %v2337, 4294901760
    %v2992 = vsub.f32 %v2337, %v2991
    %v2993 = vand.u32 %v2992, 4294901760
    %2994 = vmatpush1.msra.mxu0 %v2993
    %2995 = vmatprep.subr.mxu0 0.0
    %v2996 = vand.u32 %v2338, 4294901760
    %v2997 = vsub.f32 %v2338, %v2996
    %v2998 = vand.u32 %v2997, 4294901760
    %2999 = vmatpush1.msra.mxu0 %v2998
    %3000 = vmatprep.subr.mxu0 0.0
    %v3001 = vand.u32 %v2339, 4294901760
    %v3002 = vsub.f32 %v2339, %v3001
    %v3003 = vand.u32 %v3002, 4294901760
    %3004 = vmatpush1.msra.mxu0 %v3003
    %3005 = vmatprep.subr.mxu0 0.0
    %v3006 = vand.u32 %v2340, 4294901760
    %v3007 = vsub.f32 %v2340, %v3006
    %v3008 = vand.u32 %v3007, 4294901760
    %3009 = vmatpush1.msra.mxu0 %v3008
    %3010 = vmatprep.subr.mxu0 0.0
    %v3011 = vand.u32 %v2341, 4294901760
    %v3012 = vsub.f32 %v2341, %v3011
    %v3013 = vand.u32 %v3012, 4294901760
    %3014 = vmatpush1.msra.mxu0 %v3013
    %3015 = vmatprep.subr.mxu0 0.0
    %v3016 = vand.u32 %v2342, 4294901760
    %v3017 = vsub.f32 %v2342, %v3016
    %v3018 = vand.u32 %v3017, 4294901760
    %3019 = vmatpush1.msra.mxu0 %v3018
    %3020 = vmatprep.subr.mxu0 0.0
    %v3021 = vand.u32 %v2343, 4294901760
    %v3022 = vsub.f32 %v2343, %v3021
    %v3023 = vand.u32 %v3022, 4294901760
    %3024 = vmatpush1.msra.mxu0 %v3023
    %3025 = vmatprep.subr.mxu0 0.0
    %v3026 = vand.u32 %v2344, 4294901760
    %v3027 = vsub.f32 %v2344, %v3026
    %v3028 = vand.u32 %v3027, 4294901760
    %3029 = vmatpush1.msra.mxu0 %v3028
    %3030 = vmatprep.subr.mxu0 0.0
    %v3031 = vand.u32 %v2345, 4294901760
    %v3032 = vsub.f32 %v2345, %v3031
    %v3033 = vand.u32 %v3032, 4294901760
    %3034 = vmatpush1.msra.mxu0 %v3033
    %3035 = vmatprep.subr.mxu0 0.0
    %v3036 = vand.u32 %v2346, 4294901760
    %v3037 = vsub.f32 %v2346, %v3036
    %v3038 = vand.u32 %v3037, 4294901760
    %3039 = vmatpush1.msra.mxu0 %v3038
    %3040 = vmatprep.subr.mxu0 0.0
    %v3041 = vand.u32 %v2347, 4294901760
    %v3042 = vsub.f32 %v2347, %v3041
    %v3043 = vand.u32 %v3042, 4294901760
    %3044 = vmatpush1.msra.mxu0 %v3043
    %3045 = vmatprep.subr.mxu0 0.0
    %v3046 = vand.u32 %v2348, 4294901760
    %v3047 = vsub.f32 %v2348, %v3046
    %v3048 = vand.u32 %v3047, 4294901760
    %3049 = vmatpush1.msra.mxu0 %v3048
    %3050 = vmatprep.subr.mxu0 0.0
    %v3051 = vand.u32 %v2349, 4294901760
    %v3052 = vsub.f32 %v2349, %v3051
    %v3053 = vand.u32 %v3052, 4294901760
    %3054 = vmatpush1.msra.mxu0 %v3053
    %3055 = vmatprep.subr.mxu0 0.0
    %v3056 = vand.u32 %v2350, 4294901760
    %v3057 = vsub.f32 %v2350, %v3056
    %v3058 = vand.u32 %v3057, 4294901760
    %3059 = vmatpush1.msra.mxu0 %v3058
    %3060 = vmatprep.subr.mxu0 0.0
    %v3061 = vand.u32 %v2351, 4294901760
    %v3062 = vsub.f32 %v2351, %v3061
    %v3063 = vand.u32 %v3062, 4294901760
    %3064 = vmatpush1.msra.mxu0 %v3063
    %3065 = vmatprep.subr.mxu0 0.0
    %v3066 = vand.u32 %v2352, 4294901760
    %v3067 = vsub.f32 %v2352, %v3066
    %v3068 = vand.u32 %v3067, 4294901760
    %3069 = vmatpush1.msra.mxu0 %v3068
    %3070 = vmatprep.subr.mxu0 0.0
    %v3071 = vand.u32 %v2353, 4294901760
    %v3072 = vsub.f32 %v2353, %v3071
    %v3073 = vand.u32 %v3072, 4294901760
    %3074 = vmatpush1.msra.mxu0 %v3073
    %3075 = vmatprep.subr.mxu0 0.0
    %v3076 = vand.u32 %v2354, 4294901760
    %v3077 = vsub.f32 %v2354, %v3076
    %v3078 = vand.u32 %v3077, 4294901760
    %3079 = vmatpush1.msra.mxu0 %v3078
    %3080 = vmatprep.subr.mxu0 0.0
    %v3081 = vand.u32 %v2355, 4294901760
    %v3082 = vsub.f32 %v2355, %v3081
    %v3083 = vand.u32 %v3082, 4294901760
    %3084 = vmatpush1.msra.mxu0 %v3083
    %3085 = vmatprep.subr.mxu0 0.0
    %v3086 = vand.u32 %v2356, 4294901760
    %v3087 = vsub.f32 %v2356, %v3086
    %v3088 = vand.u32 %v3087, 4294901760
    %3089 = vmatpush1.msra.mxu0 %v3088
    %3090 = vmatprep.subr.mxu0 0.0
    %v3091 = vand.u32 %v2357, 4294901760
    %v3092 = vsub.f32 %v2357, %v3091
    %v3093 = vand.u32 %v3092, 4294901760
    %3094 = vmatpush1.msra.mxu0 %v3093
    %3095 = vmatprep.subr.mxu0 0.0
    %v3096 = vand.u32 %v2358, 4294901760
    %v3097 = vsub.f32 %v2358, %v3096
    %v3098 = vand.u32 %v3097, 4294901760
    %3099 = vmatpush1.msra.mxu0 %v3098
    %3100 = vmatprep.subr.mxu0 0.0
    %v3101 = vand.u32 %v2359, 4294901760
    %v3102 = vsub.f32 %v2359, %v3101
    %v3103 = vand.u32 %v3102, 4294901760
    %3104 = vmatpush1.msra.mxu0 %v3103
    %3105 = vmatprep.subr.mxu0 0.0
    %v3106 = vand.u32 %v2360, 4294901760
    %v3107 = vsub.f32 %v2360, %v3106
    %v3108 = vand.u32 %v3107, 4294901760
    %3109 = vmatpush1.msra.mxu0 %v3108
    %3110 = vmatprep.subr.mxu0 0.0
    %v3111 = vand.u32 %v2361, 4294901760
    %v3112 = vsub.f32 %v2361, %v3111
    %v3113 = vand.u32 %v3112, 4294901760
    %3114 = vmatpush1.msra.mxu0 %v3113
    %3115 = vmatprep.subr.mxu0 0.0
    %v3116 = vand.u32 %v2362, 4294901760
    %v3117 = vsub.f32 %v2362, %v3116
    %v3118 = vand.u32 %v3117, 4294901760
    %3119 = vmatpush1.msra.mxu0 %v3118
    %v3120 = vand.u32 %v2330, 4294901760
    %3121 = vmatprep.mubr.f32.mxu0 %v3120
    %v3122 = vand.u32 %v2329, 4294901760
    %3123 = vmatmul.mubr.f32.gmra.mrb[0].mxu0 %v3122
    %v3124 = vpop.f32.mrb[0].mxu0
    %v3125 = vadd.f32 %v2957, %v3124
    %v3126 = vpop.f32.mrb[0].mxu0
    %3127 = vdwg.mxu0
    %3128 = vmatprep.subr.mxu0 0.0
    %v3129 = vand.u32 %v2331, 4294901760
    %3130 = vmatpush1.msra.mxu0 %v3129
    %3131 = vmatprep.subr.mxu0 0.0
    %v3132 = vand.u32 %v2332, 4294901760
    %3133 = vmatpush1.msra.mxu0 %v3132
    %3134 = vmatprep.subr.mxu0 0.0
    %v3135 = vand.u32 %v2333, 4294901760
    %3136 = vmatpush1.msra.mxu0 %v3135
    %3137 = vmatprep.subr.mxu0 0.0
    %v3138 = vand.u32 %v2334, 4294901760
    %3139 = vmatpush1.msra.mxu0 %v3138
    %3140 = vmatprep.subr.mxu0 0.0
    %v3141 = vand.u32 %v2335, 4294901760
    %3142 = vmatpush1.msra.mxu0 %v3141
    %3143 = vmatprep.subr.mxu0 0.0
    %v3144 = vand.u32 %v2336, 4294901760
    %3145 = vmatpush1.msra.mxu0 %v3144
    %3146 = vmatprep.subr.mxu0 0.0
    %v3147 = vand.u32 %v2337, 4294901760
    %3148 = vmatpush1.msra.mxu0 %v3147
    %3149 = vmatprep.subr.mxu0 0.0
    %v3150 = vand.u32 %v2338, 4294901760
    %3151 = vmatpush1.msra.mxu0 %v3150
    %3152 = vmatprep.subr.mxu0 0.0
    %v3153 = vand.u32 %v2339, 4294901760
    %3154 = vmatpush1.msra.mxu0 %v3153
    %3155 = vmatprep.subr.mxu0 0.0
    %v3156 = vand.u32 %v2340, 4294901760
    %3157 = vmatpush1.msra.mxu0 %v3156
    %3158 = vmatprep.subr.mxu0 0.0
    %v3159 = vand.u32 %v2341, 4294901760
    %3160 = vmatpush1.msra.mxu0 %v3159
    %3161 = vmatprep.subr.mxu0 0.0
    %v3162 = vand.u32 %v2342, 4294901760
    %3163 = vmatpush1.msra.mxu0 %v3162
    %3164 = vmatprep.subr.mxu0 0.0
    %v3165 = vand.u32 %v2343, 4294901760
    %3166 = vmatpush1.msra.mxu0 %v3165
    %3167 = vmatprep.subr.mxu0 0.0
    %v3168 = vand.u32 %v2344, 4294901760
    %3169 = vmatpush1.msra.mxu0 %v3168
    %3170 = vmatprep.subr.mxu0 0.0
    %v3171 = vand.u32 %v2345, 4294901760
    %3172 = vmatpush1.msra.mxu0 %v3171
    %3173 = vmatprep.subr.mxu0 0.0
    %v3174 = vand.u32 %v2346, 4294901760
    %3175 = vmatpush1.msra.mxu0 %v3174
    %3176 = vmatprep.subr.mxu0 0.0
    %v3177 = vand.u32 %v2347, 4294901760
    %3178 = vmatpush1.msra.mxu0 %v3177
    %3179 = vmatprep.subr.mxu0 0.0
    %v3180 = vand.u32 %v2348, 4294901760
    %3181 = vmatpush1.msra.mxu0 %v3180
    %3182 = vmatprep.subr.mxu0 0.0
    %v3183 = vand.u32 %v2349, 4294901760
    %3184 = vmatpush1.msra.mxu0 %v3183
    %3185 = vmatprep.subr.mxu0 0.0
    %v3186 = vand.u32 %v2350, 4294901760
    %3187 = vmatpush1.msra.mxu0 %v3186
    %3188 = vmatprep.subr.mxu0 0.0
    %v3189 = vand.u32 %v2351, 4294901760
    %3190 = vmatpush1.msra.mxu0 %v3189
    %3191 = vmatprep.subr.mxu0 0.0
    %v3192 = vand.u32 %v2352, 4294901760
    %3193 = vmatpush1.msra.mxu0 %v3192
    %3194 = vmatprep.subr.mxu0 0.0
    %v3195 = vand.u32 %v2353, 4294901760
    %3196 = vmatpush1.msra.mxu0 %v3195
    %3197 = vmatprep.subr.mxu0 0.0
    %v3198 = vand.u32 %v2354, 4294901760
    %3199 = vmatpush1.msra.mxu0 %v3198
    %3200 = vmatprep.subr.mxu0 0.0
    %v3201 = vand.u32 %v2355, 4294901760
    %3202 = vmatpush1.msra.mxu0 %v3201
    %3203 = vmatprep.subr.mxu0 0.0
    %v3204 = vand.u32 %v2356, 4294901760
    %3205 = vmatpush1.msra.mxu0 %v3204
    %3206 = vmatprep.subr.mxu0 0.0
    %v3207 = vand.u32 %v2357, 4294901760
    %3208 = vmatpush1.msra.mxu0 %v3207
    %3209 = vmatprep.subr.mxu0 0.0
    %v3210 = vand.u32 %v2358, 4294901760
    %3211 = vmatpush1.msra.mxu0 %v3210
    %3212 = vmatprep.subr.mxu0 0.0
    %v3213 = vand.u32 %v2359, 4294901760
    %3214 = vmatpush1.msra.mxu0 %v3213
    %3215 = vmatprep.subr.mxu0 0.0
    %v3216 = vand.u32 %v2360, 4294901760
    %3217 = vmatpush1.msra.mxu0 %v3216
    %3218 = vmatprep.subr.mxu0 0.0
    %v3219 = vand.u32 %v2361, 4294901760
    %3220 = vmatpush1.msra.mxu0 %v3219
    %3221 = vmatprep.subr.mxu0 0.0
    %v3222 = vand.u32 %v2362, 4294901760
    %3223 = vmatpush1.msra.mxu0 %v3222
    %v3224 = vand.u32 %v2330, 4294901760
    %3225 = vmatprep.mubr.f32.mxu0 %v3224
    %v3226 = vand.u32 %v2329, 4294901760
    %3227 = vmatmul.mubr.f32.gmra.mrb[0].mxu0 %v3226
    %v3228 = vpop.f32.mrb[0].mxu0
    %v3229 = vadd.f32 %v3125, %v3228
    %v3230 = vpop.f32.mrb[0].mxu0
    %3231 = vdwg.mxu0
    %vm3232 = vcmask 31744
    %3233 = vst.msk [vmem:[%s7] sm:$0xff] %vm3232, %v3229
    // Predicated region
    $region42: #{_lambda_.1} parent=1 // pred_check
      _
    $region43: #{_lambda_.1} parent=1 // pred_check_branch
      %3235 = sbr.rel (0) target = $region45
    $region44: #{_lambda_.1} parent=1 // pred_region
      _
    $region45: #{_lambda_.1} parent=1 // pred_fallthru
      _
    // Predicated region
    $region46: #{_lambda_.1} parent=1 // pred_check
      _
    $region47: #{_lambda_.1} parent=1 // pred_check_branch
      %3237 = sbr.rel (0) target = $region49
    $region48: #{_lambda_.1} parent=1 // pred_region
      _
    $region49: #{_lambda_.1} parent=1 // pred_fallthru
      _
    %3238 = vsyncpa [#allocation3], 1
    %3239 = vsyncpa [#allocation5], 1

</llo_original>
